<compile_context>
chip_gen: v6e
topology: v6e:2x2x1
jax: 0.10.0
libtpu: 0.0.40
codegen_flags: <defaults>
</compile_context>

<pallas_src>
import functools

import jax
import jax.numpy as jnp
from jax.experimental import pallas as pl
from jax.experimental.pallas import tpu as pltpu

EPS = 1e-5  # nn.InstanceNorm2d default eps (affine=False, no running stats)


def _basic_block_kernel(x_ref, w1_ref, w2_ref, mask_ref, o_ref, pad_ref, *, H, W):
    # x_ref  : (1, PC, L)   flat lane-dense packed input (junk cols already 0)
    # w*_ref : (9, PC, PC)  per-tap block-diagonal conv weights
    # mask   : (1, L)       1.0 on real pixels, 0.0 on the 2 junk cols per row
    # o_ref  : (1, PC, L)   flat output (junk cols hold don't-care values)
    # pad_ref: (PC, Hp*Wp)  flattened zero-padded conv input (VMEM scratch)
    _, PC, L = x_ref.shape
    Wp, Hp = W + 2, H + 2
    padq = Hp * Wp
    head = Wp + 1                      # flat offset of interior pixel (0,0)
    inv_hw = 1.0 / float(H * W)

    # Constant lane offset of conv tap (ky,kx) in the flat padded layout.
    offs = [ky * Wp + kx for ky in range(3) for kx in range(3)]

    # Zero only the never-written border strips of the padded scratch; the
    # rest is fully overwritten by the interior staging store each pass.
    # Done every grid step (not program_id==0-guarded) so it stays correct
    # when the parallel grid axis is sharded across TensorCores.
    pad_ref[:, :head] = jnp.zeros((PC, head), jnp.float32)
    pad_ref[:, head + L:padq] = jnp.zeros((PC, padq - head - L), jnp.float32)

    mask = mask_ref[...]               # (1, L)

    def conv3x3(w_ref):
        # 9 accumulating MXU dots straight from the shifted padded views —
        # no im2col slab, no store/reload round trip.
        acc = jnp.dot(w_ref[0], pad_ref[:, offs[0]:offs[0] + L],
                      preferred_element_type=jnp.float32)
        for k in range(1, 9):
            acc = acc + jnp.dot(w_ref[k], pad_ref[:, offs[k]:offs[k] + L],
                                preferred_element_type=jnp.float32)
        return acc

    def inorm(y):
        # Fused single-pass instance norm (biased variance, eps=1e-5); the
        # mask is applied once and reused for both moments so junk columns
        # never contaminate the statistics.
        ym = y * mask
        s1 = jnp.sum(ym, axis=1, keepdims=True)
        s2 = jnp.sum(ym * y, axis=1, keepdims=True)
        m = s1 * inv_hw
        v = jnp.maximum(s2 * inv_hw - m * m, 0.0)   # guard f32 cancellation
        return (y - m) * jax.lax.rsqrt(v + EPS)

    xb = x_ref[0]                      # (PC, L)

    # conv1 -> InstanceNorm -> ReLU (mask folded into h1: junk cols become the
    # zero padding for conv2's staging store, no extra multiply there).
    pad_ref[:, head:head + L] = xb
    h1 = jnp.maximum(inorm(conv3x3(w1_ref)), 0.0) * mask

    # conv2 -> InstanceNorm -> (+identity) -> ReLU
    pad_ref[:, head:head + L] = h1
    h2 = inorm(conv3x3(w2_ref))
    o_ref[0] = jnp.maximum(h2 + xb, 0.0)   # one dense store per packed group


def basic_block_forward(x, w1_oihw, w2_oihw):
    """x: (N, C, H, W) float32 (NCHW). w1/w2: (C, C, 3, 3) float32, OIHW."""
    N, C, H, W = x.shape
    Wp, Hp = W + 2, H + 2
    L = (H - 1) * Wp + W               # flat grid length (incl. 2 junk cols/row)

    x = x.astype(jnp.float32)
    # Lane-dense flat input: row-major over (y, x) with row stride Wp and two
    # zero "junk" columns appended per row (cheap wrapper-side reshape; no
    # full padded image is ever materialized in HBM).
    x_flat = jnp.pad(x, ((0, 0), (0, 0), (0, 0), (0, 2)))            # (N,C,H,Wp)
    x_flat = x_flat.reshape(N, C, H * Wp)[:, :, :L]                  # (N,C,L)

    # Sublane packing: P samples per grid step so PC = P*C fills 8 sublanes.
    P = max(1, 8 // max(C, 1))
    while P > 1 and N % P:
        P -= 1
    G, PC = N // P, P * C
    x_packed = x_flat.reshape(G, PC, L)                              # (G,PC,L)

    def wtaps(w):
        # OIHW -> (9, PC, PC): per-tap block-diagonal over the P packed samples.
        w = w.astype(jnp.float32)
        taps = jnp.transpose(w, (2, 3, 0, 1)).reshape(9, C, C)       # (tap,Co,Ci)
        eye = jnp.eye(P, dtype=jnp.float32)
        return jnp.einsum("pq,koi->kpoqi", eye, taps).reshape(9, PC, PC)

    mask = (jnp.arange(L) % Wp < W).astype(jnp.float32)[None, :]     # (1, L)

    kernel = functools.partial(_basic_block_kernel, H=H, W=W)
    out_packed = pl.pallas_call(
        kernel,
        out_shape=jax.ShapeDtypeStruct((G, PC, L), jnp.float32),
        grid_spec=pltpu.PrefetchScalarGridSpec(
            num_scalar_prefetch=0,
            grid=(G,),
            in_specs=[
                pl.BlockSpec((1, PC, L), lambda g: (g, 0, 0)),
                pl.BlockSpec((9, PC, PC), lambda g: (0, 0, 0)),
                pl.BlockSpec((9, PC, PC), lambda g: (0, 0, 0)),
                pl.BlockSpec((1, L), lambda g: (0, 0)),
            ],
            out_specs=pl.BlockSpec((1, PC, L), lambda g: (g, 0, 0)),
            scratch_shapes=[
                pltpu.VMEM((PC, Hp * Wp), jnp.float32),  # flattened padded input
            ],
        ),
        compiler_params=pltpu.CompilerParams(
            dimension_semantics=("parallel",)),
    )(x_packed, wtaps(w1_oihw), wtaps(w2_oihw), mask)

    # Unpack (G,PC,L) -> (N,C,H,W), dropping the junk columns.
    out = out_packed.reshape(N, C, L)
    out = jnp.pad(out, ((0, 0), (0, 0), (0, H * Wp - L)))
    return out.reshape(N, C, H, Wp)[:, :, :, :W]


def basic_block_ref(x, w1, w2):
    """Pure-JAX reference mirroring the PyTorch module."""
    def conv(y, w):
        return jax.lax.conv_general_dilated(
            y, w, window_strides=(1, 1), padding=((1, 1), (1, 1)),
            dimension_numbers=("NCHW", "OIHW", "NCHW"))

    def inorm(y):
        m = jnp.mean(y, axis=(2, 3), keepdims=True)
        v = jnp.mean((y - m) ** 2, axis=(2, 3), keepdims=True)
        return (y - m) / jnp.sqrt(v + EPS)

    out = jnp.maximum(inorm(conv(x, w1)), 0.0)
    out = inorm(conv(out, w2))
    return jnp.maximum(out + x, 0.0)


if __name__ == "__main__":
    key = jax.random.PRNGKey(0)
    kx, k1, k2 = jax.random.split(key, 3)

    # downsample=None & stride=1  =>  inplanes == planes
    N, C, H, W = 2, 4, 16, 16
    x = jax.random.normal(kx, (N, C, H, W), jnp.float32)
    w1 = jax.random.normal(k1, (C, C, 3, 3), jnp.float32) * 0.2  # conv1.weight (OIHW)
    w2 = jax.random.normal(k2, (C, C, 3, 3), jnp.float32) * 0.2  # conv2.weight (OIHW)

    out = jax.block_until_ready(basic_block_forward(x, w1, w2))
    ref = basic_block_ref(x, w1, w2)

    assert out.shape == (N, C, H, W) and out.dtype == jnp.float32
    max_err = float(jnp.max(jnp.abs(out - ref)))
    assert max_err < 1e-4, f"max_err={max_err}"
    print("KERNEL_OK")
</pallas_src>

<mosaic_0001>
module attributes {stable_mosaic.version = 11 : i64} {
  func.func @_basic_block_kernel(%arg0: i32, %arg1: memref<1x8x286xf32, #tpu.memory_space<vmem>>, %arg2: memref<9x8x8xf32, #tpu.memory_space<vmem>>, %arg3: memref<9x8x8xf32, #tpu.memory_space<vmem>>, %arg4: memref<1x286xf32, #tpu.memory_space<vmem>>, %arg5: memref<1x8x286xf32, #tpu.memory_space<vmem>>, %arg6: memref<8x324xf32, #tpu.memory_space<vmem>>) attributes {dimension_semantics = [#tpu.dimension_semantics<parallel>], iteration_bounds = array<i64: 1>, scalar_prefetch = 0 : i64, scratch_operands = 1 : i64, tpu.core_type = #tpu.core_type<tc>, window_params = [{transform_indices = @transform_0, window_bounds = array<i64: 1, 8, 286>}, {pipeline_mode = #tpu.pipeline_mode<synchronous>, transform_indices = @transform_1, window_bounds = array<i64: 9, 8, 8>}, {pipeline_mode = #tpu.pipeline_mode<synchronous>, transform_indices = @transform_2, window_bounds = array<i64: 9, 8, 8>}, {pipeline_mode = #tpu.pipeline_mode<synchronous>, transform_indices = @transform_3, window_bounds = array<i64: 1, 286>}, {transform_indices = @transform_4, window_bounds = array<i64: 1, 8, 286>}]} {
    %cst = arith.constant 0.000000e+00 : f32
    %0 = vector.broadcast %cst : f32 to vector<8x19xf32>
    %c0 = arith.constant 0 : index
    %c0_0 = arith.constant 0 : index
    %1 = vector.load %arg6[%c0, %c0_0] : memref<8x324xf32, #tpu.memory_space<vmem>>, vector<8x19xf32>
    tpu.vector_store %arg6[%c0, %c0_0], %0 {strides = array<i32>} : memref<8x324xf32, #tpu.memory_space<vmem>>, vector<8x19xf32>,
    %cst_1 = arith.constant 0.000000e+00 : f32
    %2 = vector.broadcast %cst_1 : f32 to vector<8x19xf32>
    %c0_2 = arith.constant 0 : index
    %c305 = arith.constant 305 : index
    %3 = vector.load %arg6[%c0_2, %c305] : memref<8x324xf32, #tpu.memory_space<vmem>>, vector<8x19xf32>
    tpu.vector_store %arg6[%c0_2, %c305], %2 {strides = array<i32>} : memref<8x324xf32, #tpu.memory_space<vmem>>, vector<8x19xf32>,
    %c0_3 = arith.constant 0 : index
    %c0_4 = arith.constant 0 : index
    %4 = vector.load %arg4[%c0_3, %c0_4] : memref<1x286xf32, #tpu.memory_space<vmem>>, vector<1x286xf32>
    %c0_5 = arith.constant 0 : index
    %c0_6 = arith.constant 0 : index
    %c0_7 = arith.constant 0 : index
    %5 = vector.load %arg1[%c0_5, %c0_6, %c0_7] : memref<1x8x286xf32, #tpu.memory_space<vmem>>, vector<1x8x286xf32>
    %6 = vector.shape_cast %5 : vector<1x8x286xf32> to vector<8x286xf32>
    %c0_8 = arith.constant 0 : index
    %c19 = arith.constant 19 : index
    %7 = vector.load %arg6[%c0_8, %c19] : memref<8x324xf32, #tpu.memory_space<vmem>>, vector<8x286xf32>
    tpu.vector_store %arg6[%c0_8, %c19], %6 {strides = array<i32>} : memref<8x324xf32, #tpu.memory_space<vmem>>, vector<8x286xf32>,
    %c0_9 = arith.constant 0 : index
    %c0_10 = arith.constant 0 : index
    %c0_11 = arith.constant 0 : index
    %8 = vector.load %arg2[%c0_9, %c0_10, %c0_11] : memref<9x8x8xf32, #tpu.memory_space<vmem>>, vector<1x8x8xf32>
    %9 = vector.shape_cast %8 : vector<1x8x8xf32> to vector<8x8xf32>
    %c0_12 = arith.constant 0 : index
    %c0_13 = arith.constant 0 : index
    %10 = vector.load %arg6[%c0_12, %c0_13] : memref<8x324xf32, #tpu.memory_space<vmem>>, vector<8x286xf32>
    %cst_14 = arith.constant dense<0.000000e+00> : vector<8x286xf32>
    %11 = tpu.matmul %9, %10, %cst_14 {dimension_numbers = #tpu.dot_dimension_numbers<[1], [0], [0], [1], [0, 0, 1, 1], [], []>} : vector<8x8xf32>, vector<8x286xf32>, vector<8x286xf32> -> vector<8x286xf32>
    %c1 = arith.constant 1 : index
    %c0_15 = arith.constant 0 : index
    %c0_16 = arith.constant 0 : index
    %12 = vector.load %arg2[%c1, %c0_15, %c0_16] : memref<9x8x8xf32, #tpu.memory_space<vmem>>, vector<1x8x8xf32>
    %13 = vector.shape_cast %12 : vector<1x8x8xf32> to vector<8x8xf32>
    %c0_17 = arith.constant 0 : index
    %c1_18 = arith.constant 1 : index
    %14 = vector.load %arg6[%c0_17, %c1_18] : memref<8x324xf32, #tpu.memory_space<vmem>>, vector<8x286xf32>
    %cst_19 = arith.constant dense<0.000000e+00> : vector<8x286xf32>
    %15 = tpu.matmul %13, %14, %cst_19 {dimension_numbers = #tpu.dot_dimension_numbers<[1], [0], [0], [1], [0, 0, 1, 1], [], []>} : vector<8x8xf32>, vector<8x286xf32>, vector<8x286xf32> -> vector<8x286xf32>
    %16 = arith.addf %11, %15 : vector<8x286xf32>
    %c2 = arith.constant 2 : index
    %c0_20 = arith.constant 0 : index
    %c0_21 = arith.constant 0 : index
    %17 = vector.load %arg2[%c2, %c0_20, %c0_21] : memref<9x8x8xf32, #tpu.memory_space<vmem>>, vector<1x8x8xf32>
    %18 = vector.shape_cast %17 : vector<1x8x8xf32> to vector<8x8xf32>
    %c0_22 = arith.constant 0 : index
    %c2_23 = arith.constant 2 : index
    %19 = vector.load %arg6[%c0_22, %c2_23] : memref<8x324xf32, #tpu.memory_space<vmem>>, vector<8x286xf32>
    %cst_24 = arith.constant dense<0.000000e+00> : vector<8x286xf32>
    %20 = tpu.matmul %18, %19, %cst_24 {dimension_numbers = #tpu.dot_dimension_numbers<[1], [0], [0], [1], [0, 0, 1, 1], [], []>} : vector<8x8xf32>, vector<8x286xf32>, vector<8x286xf32> -> vector<8x286xf32>
    %21 = arith.addf %16, %20 : vector<8x286xf32>
    %c3 = arith.constant 3 : index
    %c0_25 = arith.constant 0 : index
    %c0_26 = arith.constant 0 : index
    %22 = vector.load %arg2[%c3, %c0_25, %c0_26] : memref<9x8x8xf32, #tpu.memory_space<vmem>>, vector<1x8x8xf32>
    %23 = vector.shape_cast %22 : vector<1x8x8xf32> to vector<8x8xf32>
    %c0_27 = arith.constant 0 : index
    %c18 = arith.constant 18 : index
    %24 = vector.load %arg6[%c0_27, %c18] : memref<8x324xf32, #tpu.memory_space<vmem>>, vector<8x286xf32>
    %cst_28 = arith.constant dense<0.000000e+00> : vector<8x286xf32>
    %25 = tpu.matmul %23, %24, %cst_28 {dimension_numbers = #tpu.dot_dimension_numbers<[1], [0], [0], [1], [0, 0, 1, 1], [], []>} : vector<8x8xf32>, vector<8x286xf32>, vector<8x286xf32> -> vector<8x286xf32>
    %26 = arith.addf %21, %25 : vector<8x286xf32>
    %c4 = arith.constant 4 : index
    %c0_29 = arith.constant 0 : index
    %c0_30 = arith.constant 0 : index
    %27 = vector.load %arg2[%c4, %c0_29, %c0_30] : memref<9x8x8xf32, #tpu.memory_space<vmem>>, vector<1x8x8xf32>
    %28 = vector.shape_cast %27 : vector<1x8x8xf32> to vector<8x8xf32>
    %c0_31 = arith.constant 0 : index
    %c19_32 = arith.constant 19 : index
    %29 = vector.load %arg6[%c0_31, %c19_32] : memref<8x324xf32, #tpu.memory_space<vmem>>, vector<8x286xf32>
    %cst_33 = arith.constant dense<0.000000e+00> : vector<8x286xf32>
    %30 = tpu.matmul %28, %29, %cst_33 {dimension_numbers = #tpu.dot_dimension_numbers<[1], [0], [0], [1], [0, 0, 1, 1], [], []>} : vector<8x8xf32>, vector<8x286xf32>, vector<8x286xf32> -> vector<8x286xf32>
    %31 = arith.addf %26, %30 : vector<8x286xf32>
    %c5 = arith.constant 5 : index
    %c0_34 = arith.constant 0 : index
    %c0_35 = arith.constant 0 : index
    %32 = vector.load %arg2[%c5, %c0_34, %c0_35] : memref<9x8x8xf32, #tpu.memory_space<vmem>>, vector<1x8x8xf32>
    %33 = vector.shape_cast %32 : vector<1x8x8xf32> to vector<8x8xf32>
    %c0_36 = arith.constant 0 : index
    %c20 = arith.constant 20 : index
    %34 = vector.load %arg6[%c0_36, %c20] : memref<8x324xf32, #tpu.memory_space<vmem>>, vector<8x286xf32>
    %cst_37 = arith.constant dense<0.000000e+00> : vector<8x286xf32>
    %35 = tpu.matmul %33, %34, %cst_37 {dimension_numbers = #tpu.dot_dimension_numbers<[1], [0], [0], [1], [0, 0, 1, 1], [], []>} : vector<8x8xf32>, vector<8x286xf32>, vector<8x286xf32> -> vector<8x286xf32>
    %36 = arith.addf %31, %35 : vector<8x286xf32>
    %c6 = arith.constant 6 : index
    %c0_38 = arith.constant 0 : index
    %c0_39 = arith.constant 0 : index
    %37 = vector.load %arg2[%c6, %c0_38, %c0_39] : memref<9x8x8xf32, #tpu.memory_space<vmem>>, vector<1x8x8xf32>
    %38 = vector.shape_cast %37 : vector<1x8x8xf32> to vector<8x8xf32>
    %c0_40 = arith.constant 0 : index
    %c36 = arith.constant 36 : index
    %39 = vector.load %arg6[%c0_40, %c36] : memref<8x324xf32, #tpu.memory_space<vmem>>, vector<8x286xf32>
    %cst_41 = arith.constant dense<0.000000e+00> : vector<8x286xf32>
    %40 = tpu.matmul %38, %39, %cst_41 {dimension_numbers = #tpu.dot_dimension_numbers<[1], [0], [0], [1], [0, 0, 1, 1], [], []>} : vector<8x8xf32>, vector<8x286xf32>, vector<8x286xf32> -> vector<8x286xf32>
    %41 = arith.addf %36, %40 : vector<8x286xf32>
    %c7 = arith.constant 7 : index
    %c0_42 = arith.constant 0 : index
    %c0_43 = arith.constant 0 : index
    %42 = vector.load %arg2[%c7, %c0_42, %c0_43] : memref<9x8x8xf32, #tpu.memory_space<vmem>>, vector<1x8x8xf32>
    %43 = vector.shape_cast %42 : vector<1x8x8xf32> to vector<8x8xf32>
    %c0_44 = arith.constant 0 : index
    %c37 = arith.constant 37 : index
    %44 = vector.load %arg6[%c0_44, %c37] : memref<8x324xf32, #tpu.memory_space<vmem>>, vector<8x286xf32>
    %cst_45 = arith.constant dense<0.000000e+00> : vector<8x286xf32>
    %45 = tpu.matmul %43, %44, %cst_45 {dimension_numbers = #tpu.dot_dimension_numbers<[1], [0], [0], [1], [0, 0, 1, 1], [], []>} : vector<8x8xf32>, vector<8x286xf32>, vector<8x286xf32> -> vector<8x286xf32>
    %46 = arith.addf %41, %45 : vector<8x286xf32>
    %c8 = arith.constant 8 : index
    %c0_46 = arith.constant 0 : index
    %c0_47 = arith.constant 0 : index
    %47 = vector.load %arg2[%c8, %c0_46, %c0_47] : memref<9x8x8xf32, #tpu.memory_space<vmem>>, vector<1x8x8xf32>
    %48 = vector.shape_cast %47 : vector<1x8x8xf32> to vector<8x8xf32>
    %c0_48 = arith.constant 0 : index
    %c38 = arith.constant 38 : index
    %49 = vector.load %arg6[%c0_48, %c38] : memref<8x324xf32, #tpu.memory_space<vmem>>, vector<8x286xf32>
    %cst_49 = arith.constant dense<0.000000e+00> : vector<8x286xf32>
    %50 = tpu.matmul %48, %49, %cst_49 {dimension_numbers = #tpu.dot_dimension_numbers<[1], [0], [0], [1], [0, 0, 1, 1], [], []>} : vector<8x8xf32>, vector<8x286xf32>, vector<8x286xf32> -> vector<8x286xf32>
    %51 = arith.addf %46, %50 : vector<8x286xf32>
    %52 = vector.broadcast %4 : vector<1x286xf32> to vector<8x286xf32>
    %53 = arith.mulf %51, %52 : vector<8x286xf32>
    %cst_50 = arith.constant dense<0.000000e+00> : vector<8xf32>
    %54 = vector.multi_reduction <add>, %53, %cst_50 [1] : vector<8x286xf32> to vector<8xf32>
    %55 = vector.shape_cast %54 : vector<8xf32> to vector<8x1xf32>
    %56 = arith.mulf %53, %51 : vector<8x286xf32>
    %cst_51 = arith.constant dense<0.000000e+00> : vector<8xf32>
    %57 = vector.multi_reduction <add>, %56, %cst_51 [1] : vector<8x286xf32> to vector<8xf32>
    %58 = vector.shape_cast %57 : vector<8xf32> to vector<8x1xf32>
    %cst_52 = arith.constant 3.906250e-03 : f32
    %59 = vector.broadcast %cst_52 : f32 to vector<8x1xf32>
    %60 = arith.mulf %55, %59 : vector<8x1xf32>
    %cst_53 = arith.constant 3.906250e-03 : f32
    %61 = vector.broadcast %cst_53 : f32 to vector<8x1xf32>
    %62 = arith.mulf %58, %61 : vector<8x1xf32>
    %63 = arith.mulf %60, %60 : vector<8x1xf32>
    %64 = arith.subf %62, %63 : vector<8x1xf32>
    %cst_54 = arith.constant 0.000000e+00 : f32
    %65 = vector.broadcast %cst_54 : f32 to vector<8x1xf32>
    %66 = arith.maximumf %64, %65 : vector<8x1xf32>
    %67 = vector.broadcast %60 : vector<8x1xf32> to vector<8x286xf32>
    %68 = arith.subf %51, %67 : vector<8x286xf32>
    %cst_55 = arith.constant 9.99999974E-6 : f32
    %69 = vector.broadcast %cst_55 : f32 to vector<8x1xf32>
    %70 = arith.addf %66, %69 : vector<8x1xf32>
    %71 = math.rsqrt %70 : vector<8x1xf32>
    %72 = vector.broadcast %71 : vector<8x1xf32> to vector<8x286xf32>
    %73 = arith.mulf %68, %72 : vector<8x286xf32>
    %cst_56 = arith.constant 0.000000e+00 : f32
    %74 = vector.broadcast %cst_56 : f32 to vector<8x286xf32>
    %75 = arith.maximumf %73, %74 : vector<8x286xf32>
    %76 = vector.broadcast %4 : vector<1x286xf32> to vector<8x286xf32>
    %77 = arith.mulf %75, %76 : vector<8x286xf32>
    %c0_57 = arith.constant 0 : index
    %c19_58 = arith.constant 19 : index
    %78 = vector.load %arg6[%c0_57, %c19_58] : memref<8x324xf32, #tpu.memory_space<vmem>>, vector<8x286xf32>
    tpu.vector_store %arg6[%c0_57, %c19_58], %77 {strides = array<i32>} : memref<8x324xf32, #tpu.memory_space<vmem>>, vector<8x286xf32>,
    %c0_59 = arith.constant 0 : index
    %c0_60 = arith.constant 0 : index
    %c0_61 = arith.constant 0 : index
    %79 = vector.load %arg3[%c0_59, %c0_60, %c0_61] : memref<9x8x8xf32, #tpu.memory_space<vmem>>, vector<1x8x8xf32>
    %80 = vector.shape_cast %79 : vector<1x8x8xf32> to vector<8x8xf32>
    %c0_62 = arith.constant 0 : index
    %c0_63 = arith.constant 0 : index
    %81 = vector.load %arg6[%c0_62, %c0_63] : memref<8x324xf32, #tpu.memory_space<vmem>>, vector<8x286xf32>
    %cst_64 = arith.constant dense<0.000000e+00> : vector<8x286xf32>
    %82 = tpu.matmul %80, %81, %cst_64 {dimension_numbers = #tpu.dot_dimension_numbers<[1], [0], [0], [1], [0, 0, 1, 1], [], []>} : vector<8x8xf32>, vector<8x286xf32>, vector<8x286xf32> -> vector<8x286xf32>
    %c1_65 = arith.constant 1 : index
    %c0_66 = arith.constant 0 : index
    %c0_67 = arith.constant 0 : index
    %83 = vector.load %arg3[%c1_65, %c0_66, %c0_67] : memref<9x8x8xf32, #tpu.memory_space<vmem>>, vector<1x8x8xf32>
    %84 = vector.shape_cast %83 : vector<1x8x8xf32> to vector<8x8xf32>
    %c0_68 = arith.constant 0 : index
    %c1_69 = arith.constant 1 : index
    %85 = vector.load %arg6[%c0_68, %c1_69] : memref<8x324xf32, #tpu.memory_space<vmem>>, vector<8x286xf32>
    %cst_70 = arith.constant dense<0.000000e+00> : vector<8x286xf32>
    %86 = tpu.matmul %84, %85, %cst_70 {dimension_numbers = #tpu.dot_dimension_numbers<[1], [0], [0], [1], [0, 0, 1, 1], [], []>} : vector<8x8xf32>, vector<8x286xf32>, vector<8x286xf32> -> vector<8x286xf32>
    %87 = arith.addf %82, %86 : vector<8x286xf32>
    %c2_71 = arith.constant 2 : index
    %c0_72 = arith.constant 0 : index
    %c0_73 = arith.constant 0 : index
    %88 = vector.load %arg3[%c2_71, %c0_72, %c0_73] : memref<9x8x8xf32, #tpu.memory_space<vmem>>, vector<1x8x8xf32>
    %89 = vector.shape_cast %88 : vector<1x8x8xf32> to vector<8x8xf32>
    %c0_74 = arith.constant 0 : index
    %c2_75 = arith.constant 2 : index
    %90 = vector.load %arg6[%c0_74, %c2_75] : memref<8x324xf32, #tpu.memory_space<vmem>>, vector<8x286xf32>
    %cst_76 = arith.constant dense<0.000000e+00> : vector<8x286xf32>
    %91 = tpu.matmul %89, %90, %cst_76 {dimension_numbers = #tpu.dot_dimension_numbers<[1], [0], [0], [1], [0, 0, 1, 1], [], []>} : vector<8x8xf32>, vector<8x286xf32>, vector<8x286xf32> -> vector<8x286xf32>
    %92 = arith.addf %87, %91 : vector<8x286xf32>
    %c3_77 = arith.constant 3 : index
    %c0_78 = arith.constant 0 : index
    %c0_79 = arith.constant 0 : index
    %93 = vector.load %arg3[%c3_77, %c0_78, %c0_79] : memref<9x8x8xf32, #tpu.memory_space<vmem>>, vector<1x8x8xf32>
    %94 = vector.shape_cast %93 : vector<1x8x8xf32> to vector<8x8xf32>
    %c0_80 = arith.constant 0 : index
    %c18_81 = arith.constant 18 : index
    %95 = vector.load %arg6[%c0_80, %c18_81] : memref<8x324xf32, #tpu.memory_space<vmem>>, vector<8x286xf32>
    %cst_82 = arith.constant dense<0.000000e+00> : vector<8x286xf32>
    %96 = tpu.matmul %94, %95, %cst_82 {dimension_numbers = #tpu.dot_dimension_numbers<[1], [0], [0], [1], [0, 0, 1, 1], [], []>} : vector<8x8xf32>, vector<8x286xf32>, vector<8x286xf32> -> vector<8x286xf32>
    %97 = arith.addf %92, %96 : vector<8x286xf32>
    %c4_83 = arith.constant 4 : index
    %c0_84 = arith.constant 0 : index
    %c0_85 = arith.constant 0 : index
    %98 = vector.load %arg3[%c4_83, %c0_84, %c0_85] : memref<9x8x8xf32, #tpu.memory_space<vmem>>, vector<1x8x8xf32>
    %99 = vector.shape_cast %98 : vector<1x8x8xf32> to vector<8x8xf32>
    %c0_86 = arith.constant 0 : index
    %c19_87 = arith.constant 19 : index
    %100 = vector.load %arg6[%c0_86, %c19_87] : memref<8x324xf32, #tpu.memory_space<vmem>>, vector<8x286xf32>
    %cst_88 = arith.constant dense<0.000000e+00> : vector<8x286xf32>
    %101 = tpu.matmul %99, %100, %cst_88 {dimension_numbers = #tpu.dot_dimension_numbers<[1], [0], [0], [1], [0, 0, 1, 1], [], []>} : vector<8x8xf32>, vector<8x286xf32>, vector<8x286xf32> -> vector<8x286xf32>
    %102 = arith.addf %97, %101 : vector<8x286xf32>
    %c5_89 = arith.constant 5 : index
    %c0_90 = arith.constant 0 : index
    %c0_91 = arith.constant 0 : index
    %103 = vector.load %arg3[%c5_89, %c0_90, %c0_91] : memref<9x8x8xf32, #tpu.memory_space<vmem>>, vector<1x8x8xf32>
    %104 = vector.shape_cast %103 : vector<1x8x8xf32> to vector<8x8xf32>
    %c0_92 = arith.constant 0 : index
    %c20_93 = arith.constant 20 : index
    %105 = vector.load %arg6[%c0_92, %c20_93] : memref<8x324xf32, #tpu.memory_space<vmem>>, vector<8x286xf32>
    %cst_94 = arith.constant dense<0.000000e+00> : vector<8x286xf32>
    %106 = tpu.matmul %104, %105, %cst_94 {dimension_numbers = #tpu.dot_dimension_numbers<[1], [0], [0], [1], [0, 0, 1, 1], [], []>} : vector<8x8xf32>, vector<8x286xf32>, vector<8x286xf32> -> vector<8x286xf32>
    %107 = arith.addf %102, %106 : vector<8x286xf32>
    %c6_95 = arith.constant 6 : index
    %c0_96 = arith.constant 0 : index
    %c0_97 = arith.constant 0 : index
    %108 = vector.load %arg3[%c6_95, %c0_96, %c0_97] : memref<9x8x8xf32, #tpu.memory_space<vmem>>, vector<1x8x8xf32>
    %109 = vector.shape_cast %108 : vector<1x8x8xf32> to vector<8x8xf32>
    %c0_98 = arith.constant 0 : index
    %c36_99 = arith.constant 36 : index
    %110 = vector.load %arg6[%c0_98, %c36_99] : memref<8x324xf32, #tpu.memory_space<vmem>>, vector<8x286xf32>
    %cst_100 = arith.constant dense<0.000000e+00> : vector<8x286xf32>
    %111 = tpu.matmul %109, %110, %cst_100 {dimension_numbers = #tpu.dot_dimension_numbers<[1], [0], [0], [1], [0, 0, 1, 1], [], []>} : vector<8x8xf32>, vector<8x286xf32>, vector<8x286xf32> -> vector<8x286xf32>
    %112 = arith.addf %107, %111 : vector<8x286xf32>
    %c7_101 = arith.constant 7 : index
    %c0_102 = arith.constant 0 : index
    %c0_103 = arith.constant 0 : index
    %113 = vector.load %arg3[%c7_101, %c0_102, %c0_103] : memref<9x8x8xf32, #tpu.memory_space<vmem>>, vector<1x8x8xf32>
    %114 = vector.shape_cast %113 : vector<1x8x8xf32> to vector<8x8xf32>
    %c0_104 = arith.constant 0 : index
    %c37_105 = arith.constant 37 : index
    %115 = vector.load %arg6[%c0_104, %c37_105] : memref<8x324xf32, #tpu.memory_space<vmem>>, vector<8x286xf32>
    %cst_106 = arith.constant dense<0.000000e+00> : vector<8x286xf32>
    %116 = tpu.matmul %114, %115, %cst_106 {dimension_numbers = #tpu.dot_dimension_numbers<[1], [0], [0], [1], [0, 0, 1, 1], [], []>} : vector<8x8xf32>, vector<8x286xf32>, vector<8x286xf32> -> vector<8x286xf32>
    %117 = arith.addf %112, %116 : vector<8x286xf32>
    %c8_107 = arith.constant 8 : index
    %c0_108 = arith.constant 0 : index
    %c0_109 = arith.constant 0 : index
    %118 = vector.load %arg3[%c8_107, %c0_108, %c0_109] : memref<9x8x8xf32, #tpu.memory_space<vmem>>, vector<1x8x8xf32>
    %119 = vector.shape_cast %118 : vector<1x8x8xf32> to vector<8x8xf32>
    %c0_110 = arith.constant 0 : index
    %c38_111 = arith.constant 38 : index
    %120 = vector.load %arg6[%c0_110, %c38_111] : memref<8x324xf32, #tpu.memory_space<vmem>>, vector<8x286xf32>
    %cst_112 = arith.constant dense<0.000000e+00> : vector<8x286xf32>
    %121 = tpu.matmul %119, %120, %cst_112 {dimension_numbers = #tpu.dot_dimension_numbers<[1], [0], [0], [1], [0, 0, 1, 1], [], []>} : vector<8x8xf32>, vector<8x286xf32>, vector<8x286xf32> -> vector<8x286xf32>
    %122 = arith.addf %117, %121 : vector<8x286xf32>
    %123 = vector.broadcast %4 : vector<1x286xf32> to vector<8x286xf32>
    %124 = arith.mulf %122, %123 : vector<8x286xf32>
    %cst_113 = arith.constant dense<0.000000e+00> : vector<8xf32>
    %125 = vector.multi_reduction <add>, %124, %cst_113 [1] : vector<8x286xf32> to vector<8xf32>
    %126 = vector.shape_cast %125 : vector<8xf32> to vector<8x1xf32>
    %127 = arith.mulf %124, %122 : vector<8x286xf32>
    %cst_114 = arith.constant dense<0.000000e+00> : vector<8xf32>
    %128 = vector.multi_reduction <add>, %127, %cst_114 [1] : vector<8x286xf32> to vector<8xf32>
    %129 = vector.shape_cast %128 : vector<8xf32> to vector<8x1xf32>
    %cst_115 = arith.constant 3.906250e-03 : f32
    %130 = vector.broadcast %cst_115 : f32 to vector<8x1xf32>
    %131 = arith.mulf %126, %130 : vector<8x1xf32>
    %cst_116 = arith.constant 3.906250e-03 : f32
    %132 = vector.broadcast %cst_116 : f32 to vector<8x1xf32>
    %133 = arith.mulf %129, %132 : vector<8x1xf32>
    %134 = arith.mulf %131, %131 : vector<8x1xf32>
    %135 = arith.subf %133, %134 : vector<8x1xf32>
    %cst_117 = arith.constant 0.000000e+00 : f32
    %136 = vector.broadcast %cst_117 : f32 to vector<8x1xf32>
    %137 = arith.maximumf %135, %136 : vector<8x1xf32>
    %138 = vector.broadcast %131 : vector<8x1xf32> to vector<8x286xf32>
    %139 = arith.subf %122, %138 : vector<8x286xf32>
    %cst_118 = arith.constant 9.99999974E-6 : f32
    %140 = vector.broadcast %cst_118 : f32 to vector<8x1xf32>
    %141 = arith.addf %137, %140 : vector<8x1xf32>
    %142 = math.rsqrt %141 : vector<8x1xf32>
    %143 = vector.broadcast %142 : vector<8x1xf32> to vector<8x286xf32>
    %144 = arith.mulf %139, %143 : vector<8x286xf32>
    %145 = arith.addf %144, %6 : vector<8x286xf32>
    %cst_119 = arith.constant 0.000000e+00 : f32
    %146 = vector.broadcast %cst_119 : f32 to vector<8x286xf32>
    %147 = arith.maximumf %145, %146 : vector<8x286xf32>
    %c0_120 = arith.constant 0 : index
    %c0_121 = arith.constant 0 : index
    %c0_122 = arith.constant 0 : index
    %148 = vector.load %arg5[%c0_120, %c0_121, %c0_122] : memref<1x8x286xf32, #tpu.memory_space<vmem>>, vector<1x8x286xf32>
    %149 = vector.shape_cast %148 : vector<1x8x286xf32> to vector<8x286xf32>
    %150 = vector.shape_cast %147 : vector<8x286xf32> to vector<1x8x286xf32>
    tpu.vector_store %arg5[%c0_120, %c0_121, %c0_122], %150 {strides = array<i32>} : memref<1x8x286xf32, #tpu.memory_space<vmem>>, vector<1x8x286xf32>,
    return
  }
  func.func @transform_0(%arg0: i32) -> (i32, i32, i32) {
    %c0_i32 = arith.constant 0 : i32
    %c0_i32_0 = arith.constant 0 : i32
    %c0_i32_1 = arith.constant 0 : i32
    return %arg0, %c0_i32, %c0_i32_0 : i32, i32, i32
  }
  func.func @transform_1(%arg0: i32) -> (i32, i32, i32) {
    %c0_i32 = arith.constant 0 : i32
    %c0_i32_0 = arith.constant 0 : i32
    %c0_i32_1 = arith.constant 0 : i32
    %c0_i32_2 = arith.constant 0 : i32
    return %c0_i32, %c0_i32_0, %c0_i32_1 : i32, i32, i32
  }
  func.func @transform_2(%arg0: i32) -> (i32, i32, i32) {
    %c0_i32 = arith.constant 0 : i32
    %c0_i32_0 = arith.constant 0 : i32
    %c0_i32_1 = arith.constant 0 : i32
    %c0_i32_2 = arith.constant 0 : i32
    return %c0_i32, %c0_i32_0, %c0_i32_1 : i32, i32, i32
  }
  func.func @transform_3(%arg0: i32) -> (i32, i32) {
    %c0_i32 = arith.constant 0 : i32
    %c0_i32_0 = arith.constant 0 : i32
    %c0_i32_1 = arith.constant 0 : i32
    return %c0_i32, %c0_i32_0 : i32, i32
  }
  func.func @transform_4(%arg0: i32) -> (i32, i32, i32) {
    %c0_i32 = arith.constant 0 : i32
    %c0_i32_0 = arith.constant 0 : i32
    %c0_i32_1 = arith.constant 0 : i32
    return %arg0, %c0_i32, %c0_i32_0 : i32, i32, i32
  }
}

</mosaic_0001>

<llo_original>
// kernel: tpu_custom_call.1
$region0: #{tpu_custom_call.1}
  #allocation0 [shape = 'u32[]', space=smem, size = 0x4, offset = 0x4, fixed_abs, tag = 'smem constant byte address 0x4 - core index']
  #allocation1 [shape = 'u32[144,128]{1,0:T(1,128)}', space=vmem, size = 0x12000, scoped, tag = 'internal scratch']
  #allocation2 [shape = 'f32[8,324]{1,0:T(8,128)}', space=vmem, size = 0x3000, scoped, tag = 'scratch operand']
  %s0 = inlined_call_operand.vmem [shape: f32[1,8,286], index: 0, kind: input, shape index: {}]
  %s1 = inlined_call_operand.vmem [shape: f32[9,8,8], index: 1, kind: input, shape index: {}]
  %s2 = inlined_call_operand.vmem [shape: f32[9,8,8], index: 2, kind: input, shape index: {}]
  %s3 = inlined_call_operand.vmem [shape: f32[1,286], index: 3, kind: input, shape index: {}]
  %s4 = inlined_call_operand.hbm [shape: f32[1,8,286], index: 4, kind: output, shape index: {}]
  %s5 = sld [smem:[#allocation0]]
  $region26: #{tpu_custom_call.1} parent=0
    _
  %s7 = ssub.s32 1, %s5
  %s8 = scalar_select 0, %s7, %s5
  $region1: #{tpu_custom_call.1} parent=0
    #allocation3 [shape = 'u8[12288]{0}', space=vmem, size = 0x3000, scoped, tag = 'output window, operand 0, single buffered']
    #allocation4 [shape = 's32[1]{0}', space=sflag, size = 0x4, scoped, tag = 'scoped memory for tpu_custom_call.1']
    %9 = vsyncpa [#allocation4], 0
    // Predicated region
    $region2: #{tpu_custom_call.1} parent=1 // pred_check
      _
    $region3: #{tpu_custom_call.1} parent=1 // pred_check_branch
      %11 = sbr.rel (0) target = $region5
    $region4: #{tpu_custom_call.1} parent=1 // pred_region
      _
    $region5: #{tpu_custom_call.1} parent=1 // pred_fallthru
      _
    // Predicated region
    $region6: #{tpu_custom_call.1} parent=1 // pred_check
      _
    $region7: #{tpu_custom_call.1} parent=1 // pred_check_branch
      %13 = sbr.rel (0) target = $region9
    $region8: #{tpu_custom_call.1} parent=1 // pred_region
      _
    $region9: #{tpu_custom_call.1} parent=1 // pred_fallthru
      _
    // Predicated region
    $region10: #{tpu_custom_call.1} parent=1 // pred_check
      _
    $region11: #{tpu_custom_call.1} parent=1 // pred_check_branch
      %15 = sbr.rel (0) target = $region13
    $region12: #{tpu_custom_call.1} parent=1 // pred_region
      _
    $region13: #{tpu_custom_call.1} parent=1 // pred_fallthru
      _
    // Predicated region
    $region14: #{tpu_custom_call.1} parent=1 // pred_check
      _
    $region15: #{tpu_custom_call.1} parent=1 // pred_check_branch
      %17 = sbr.rel (0) target = $region17
    $region16: #{tpu_custom_call.1} parent=1 // pred_region
      _
    $region17: #{tpu_custom_call.1} parent=1 // pred_fallthru
      _
    %vm18 = vcmask 154624
    %19 = vst.msk [vmem:[#allocation2] sm:$0xff] %vm18, 0.0
    %vm20 = vcmask 556424
    %21 = vst.msk [vmem:[#allocation2 + $0x10] sm:$0xff] %vm20, 0.0
    %v22 = vld [vmem:[%s3] sm:$0x7]
    %v23 = vld [vmem:[%s0] sm:$0xff]
    %v24 = vld [vmem:[%s0 + $0x8] sm:$0xff]
    %v25 = vld [vmem:[%s0 + $0x10] sm:$0xff]
    %29 = vrot.lane.b32.xlu0 %v23, 19
    %v30 = vpop.permute.xlu0 %29
    %31 = vrot.lane.b32.xlu0 %v24, 19
    %v32 = vpop.permute.xlu0 %31
    %33 = vrot.lane.b32.xlu0 %v25, 19
    %v34 = vpop.permute.xlu0 %33
    %v35 = vsel %vm18, %v30, %v32
    %v36 = vsel %vm18, %v32, %v34
    %vm40 = vcmask 1047704
    %41 = vst.msk [vmem:[#allocation2] sm:$0xff] %vm40, %v30
    %42 = vst [vmem:[#allocation2 + $0x8] sm:$0xff] %v35
    %vm43 = vcmask 400384
    %44 = vst.msk [vmem:[#allocation2 + $0x10] sm:$0xff] %vm43, %v36
    %v45 = vld [vmem:[%s1] sm:$0xff]
    %v46 = vld [vmem:[#allocation2] sm:$0xff]
    %v47 = vld [vmem:[#allocation2 + $0x8] sm:$0xff]
    %v48 = vld [vmem:[#allocation2 + $0x10] sm:$0xff]
    %s49 = scalar_lea.vmem %s1, 8
    %v50 = vld [vmem:[%s49] sm:$0xff]
    %54 = vrot.lane.b32.xlu0 %v46, 127
    %v55 = vpop.permute.xlu0 %54
    %56 = vrot.lane.b32.xlu0 %v47, 127
    %v57 = vpop.permute.xlu0 %56
    %58 = vrot.lane.b32.xlu0 %v48, 127
    %v59 = vpop.permute.xlu0 %58
    %vm60 = vcmask 1039360
    %v61 = vsel %vm60, %v55, %v57
    %v62 = vsel %vm60, %v57, %v59
    %vm66 = vcmask 64512
    %v68 = vsel %vm66, %v50, 0
    %70 = vmatprep.subr.mxu0 0.0
    %71 = vmatpush1.msra.mxu0 0.0
    %72 = vmatprep.subr.mxu0 0.0
    %73 = vmatpush1.msra.mxu0 0.0
    %74 = vmatprep.subr.mxu0 0.0
    %75 = vmatpush1.msra.mxu0 0.0
    %76 = vmatprep.subr.mxu0 0.0
    %77 = vmatpush1.msra.mxu0 0.0
    %78 = vmatprep.subr.mxu0 0.0
    %79 = vmatpush1.msra.mxu0 0.0
    %80 = vmatprep.subr.mxu0 0.0
    %81 = vmatpush1.msra.mxu0 0.0
    %82 = vmatprep.subr.mxu0 0.0
    %83 = vmatpush1.msra.mxu0 0.0
    %84 = vmatprep.subr.mxu0 0.0
    %85 = vmatpush1.msra.mxu0 0.0
    %86 = vmatprep.subr.mxu0 0.0
    %87 = vmatpush1.msra.mxu0 0.0
    %88 = vmatprep.subr.mxu0 0.0
    %89 = vmatpush1.msra.mxu0 0.0
    %90 = vmatprep.subr.mxu0 0.0
    %91 = vmatpush1.msra.mxu0 0.0
    %92 = vmatprep.subr.mxu0 0.0
    %93 = vmatpush1.msra.mxu0 0.0
    %94 = vmatprep.subr.mxu0 0.0
    %95 = vmatpush1.msra.mxu0 0.0
    %96 = vmatprep.subr.mxu0 0.0
    %97 = vmatpush1.msra.mxu0 0.0
    %98 = vmatprep.subr.mxu0 0.0
    %99 = vmatpush1.msra.mxu0 0.0
    %100 = vmatprep.subr.mxu0 %v62
    %101 = vmatpush1.msra.mxu0 %v61
    %102 = vmatprep.subr.mxu0 0.0
    %103 = vmatpush2.msra.mxu0 0.0
    %104 = vmatprep.subr.mxu0 0.0
    %105 = vmatpush2.msra.mxu0 0.0
    %106 = vmatprep.subr.mxu0 0.0
    %107 = vmatpush2.msra.mxu0 0.0
    %108 = vmatprep.subr.mxu0 0.0
    %109 = vmatpush2.msra.mxu0 0.0
    %110 = vmatprep.subr.mxu0 0.0
    %111 = vmatpush2.msra.mxu0 0.0
    %112 = vmatprep.subr.mxu0 0.0
    %113 = vmatpush2.msra.mxu0 0.0
    %114 = vmatprep.subr.mxu0 0.0
    %115 = vmatpush2.msra.mxu0 0.0
    %116 = vmatprep.subr.mxu0 0.0
    %117 = vmatpush2.msra.mxu0 0.0
    %118 = vmatprep.subr.mxu0 0.0
    %119 = vmatpush2.msra.mxu0 0.0
    %120 = vmatprep.subr.mxu0 0.0
    %121 = vmatpush2.msra.mxu0 0.0
    %122 = vmatprep.subr.mxu0 0.0
    %123 = vmatpush2.msra.mxu0 0.0
    %124 = vmatprep.subr.mxu0 0.0
    %125 = vmatpush2.msra.mxu0 0.0
    %126 = vmatprep.subr.mxu0 0.0
    %127 = vmatpush2.msra.mxu0 0.0
    %128 = vmatprep.subr.mxu0 0.0
    %129 = vmatpush2.msra.mxu0 0.0
    %130 = vmatprep.subr.mxu0 0.0
    %131 = vmatpush2.msra.mxu0 0.0
    %132 = vmatprep.subr.mxu0 0.0
    %133 = vmatpush2.msra.mxu0 0.0
    %134 = vmatprep.mubr.f32.mxu0 0.0
    %135 = vmatmul.mubr.f32.gmra.mxu0 %v68
    %v136 = vpop.f32.mrf.mxu0
    %v137 = vadd.f32 0.0, %v136
    %v138 = vpop.f32.mrf.mxu0
    %v139 = vadd.f32 0.0, %v138
    %140 = vdwg.mxu0
    %141 = vmatprep.subr.mxu0 0.0
    %142 = vmatpush1.msra.mxu0 0.0
    %143 = vmatprep.subr.mxu0 0.0
    %144 = vmatpush1.msra.mxu0 0.0
    %145 = vmatprep.subr.mxu0 0.0
    %146 = vmatpush1.msra.mxu0 0.0
    %147 = vmatprep.subr.mxu0 0.0
    %148 = vmatpush1.msra.mxu0 0.0
    %149 = vmatprep.subr.mxu0 0.0
    %150 = vmatpush1.msra.mxu0 0.0
    %151 = vmatprep.subr.mxu0 0.0
    %152 = vmatpush1.msra.mxu0 0.0
    %153 = vmatprep.subr.mxu0 0.0
    %154 = vmatpush1.msra.mxu0 0.0
    %155 = vmatprep.subr.mxu0 0.0
    %156 = vmatpush1.msra.mxu0 0.0
    %157 = vmatprep.subr.mxu0 0.0
    %158 = vmatpush1.msra.mxu0 0.0
    %159 = vmatprep.subr.mxu0 0.0
    %160 = vmatpush1.msra.mxu0 0.0
    %161 = vmatprep.subr.mxu0 0.0
    %162 = vmatpush1.msra.mxu0 0.0
    %163 = vmatprep.subr.mxu0 0.0
    %164 = vmatpush1.msra.mxu0 0.0
    %165 = vmatprep.subr.mxu0 0.0
    %166 = vmatpush1.msra.mxu0 0.0
    %167 = vmatprep.subr.mxu0 0.0
    %168 = vmatpush1.msra.mxu0 0.0
    %169 = vmatprep.subr.mxu0 0.0
    %170 = vmatpush1.msra.mxu0 0.0
    %171 = vmatprep.subr.mxu0 0.0
    %172 = vmatpush1.msra.mxu0 %v59
    %173 = vmatprep.subr.mxu0 0.0
    %174 = vmatpush2.msra.mxu0 0.0
    %175 = vmatprep.subr.mxu0 0.0
    %176 = vmatpush2.msra.mxu0 0.0
    %177 = vmatprep.subr.mxu0 0.0
    %178 = vmatpush2.msra.mxu0 0.0
    %179 = vmatprep.subr.mxu0 0.0
    %180 = vmatpush2.msra.mxu0 0.0
    %181 = vmatprep.subr.mxu0 0.0
    %182 = vmatpush2.msra.mxu0 0.0
    %183 = vmatprep.subr.mxu0 0.0
    %184 = vmatpush2.msra.mxu0 0.0
    %185 = vmatprep.subr.mxu0 0.0
    %186 = vmatpush2.msra.mxu0 0.0
    %187 = vmatprep.subr.mxu0 0.0
    %188 = vmatpush2.msra.mxu0 0.0
    %189 = vmatprep.subr.mxu0 0.0
    %190 = vmatpush2.msra.mxu0 0.0
    %191 = vmatprep.subr.mxu0 0.0
    %192 = vmatpush2.msra.mxu0 0.0
    %193 = vmatprep.subr.mxu0 0.0
    %194 = vmatpush2.msra.mxu0 0.0
    %195 = vmatprep.subr.mxu0 0.0
    %196 = vmatpush2.msra.mxu0 0.0
    %197 = vmatprep.subr.mxu0 0.0
    %198 = vmatpush2.msra.mxu0 0.0
    %199 = vmatprep.subr.mxu0 0.0
    %200 = vmatpush2.msra.mxu0 0.0
    %201 = vmatprep.subr.mxu0 0.0
    %202 = vmatpush2.msra.mxu0 0.0
    %203 = vmatprep.subr.mxu0 0.0
    %204 = vmatpush2.msra.mxu0 0.0
    %205 = vmatprep.mubr.f32.mxu0 0.0
    %206 = vmatmul.mubr.f32.gmra.mxu0 %v68
    %v207 = vpop.f32.mrf.mxu0
    %v208 = vadd.f32 0.0, %v207
    %v209 = vpop.f32.mrf.mxu0
    %210 = vdwg.mxu0
    %v212 = vsel %vm66, %v45, 0
    %214 = vmatprep.subr.mxu0 0.0
    %215 = vmatpush1.msra.mxu0 0.0
    %216 = vmatprep.subr.mxu0 0.0
    %217 = vmatpush1.msra.mxu0 0.0
    %218 = vmatprep.subr.mxu0 0.0
    %219 = vmatpush1.msra.mxu0 0.0
    %220 = vmatprep.subr.mxu0 0.0
    %221 = vmatpush1.msra.mxu0 0.0
    %222 = vmatprep.subr.mxu0 0.0
    %223 = vmatpush1.msra.mxu0 0.0
    %224 = vmatprep.subr.mxu0 0.0
    %225 = vmatpush1.msra.mxu0 0.0
    %226 = vmatprep.subr.mxu0 0.0
    %227 = vmatpush1.msra.mxu0 0.0
    %228 = vmatprep.subr.mxu0 0.0
    %229 = vmatpush1.msra.mxu0 0.0
    %230 = vmatprep.subr.mxu0 0.0
    %231 = vmatpush1.msra.mxu0 0.0
    %232 = vmatprep.subr.mxu0 0.0
    %233 = vmatpush1.msra.mxu0 0.0
    %234 = vmatprep.subr.mxu0 0.0
    %235 = vmatpush1.msra.mxu0 0.0
    %236 = vmatprep.subr.mxu0 0.0
    %237 = vmatpush1.msra.mxu0 0.0
    %238 = vmatprep.subr.mxu0 0.0
    %239 = vmatpush1.msra.mxu0 0.0
    %240 = vmatprep.subr.mxu0 0.0
    %241 = vmatpush1.msra.mxu0 0.0
    %242 = vmatprep.subr.mxu0 0.0
    %243 = vmatpush1.msra.mxu0 0.0
    %244 = vmatprep.subr.mxu0 %v47
    %245 = vmatpush1.msra.mxu0 %v46
    %246 = vmatprep.subr.mxu0 0.0
    %247 = vmatpush2.msra.mxu0 0.0
    %248 = vmatprep.subr.mxu0 0.0
    %249 = vmatpush2.msra.mxu0 0.0
    %250 = vmatprep.subr.mxu0 0.0
    %251 = vmatpush2.msra.mxu0 0.0
    %252 = vmatprep.subr.mxu0 0.0
    %253 = vmatpush2.msra.mxu0 0.0
    %254 = vmatprep.subr.mxu0 0.0
    %255 = vmatpush2.msra.mxu0 0.0
    %256 = vmatprep.subr.mxu0 0.0
    %257 = vmatpush2.msra.mxu0 0.0
    %258 = vmatprep.subr.mxu0 0.0
    %259 = vmatpush2.msra.mxu0 0.0
    %260 = vmatprep.subr.mxu0 0.0
    %261 = vmatpush2.msra.mxu0 0.0
    %262 = vmatprep.subr.mxu0 0.0
    %263 = vmatpush2.msra.mxu0 0.0
    %264 = vmatprep.subr.mxu0 0.0
    %265 = vmatpush2.msra.mxu0 0.0
    %266 = vmatprep.subr.mxu0 0.0
    %267 = vmatpush2.msra.mxu0 0.0
    %268 = vmatprep.subr.mxu0 0.0
    %269 = vmatpush2.msra.mxu0 0.0
    %270 = vmatprep.subr.mxu0 0.0
    %271 = vmatpush2.msra.mxu0 0.0
    %272 = vmatprep.subr.mxu0 0.0
    %273 = vmatpush2.msra.mxu0 0.0
    %274 = vmatprep.subr.mxu0 0.0
    %275 = vmatpush2.msra.mxu0 0.0
    %276 = vmatprep.subr.mxu0 0.0
    %277 = vmatpush2.msra.mxu0 0.0
    %278 = vmatprep.mubr.f32.mxu0 0.0
    %279 = vmatmul.mubr.f32.gmra.mxu0 %v212
    %v280 = vpop.f32.mrf.mxu0
    %v281 = vadd.f32 %v137, %v280
    %v282 = vpop.f32.mrf.mxu0
    %v283 = vadd.f32 %v139, %v282
    %284 = vdwg.mxu0
    %285 = vmatprep.subr.mxu0 0.0
    %286 = vmatpush1.msra.mxu0 0.0
    %287 = vmatprep.subr.mxu0 0.0
    %288 = vmatpush1.msra.mxu0 0.0
    %289 = vmatprep.subr.mxu0 0.0
    %290 = vmatpush1.msra.mxu0 0.0
    %291 = vmatprep.subr.mxu0 0.0
    %292 = vmatpush1.msra.mxu0 0.0
    %293 = vmatprep.subr.mxu0 0.0
    %294 = vmatpush1.msra.mxu0 0.0
    %295 = vmatprep.subr.mxu0 0.0
    %296 = vmatpush1.msra.mxu0 0.0
    %297 = vmatprep.subr.mxu0 0.0
    %298 = vmatpush1.msra.mxu0 0.0
    %299 = vmatprep.subr.mxu0 0.0
    %300 = vmatpush1.msra.mxu0 0.0
    %301 = vmatprep.subr.mxu0 0.0
    %302 = vmatpush1.msra.mxu0 0.0
    %303 = vmatprep.subr.mxu0 0.0
    %304 = vmatpush1.msra.mxu0 0.0
    %305 = vmatprep.subr.mxu0 0.0
    %306 = vmatpush1.msra.mxu0 0.0
    %307 = vmatprep.subr.mxu0 0.0
    %308 = vmatpush1.msra.mxu0 0.0
    %309 = vmatprep.subr.mxu0 0.0
    %310 = vmatpush1.msra.mxu0 0.0
    %311 = vmatprep.subr.mxu0 0.0
    %312 = vmatpush1.msra.mxu0 0.0
    %313 = vmatprep.subr.mxu0 0.0
    %314 = vmatpush1.msra.mxu0 0.0
    %315 = vmatprep.subr.mxu0 0.0
    %316 = vmatpush1.msra.mxu0 %v48
    %317 = vmatprep.subr.mxu0 0.0
    %318 = vmatpush2.msra.mxu0 0.0
    %319 = vmatprep.subr.mxu0 0.0
    %320 = vmatpush2.msra.mxu0 0.0
    %321 = vmatprep.subr.mxu0 0.0
    %322 = vmatpush2.msra.mxu0 0.0
    %323 = vmatprep.subr.mxu0 0.0
    %324 = vmatpush2.msra.mxu0 0.0
    %325 = vmatprep.subr.mxu0 0.0
    %326 = vmatpush2.msra.mxu0 0.0
    %327 = vmatprep.subr.mxu0 0.0
    %328 = vmatpush2.msra.mxu0 0.0
    %329 = vmatprep.subr.mxu0 0.0
    %330 = vmatpush2.msra.mxu0 0.0
    %331 = vmatprep.subr.mxu0 0.0
    %332 = vmatpush2.msra.mxu0 0.0
    %333 = vmatprep.subr.mxu0 0.0
    %334 = vmatpush2.msra.mxu0 0.0
    %335 = vmatprep.subr.mxu0 0.0
    %336 = vmatpush2.msra.mxu0 0.0
    %337 = vmatprep.subr.mxu0 0.0
    %338 = vmatpush2.msra.mxu0 0.0
    %339 = vmatprep.subr.mxu0 0.0
    %340 = vmatpush2.msra.mxu0 0.0
    %341 = vmatprep.subr.mxu0 0.0
    %342 = vmatpush2.msra.mxu0 0.0
    %343 = vmatprep.subr.mxu0 0.0
    %344 = vmatpush2.msra.mxu0 0.0
    %345 = vmatprep.subr.mxu0 0.0
    %346 = vmatpush2.msra.mxu0 0.0
    %347 = vmatprep.subr.mxu0 0.0
    %348 = vmatpush2.msra.mxu0 0.0
    %349 = vmatprep.mubr.f32.mxu0 0.0
    %350 = vmatmul.mubr.f32.gmra.mxu0 %v212
    %v351 = vpop.f32.mrf.mxu0
    %v352 = vadd.f32 %v208, %v351
    %v353 = vpop.f32.mrf.mxu0
    %354 = vdwg.mxu0
    %s355 = scalar_lea.vmem %s1, 16
    %v356 = vld [vmem:[%s355] sm:$0xff]
    %357 = vrot.lane.b32.xlu0 %v46, 126
    %v358 = vpop.permute.xlu0 %357
    %359 = vrot.lane.b32.xlu0 %v47, 126
    %v360 = vpop.permute.xlu0 %359
    %361 = vrot.lane.b32.xlu0 %v48, 126
    %v362 = vpop.permute.xlu0 %361
    %vm363 = vcmask 1031168
    %v364 = vsel %vm363, %v358, %v360
    %v365 = vsel %vm363, %v360, %v362
    %v370 = vsel %vm66, %v356, 0
    %372 = vmatprep.subr.mxu0 0.0
    %373 = vmatpush1.msra.mxu0 0.0
    %374 = vmatprep.subr.mxu0 0.0
    %375 = vmatpush1.msra.mxu0 0.0
    %376 = vmatprep.subr.mxu0 0.0
    %377 = vmatpush1.msra.mxu0 0.0
    %378 = vmatprep.subr.mxu0 0.0
    %379 = vmatpush1.msra.mxu0 0.0
    %380 = vmatprep.subr.mxu0 0.0
    %381 = vmatpush1.msra.mxu0 0.0
    %382 = vmatprep.subr.mxu0 0.0
    %383 = vmatpush1.msra.mxu0 0.0
    %384 = vmatprep.subr.mxu0 0.0
    %385 = vmatpush1.msra.mxu0 0.0
    %386 = vmatprep.subr.mxu0 0.0
    %387 = vmatpush1.msra.mxu0 0.0
    %388 = vmatprep.subr.mxu0 0.0
    %389 = vmatpush1.msra.mxu0 0.0
    %390 = vmatprep.subr.mxu0 0.0
    %391 = vmatpush1.msra.mxu0 0.0
    %392 = vmatprep.subr.mxu0 0.0
    %393 = vmatpush1.msra.mxu0 0.0
    %394 = vmatprep.subr.mxu0 0.0
    %395 = vmatpush1.msra.mxu0 0.0
    %396 = vmatprep.subr.mxu0 0.0
    %397 = vmatpush1.msra.mxu0 0.0
    %398 = vmatprep.subr.mxu0 0.0
    %399 = vmatpush1.msra.mxu0 0.0
    %400 = vmatprep.subr.mxu0 0.0
    %401 = vmatpush1.msra.mxu0 0.0
    %402 = vmatprep.subr.mxu0 %v365
    %403 = vmatpush1.msra.mxu0 %v364
    %404 = vmatprep.subr.mxu0 0.0
    %405 = vmatpush2.msra.mxu0 0.0
    %406 = vmatprep.subr.mxu0 0.0
    %407 = vmatpush2.msra.mxu0 0.0
    %408 = vmatprep.subr.mxu0 0.0
    %409 = vmatpush2.msra.mxu0 0.0
    %410 = vmatprep.subr.mxu0 0.0
    %411 = vmatpush2.msra.mxu0 0.0
    %412 = vmatprep.subr.mxu0 0.0
    %413 = vmatpush2.msra.mxu0 0.0
    %414 = vmatprep.subr.mxu0 0.0
    %415 = vmatpush2.msra.mxu0 0.0
    %416 = vmatprep.subr.mxu0 0.0
    %417 = vmatpush2.msra.mxu0 0.0
    %418 = vmatprep.subr.mxu0 0.0
    %419 = vmatpush2.msra.mxu0 0.0
    %420 = vmatprep.subr.mxu0 0.0
    %421 = vmatpush2.msra.mxu0 0.0
    %422 = vmatprep.subr.mxu0 0.0
    %423 = vmatpush2.msra.mxu0 0.0
    %424 = vmatprep.subr.mxu0 0.0
    %425 = vmatpush2.msra.mxu0 0.0
    %426 = vmatprep.subr.mxu0 0.0
    %427 = vmatpush2.msra.mxu0 0.0
    %428 = vmatprep.subr.mxu0 0.0
    %429 = vmatpush2.msra.mxu0 0.0
    %430 = vmatprep.subr.mxu0 0.0
    %431 = vmatpush2.msra.mxu0 0.0
    %432 = vmatprep.subr.mxu0 0.0
    %433 = vmatpush2.msra.mxu0 0.0
    %434 = vmatprep.subr.mxu0 0.0
    %435 = vmatpush2.msra.mxu0 0.0
    %436 = vmatprep.mubr.f32.mxu0 0.0
    %437 = vmatmul.mubr.f32.gmra.mxu0 %v370
    %v438 = vpop.f32.mrf.mxu0
    %v439 = vadd.f32 0.0, %v438
    %v440 = vpop.f32.mrf.mxu0
    %v441 = vadd.f32 0.0, %v440
    %442 = vdwg.mxu0
    %443 = vmatprep.subr.mxu0 0.0
    %444 = vmatpush1.msra.mxu0 0.0
    %445 = vmatprep.subr.mxu0 0.0
    %446 = vmatpush1.msra.mxu0 0.0
    %447 = vmatprep.subr.mxu0 0.0
    %448 = vmatpush1.msra.mxu0 0.0
    %449 = vmatprep.subr.mxu0 0.0
    %450 = vmatpush1.msra.mxu0 0.0
    %451 = vmatprep.subr.mxu0 0.0
    %452 = vmatpush1.msra.mxu0 0.0
    %453 = vmatprep.subr.mxu0 0.0
    %454 = vmatpush1.msra.mxu0 0.0
    %455 = vmatprep.subr.mxu0 0.0
    %456 = vmatpush1.msra.mxu0 0.0
    %457 = vmatprep.subr.mxu0 0.0
    %458 = vmatpush1.msra.mxu0 0.0
    %459 = vmatprep.subr.mxu0 0.0
    %460 = vmatpush1.msra.mxu0 0.0
    %461 = vmatprep.subr.mxu0 0.0
    %462 = vmatpush1.msra.mxu0 0.0
    %463 = vmatprep.subr.mxu0 0.0
    %464 = vmatpush1.msra.mxu0 0.0
    %465 = vmatprep.subr.mxu0 0.0
    %466 = vmatpush1.msra.mxu0 0.0
    %467 = vmatprep.subr.mxu0 0.0
    %468 = vmatpush1.msra.mxu0 0.0
    %469 = vmatprep.subr.mxu0 0.0
    %470 = vmatpush1.msra.mxu0 0.0
    %471 = vmatprep.subr.mxu0 0.0
    %472 = vmatpush1.msra.mxu0 0.0
    %473 = vmatprep.subr.mxu0 0.0
    %474 = vmatpush1.msra.mxu0 %v362
    %475 = vmatprep.subr.mxu0 0.0
    %476 = vmatpush2.msra.mxu0 0.0
    %477 = vmatprep.subr.mxu0 0.0
    %478 = vmatpush2.msra.mxu0 0.0
    %479 = vmatprep.subr.mxu0 0.0
    %480 = vmatpush2.msra.mxu0 0.0
    %481 = vmatprep.subr.mxu0 0.0
    %482 = vmatpush2.msra.mxu0 0.0
    %483 = vmatprep.subr.mxu0 0.0
    %484 = vmatpush2.msra.mxu0 0.0
    %485 = vmatprep.subr.mxu0 0.0
    %486 = vmatpush2.msra.mxu0 0.0
    %487 = vmatprep.subr.mxu0 0.0
    %488 = vmatpush2.msra.mxu0 0.0
    %489 = vmatprep.subr.mxu0 0.0
    %490 = vmatpush2.msra.mxu0 0.0
    %491 = vmatprep.subr.mxu0 0.0
    %492 = vmatpush2.msra.mxu0 0.0
    %493 = vmatprep.subr.mxu0 0.0
    %494 = vmatpush2.msra.mxu0 0.0
    %495 = vmatprep.subr.mxu0 0.0
    %496 = vmatpush2.msra.mxu0 0.0
    %497 = vmatprep.subr.mxu0 0.0
    %498 = vmatpush2.msra.mxu0 0.0
    %499 = vmatprep.subr.mxu0 0.0
    %500 = vmatpush2.msra.mxu0 0.0
    %501 = vmatprep.subr.mxu0 0.0
    %502 = vmatpush2.msra.mxu0 0.0
    %503 = vmatprep.subr.mxu0 0.0
    %504 = vmatpush2.msra.mxu0 0.0
    %505 = vmatprep.subr.mxu0 0.0
    %506 = vmatpush2.msra.mxu0 0.0
    %507 = vmatprep.mubr.f32.mxu0 0.0
    %508 = vmatmul.mubr.f32.gmra.mxu0 %v370
    %v509 = vpop.f32.mrf.mxu0
    %v510 = vadd.f32 0.0, %v509
    %v511 = vpop.f32.mrf.mxu0
    %512 = vdwg.mxu0
    %v513 = vadd.f32 %v281, %v439
    %v514 = vadd.f32 %v283, %v441
    %v515 = vadd.f32 %v352, %v510
    %s516 = scalar_lea.vmem %s1, 24
    %v517 = vld [vmem:[%s516] sm:$0xff]
    %518 = vrot.lane.b32.xlu0 %v46, 110
    %v519 = vpop.permute.xlu0 %518
    %520 = vrot.lane.b32.xlu0 %v47, 110
    %v521 = vpop.permute.xlu0 %520
    %522 = vrot.lane.b32.xlu0 %v48, 110
    %v523 = vpop.permute.xlu0 %522
    %vm524 = vcmask 900096
    %v525 = vsel %vm524, %v519, %v521
    %v526 = vsel %vm524, %v521, %v523
    %v531 = vsel %vm66, %v517, 0
    %533 = vmatprep.subr.mxu0 0.0
    %534 = vmatpush1.msra.mxu0 0.0
    %535 = vmatprep.subr.mxu0 0.0
    %536 = vmatpush1.msra.mxu0 0.0
    %537 = vmatprep.subr.mxu0 0.0
    %538 = vmatpush1.msra.mxu0 0.0
    %539 = vmatprep.subr.mxu0 0.0
    %540 = vmatpush1.msra.mxu0 0.0
    %541 = vmatprep.subr.mxu0 0.0
    %542 = vmatpush1.msra.mxu0 0.0
    %543 = vmatprep.subr.mxu0 0.0
    %544 = vmatpush1.msra.mxu0 0.0
    %545 = vmatprep.subr.mxu0 0.0
    %546 = vmatpush1.msra.mxu0 0.0
    %547 = vmatprep.subr.mxu0 0.0
    %548 = vmatpush1.msra.mxu0 0.0
    %549 = vmatprep.subr.mxu0 0.0
    %550 = vmatpush1.msra.mxu0 0.0
    %551 = vmatprep.subr.mxu0 0.0
    %552 = vmatpush1.msra.mxu0 0.0
    %553 = vmatprep.subr.mxu0 0.0
    %554 = vmatpush1.msra.mxu0 0.0
    %555 = vmatprep.subr.mxu0 0.0
    %556 = vmatpush1.msra.mxu0 0.0
    %557 = vmatprep.subr.mxu0 0.0
    %558 = vmatpush1.msra.mxu0 0.0
    %559 = vmatprep.subr.mxu0 0.0
    %560 = vmatpush1.msra.mxu0 0.0
    %561 = vmatprep.subr.mxu0 0.0
    %562 = vmatpush1.msra.mxu0 0.0
    %563 = vmatprep.subr.mxu0 %v526
    %564 = vmatpush1.msra.mxu0 %v525
    %565 = vmatprep.subr.mxu0 0.0
    %566 = vmatpush2.msra.mxu0 0.0
    %567 = vmatprep.subr.mxu0 0.0
    %568 = vmatpush2.msra.mxu0 0.0
    %569 = vmatprep.subr.mxu0 0.0
    %570 = vmatpush2.msra.mxu0 0.0
    %571 = vmatprep.subr.mxu0 0.0
    %572 = vmatpush2.msra.mxu0 0.0
    %573 = vmatprep.subr.mxu0 0.0
    %574 = vmatpush2.msra.mxu0 0.0
    %575 = vmatprep.subr.mxu0 0.0
    %576 = vmatpush2.msra.mxu0 0.0
    %577 = vmatprep.subr.mxu0 0.0
    %578 = vmatpush2.msra.mxu0 0.0
    %579 = vmatprep.subr.mxu0 0.0
    %580 = vmatpush2.msra.mxu0 0.0
    %581 = vmatprep.subr.mxu0 0.0
    %582 = vmatpush2.msra.mxu0 0.0
    %583 = vmatprep.subr.mxu0 0.0
    %584 = vmatpush2.msra.mxu0 0.0
    %585 = vmatprep.subr.mxu0 0.0
    %586 = vmatpush2.msra.mxu0 0.0
    %587 = vmatprep.subr.mxu0 0.0
    %588 = vmatpush2.msra.mxu0 0.0
    %589 = vmatprep.subr.mxu0 0.0
    %590 = vmatpush2.msra.mxu0 0.0
    %591 = vmatprep.subr.mxu0 0.0
    %592 = vmatpush2.msra.mxu0 0.0
    %593 = vmatprep.subr.mxu0 0.0
    %594 = vmatpush2.msra.mxu0 0.0
    %595 = vmatprep.subr.mxu0 0.0
    %596 = vmatpush2.msra.mxu0 0.0
    %597 = vmatprep.mubr.f32.mxu0 0.0
    %598 = vmatmul.mubr.f32.gmra.mxu0 %v531
    %v599 = vpop.f32.mrf.mxu0
    %v600 = vadd.f32 0.0, %v599
    %v601 = vpop.f32.mrf.mxu0
    %v602 = vadd.f32 0.0, %v601
    %603 = vdwg.mxu0
    %604 = vmatprep.subr.mxu0 0.0
    %605 = vmatpush1.msra.mxu0 0.0
    %606 = vmatprep.subr.mxu0 0.0
    %607 = vmatpush1.msra.mxu0 0.0
    %608 = vmatprep.subr.mxu0 0.0
    %609 = vmatpush1.msra.mxu0 0.0
    %610 = vmatprep.subr.mxu0 0.0
    %611 = vmatpush1.msra.mxu0 0.0
    %612 = vmatprep.subr.mxu0 0.0
    %613 = vmatpush1.msra.mxu0 0.0
    %614 = vmatprep.subr.mxu0 0.0
    %615 = vmatpush1.msra.mxu0 0.0
    %616 = vmatprep.subr.mxu0 0.0
    %617 = vmatpush1.msra.mxu0 0.0
    %618 = vmatprep.subr.mxu0 0.0
    %619 = vmatpush1.msra.mxu0 0.0
    %620 = vmatprep.subr.mxu0 0.0
    %621 = vmatpush1.msra.mxu0 0.0
    %622 = vmatprep.subr.mxu0 0.0
    %623 = vmatpush1.msra.mxu0 0.0
    %624 = vmatprep.subr.mxu0 0.0
    %625 = vmatpush1.msra.mxu0 0.0
    %626 = vmatprep.subr.mxu0 0.0
    %627 = vmatpush1.msra.mxu0 0.0
    %628 = vmatprep.subr.mxu0 0.0
    %629 = vmatpush1.msra.mxu0 0.0
    %630 = vmatprep.subr.mxu0 0.0
    %631 = vmatpush1.msra.mxu0 0.0
    %632 = vmatprep.subr.mxu0 0.0
    %633 = vmatpush1.msra.mxu0 0.0
    %634 = vmatprep.subr.mxu0 0.0
    %635 = vmatpush1.msra.mxu0 %v523
    %636 = vmatprep.subr.mxu0 0.0
    %637 = vmatpush2.msra.mxu0 0.0
    %638 = vmatprep.subr.mxu0 0.0
    %639 = vmatpush2.msra.mxu0 0.0
    %640 = vmatprep.subr.mxu0 0.0
    %641 = vmatpush2.msra.mxu0 0.0
    %642 = vmatprep.subr.mxu0 0.0
    %643 = vmatpush2.msra.mxu0 0.0
    %644 = vmatprep.subr.mxu0 0.0
    %645 = vmatpush2.msra.mxu0 0.0
    %646 = vmatprep.subr.mxu0 0.0
    %647 = vmatpush2.msra.mxu0 0.0
    %648 = vmatprep.subr.mxu0 0.0
    %649 = vmatpush2.msra.mxu0 0.0
    %650 = vmatprep.subr.mxu0 0.0
    %651 = vmatpush2.msra.mxu0 0.0
    %652 = vmatprep.subr.mxu0 0.0
    %653 = vmatpush2.msra.mxu0 0.0
    %654 = vmatprep.subr.mxu0 0.0
    %655 = vmatpush2.msra.mxu0 0.0
    %656 = vmatprep.subr.mxu0 0.0
    %657 = vmatpush2.msra.mxu0 0.0
    %658 = vmatprep.subr.mxu0 0.0
    %659 = vmatpush2.msra.mxu0 0.0
    %660 = vmatprep.subr.mxu0 0.0
    %661 = vmatpush2.msra.mxu0 0.0
    %662 = vmatprep.subr.mxu0 0.0
    %663 = vmatpush2.msra.mxu0 0.0
    %664 = vmatprep.subr.mxu0 0.0
    %665 = vmatpush2.msra.mxu0 0.0
    %666 = vmatprep.subr.mxu0 0.0
    %667 = vmatpush2.msra.mxu0 0.0
    %668 = vmatprep.mubr.f32.mxu0 0.0
    %669 = vmatmul.mubr.f32.gmra.mxu0 %v531
    %v670 = vpop.f32.mrf.mxu0
    %v671 = vadd.f32 0.0, %v670
    %v672 = vpop.f32.mrf.mxu0
    %673 = vdwg.mxu0
    %v674 = vadd.f32 %v513, %v600
    %v675 = vadd.f32 %v514, %v602
    %v676 = vadd.f32 %v515, %v671
    %s677 = scalar_lea.vmem %s1, 32
    %v678 = vld [vmem:[%s677] sm:$0xff]
    %679 = vrot.lane.b32.xlu0 %v46, 109
    %v680 = vpop.permute.xlu0 %679
    %681 = vrot.lane.b32.xlu0 %v47, 109
    %v682 = vpop.permute.xlu0 %681
    %683 = vrot.lane.b32.xlu0 %v48, 109
    %v684 = vpop.permute.xlu0 %683
    %vm685 = vcmask 891904
    %v686 = vsel %vm685, %v680, %v682
    %v687 = vsel %vm685, %v682, %v684
    %v692 = vsel %vm66, %v678, 0
    %694 = vmatprep.subr.mxu0 0.0
    %695 = vmatpush1.msra.mxu0 0.0
    %696 = vmatprep.subr.mxu0 0.0
    %697 = vmatpush1.msra.mxu0 0.0
    %698 = vmatprep.subr.mxu0 0.0
    %699 = vmatpush1.msra.mxu0 0.0
    %700 = vmatprep.subr.mxu0 0.0
    %701 = vmatpush1.msra.mxu0 0.0
    %702 = vmatprep.subr.mxu0 0.0
    %703 = vmatpush1.msra.mxu0 0.0
    %704 = vmatprep.subr.mxu0 0.0
    %705 = vmatpush1.msra.mxu0 0.0
    %706 = vmatprep.subr.mxu0 0.0
    %707 = vmatpush1.msra.mxu0 0.0
    %708 = vmatprep.subr.mxu0 0.0
    %709 = vmatpush1.msra.mxu0 0.0
    %710 = vmatprep.subr.mxu0 0.0
    %711 = vmatpush1.msra.mxu0 0.0
    %712 = vmatprep.subr.mxu0 0.0
    %713 = vmatpush1.msra.mxu0 0.0
    %714 = vmatprep.subr.mxu0 0.0
    %715 = vmatpush1.msra.mxu0 0.0
    %716 = vmatprep.subr.mxu0 0.0
    %717 = vmatpush1.msra.mxu0 0.0
    %718 = vmatprep.subr.mxu0 0.0
    %719 = vmatpush1.msra.mxu0 0.0
    %720 = vmatprep.subr.mxu0 0.0
    %721 = vmatpush1.msra.mxu0 0.0
    %722 = vmatprep.subr.mxu0 0.0
    %723 = vmatpush1.msra.mxu0 0.0
    %724 = vmatprep.subr.mxu0 %v687
    %725 = vmatpush1.msra.mxu0 %v686
    %726 = vmatprep.subr.mxu0 0.0
    %727 = vmatpush2.msra.mxu0 0.0
    %728 = vmatprep.subr.mxu0 0.0
    %729 = vmatpush2.msra.mxu0 0.0
    %730 = vmatprep.subr.mxu0 0.0
    %731 = vmatpush2.msra.mxu0 0.0
    %732 = vmatprep.subr.mxu0 0.0
    %733 = vmatpush2.msra.mxu0 0.0
    %734 = vmatprep.subr.mxu0 0.0
    %735 = vmatpush2.msra.mxu0 0.0
    %736 = vmatprep.subr.mxu0 0.0
    %737 = vmatpush2.msra.mxu0 0.0
    %738 = vmatprep.subr.mxu0 0.0
    %739 = vmatpush2.msra.mxu0 0.0
    %740 = vmatprep.subr.mxu0 0.0
    %741 = vmatpush2.msra.mxu0 0.0
    %742 = vmatprep.subr.mxu0 0.0
    %743 = vmatpush2.msra.mxu0 0.0
    %744 = vmatprep.subr.mxu0 0.0
    %745 = vmatpush2.msra.mxu0 0.0
    %746 = vmatprep.subr.mxu0 0.0
    %747 = vmatpush2.msra.mxu0 0.0
    %748 = vmatprep.subr.mxu0 0.0
    %749 = vmatpush2.msra.mxu0 0.0
    %750 = vmatprep.subr.mxu0 0.0
    %751 = vmatpush2.msra.mxu0 0.0
    %752 = vmatprep.subr.mxu0 0.0
    %753 = vmatpush2.msra.mxu0 0.0
    %754 = vmatprep.subr.mxu0 0.0
    %755 = vmatpush2.msra.mxu0 0.0
    %756 = vmatprep.subr.mxu0 0.0
    %757 = vmatpush2.msra.mxu0 0.0
    %758 = vmatprep.mubr.f32.mxu0 0.0
    %759 = vmatmul.mubr.f32.gmra.mxu0 %v692
    %v760 = vpop.f32.mrf.mxu0
    %v761 = vadd.f32 0.0, %v760
    %v762 = vpop.f32.mrf.mxu0
    %v763 = vadd.f32 0.0, %v762
    %764 = vdwg.mxu0
    %765 = vmatprep.subr.mxu0 0.0
    %766 = vmatpush1.msra.mxu0 0.0
    %767 = vmatprep.subr.mxu0 0.0
    %768 = vmatpush1.msra.mxu0 0.0
    %769 = vmatprep.subr.mxu0 0.0
    %770 = vmatpush1.msra.mxu0 0.0
    %771 = vmatprep.subr.mxu0 0.0
    %772 = vmatpush1.msra.mxu0 0.0
    %773 = vmatprep.subr.mxu0 0.0
    %774 = vmatpush1.msra.mxu0 0.0
    %775 = vmatprep.subr.mxu0 0.0
    %776 = vmatpush1.msra.mxu0 0.0
    %777 = vmatprep.subr.mxu0 0.0
    %778 = vmatpush1.msra.mxu0 0.0
    %779 = vmatprep.subr.mxu0 0.0
    %780 = vmatpush1.msra.mxu0 0.0
    %781 = vmatprep.subr.mxu0 0.0
    %782 = vmatpush1.msra.mxu0 0.0
    %783 = vmatprep.subr.mxu0 0.0
    %784 = vmatpush1.msra.mxu0 0.0
    %785 = vmatprep.subr.mxu0 0.0
    %786 = vmatpush1.msra.mxu0 0.0
    %787 = vmatprep.subr.mxu0 0.0
    %788 = vmatpush1.msra.mxu0 0.0
    %789 = vmatprep.subr.mxu0 0.0
    %790 = vmatpush1.msra.mxu0 0.0
    %791 = vmatprep.subr.mxu0 0.0
    %792 = vmatpush1.msra.mxu0 0.0
    %793 = vmatprep.subr.mxu0 0.0
    %794 = vmatpush1.msra.mxu0 0.0
    %795 = vmatprep.subr.mxu0 0.0
    %796 = vmatpush1.msra.mxu0 %v684
    %797 = vmatprep.subr.mxu0 0.0
    %798 = vmatpush2.msra.mxu0 0.0
    %799 = vmatprep.subr.mxu0 0.0
    %800 = vmatpush2.msra.mxu0 0.0
    %801 = vmatprep.subr.mxu0 0.0
    %802 = vmatpush2.msra.mxu0 0.0
    %803 = vmatprep.subr.mxu0 0.0
    %804 = vmatpush2.msra.mxu0 0.0
    %805 = vmatprep.subr.mxu0 0.0
    %806 = vmatpush2.msra.mxu0 0.0
    %807 = vmatprep.subr.mxu0 0.0
    %808 = vmatpush2.msra.mxu0 0.0
    %809 = vmatprep.subr.mxu0 0.0
    %810 = vmatpush2.msra.mxu0 0.0
    %811 = vmatprep.subr.mxu0 0.0
    %812 = vmatpush2.msra.mxu0 0.0
    %813 = vmatprep.subr.mxu0 0.0
    %814 = vmatpush2.msra.mxu0 0.0
    %815 = vmatprep.subr.mxu0 0.0
    %816 = vmatpush2.msra.mxu0 0.0
    %817 = vmatprep.subr.mxu0 0.0
    %818 = vmatpush2.msra.mxu0 0.0
    %819 = vmatprep.subr.mxu0 0.0
    %820 = vmatpush2.msra.mxu0 0.0
    %821 = vmatprep.subr.mxu0 0.0
    %822 = vmatpush2.msra.mxu0 0.0
    %823 = vmatprep.subr.mxu0 0.0
    %824 = vmatpush2.msra.mxu0 0.0
    %825 = vmatprep.subr.mxu0 0.0
    %826 = vmatpush2.msra.mxu0 0.0
    %827 = vmatprep.subr.mxu0 0.0
    %828 = vmatpush2.msra.mxu0 0.0
    %829 = vmatprep.mubr.f32.mxu0 0.0
    %830 = vmatmul.mubr.f32.gmra.mxu0 %v692
    %v831 = vpop.f32.mrf.mxu0
    %v832 = vadd.f32 0.0, %v831
    %v833 = vpop.f32.mrf.mxu0
    %834 = vdwg.mxu0
    %v835 = vadd.f32 %v674, %v761
    %v836 = vadd.f32 %v675, %v763
    %v837 = vadd.f32 %v676, %v832
    %s838 = scalar_lea.vmem %s1, 40
    %v839 = vld [vmem:[%s838] sm:$0xff]
    %840 = vrot.lane.b32.xlu0 %v46, 108
    %v841 = vpop.permute.xlu0 %840
    %842 = vrot.lane.b32.xlu0 %v47, 108
    %v843 = vpop.permute.xlu0 %842
    %844 = vrot.lane.b32.xlu0 %v48, 108
    %v845 = vpop.permute.xlu0 %844
    %vm846 = vcmask 883712
    %v847 = vsel %vm846, %v841, %v843
    %v848 = vsel %vm846, %v843, %v845
    %v853 = vsel %vm66, %v839, 0
    %855 = vmatprep.subr.mxu0 0.0
    %856 = vmatpush1.msra.mxu0 0.0
    %857 = vmatprep.subr.mxu0 0.0
    %858 = vmatpush1.msra.mxu0 0.0
    %859 = vmatprep.subr.mxu0 0.0
    %860 = vmatpush1.msra.mxu0 0.0
    %861 = vmatprep.subr.mxu0 0.0
    %862 = vmatpush1.msra.mxu0 0.0
    %863 = vmatprep.subr.mxu0 0.0
    %864 = vmatpush1.msra.mxu0 0.0
    %865 = vmatprep.subr.mxu0 0.0
    %866 = vmatpush1.msra.mxu0 0.0
    %867 = vmatprep.subr.mxu0 0.0
    %868 = vmatpush1.msra.mxu0 0.0
    %869 = vmatprep.subr.mxu0 0.0
    %870 = vmatpush1.msra.mxu0 0.0
    %871 = vmatprep.subr.mxu0 0.0
    %872 = vmatpush1.msra.mxu0 0.0
    %873 = vmatprep.subr.mxu0 0.0
    %874 = vmatpush1.msra.mxu0 0.0
    %875 = vmatprep.subr.mxu0 0.0
    %876 = vmatpush1.msra.mxu0 0.0
    %877 = vmatprep.subr.mxu0 0.0
    %878 = vmatpush1.msra.mxu0 0.0
    %879 = vmatprep.subr.mxu0 0.0
    %880 = vmatpush1.msra.mxu0 0.0
    %881 = vmatprep.subr.mxu0 0.0
    %882 = vmatpush1.msra.mxu0 0.0
    %883 = vmatprep.subr.mxu0 0.0
    %884 = vmatpush1.msra.mxu0 0.0
    %885 = vmatprep.subr.mxu0 %v848
    %886 = vmatpush1.msra.mxu0 %v847
    %887 = vmatprep.subr.mxu0 0.0
    %888 = vmatpush2.msra.mxu0 0.0
    %889 = vmatprep.subr.mxu0 0.0
    %890 = vmatpush2.msra.mxu0 0.0
    %891 = vmatprep.subr.mxu0 0.0
    %892 = vmatpush2.msra.mxu0 0.0
    %893 = vmatprep.subr.mxu0 0.0
    %894 = vmatpush2.msra.mxu0 0.0
    %895 = vmatprep.subr.mxu0 0.0
    %896 = vmatpush2.msra.mxu0 0.0
    %897 = vmatprep.subr.mxu0 0.0
    %898 = vmatpush2.msra.mxu0 0.0
    %899 = vmatprep.subr.mxu0 0.0
    %900 = vmatpush2.msra.mxu0 0.0
    %901 = vmatprep.subr.mxu0 0.0
    %902 = vmatpush2.msra.mxu0 0.0
    %903 = vmatprep.subr.mxu0 0.0
    %904 = vmatpush2.msra.mxu0 0.0
    %905 = vmatprep.subr.mxu0 0.0
    %906 = vmatpush2.msra.mxu0 0.0
    %907 = vmatprep.subr.mxu0 0.0
    %908 = vmatpush2.msra.mxu0 0.0
    %909 = vmatprep.subr.mxu0 0.0
    %910 = vmatpush2.msra.mxu0 0.0
    %911 = vmatprep.subr.mxu0 0.0
    %912 = vmatpush2.msra.mxu0 0.0
    %913 = vmatprep.subr.mxu0 0.0
    %914 = vmatpush2.msra.mxu0 0.0
    %915 = vmatprep.subr.mxu0 0.0
    %916 = vmatpush2.msra.mxu0 0.0
    %917 = vmatprep.subr.mxu0 0.0
    %918 = vmatpush2.msra.mxu0 0.0
    %919 = vmatprep.mubr.f32.mxu0 0.0
    %920 = vmatmul.mubr.f32.gmra.mxu0 %v853
    %v921 = vpop.f32.mrf.mxu0
    %v922 = vadd.f32 0.0, %v921
    %v923 = vpop.f32.mrf.mxu0
    %v924 = vadd.f32 0.0, %v923
    %925 = vdwg.mxu0
    %926 = vmatprep.subr.mxu0 0.0
    %927 = vmatpush1.msra.mxu0 0.0
    %928 = vmatprep.subr.mxu0 0.0
    %929 = vmatpush1.msra.mxu0 0.0
    %930 = vmatprep.subr.mxu0 0.0
    %931 = vmatpush1.msra.mxu0 0.0
    %932 = vmatprep.subr.mxu0 0.0
    %933 = vmatpush1.msra.mxu0 0.0
    %934 = vmatprep.subr.mxu0 0.0
    %935 = vmatpush1.msra.mxu0 0.0
    %936 = vmatprep.subr.mxu0 0.0
    %937 = vmatpush1.msra.mxu0 0.0
    %938 = vmatprep.subr.mxu0 0.0
    %939 = vmatpush1.msra.mxu0 0.0
    %940 = vmatprep.subr.mxu0 0.0
    %941 = vmatpush1.msra.mxu0 0.0
    %942 = vmatprep.subr.mxu0 0.0
    %943 = vmatpush1.msra.mxu0 0.0
    %944 = vmatprep.subr.mxu0 0.0
    %945 = vmatpush1.msra.mxu0 0.0
    %946 = vmatprep.subr.mxu0 0.0
    %947 = vmatpush1.msra.mxu0 0.0
    %948 = vmatprep.subr.mxu0 0.0
    %949 = vmatpush1.msra.mxu0 0.0
    %950 = vmatprep.subr.mxu0 0.0
    %951 = vmatpush1.msra.mxu0 0.0
    %952 = vmatprep.subr.mxu0 0.0
    %953 = vmatpush1.msra.mxu0 0.0
    %954 = vmatprep.subr.mxu0 0.0
    %955 = vmatpush1.msra.mxu0 0.0
    %956 = vmatprep.subr.mxu0 0.0
    %957 = vmatpush1.msra.mxu0 %v845
    %958 = vmatprep.subr.mxu0 0.0
    %959 = vmatpush2.msra.mxu0 0.0
    %960 = vmatprep.subr.mxu0 0.0
    %961 = vmatpush2.msra.mxu0 0.0
    %962 = vmatprep.subr.mxu0 0.0
    %963 = vmatpush2.msra.mxu0 0.0
    %964 = vmatprep.subr.mxu0 0.0
    %965 = vmatpush2.msra.mxu0 0.0
    %966 = vmatprep.subr.mxu0 0.0
    %967 = vmatpush2.msra.mxu0 0.0
    %968 = vmatprep.subr.mxu0 0.0
    %969 = vmatpush2.msra.mxu0 0.0
    %970 = vmatprep.subr.mxu0 0.0
    %971 = vmatpush2.msra.mxu0 0.0
    %972 = vmatprep.subr.mxu0 0.0
    %973 = vmatpush2.msra.mxu0 0.0
    %974 = vmatprep.subr.mxu0 0.0
    %975 = vmatpush2.msra.mxu0 0.0
    %976 = vmatprep.subr.mxu0 0.0
    %977 = vmatpush2.msra.mxu0 0.0
    %978 = vmatprep.subr.mxu0 0.0
    %979 = vmatpush2.msra.mxu0 0.0
    %980 = vmatprep.subr.mxu0 0.0
    %981 = vmatpush2.msra.mxu0 0.0
    %982 = vmatprep.subr.mxu0 0.0
    %983 = vmatpush2.msra.mxu0 0.0
    %984 = vmatprep.subr.mxu0 0.0
    %985 = vmatpush2.msra.mxu0 0.0
    %986 = vmatprep.subr.mxu0 0.0
    %987 = vmatpush2.msra.mxu0 0.0
    %988 = vmatprep.subr.mxu0 0.0
    %989 = vmatpush2.msra.mxu0 0.0
    %990 = vmatprep.mubr.f32.mxu0 0.0
    %991 = vmatmul.mubr.f32.gmra.mxu0 %v853
    %v992 = vpop.f32.mrf.mxu0
    %v993 = vadd.f32 0.0, %v992
    %v994 = vpop.f32.mrf.mxu0
    %995 = vdwg.mxu0
    %v996 = vadd.f32 %v835, %v922
    %v997 = vadd.f32 %v836, %v924
    %v998 = vadd.f32 %v837, %v993
    %s999 = scalar_lea.vmem %s1, 48
    %v1000 = vld [vmem:[%s999] sm:$0xff]
    %1001 = vrot.lane.b32.xlu0 %v46, 92
    %v1002 = vpop.permute.xlu0 %1001
    %1003 = vrot.lane.b32.xlu0 %v47, 92
    %v1004 = vpop.permute.xlu0 %1003
    %1005 = vrot.lane.b32.xlu0 %v48, 92
    %v1006 = vpop.permute.xlu0 %1005
    %vm1007 = vcmask 752640
    %v1008 = vsel %vm1007, %v1002, %v1004
    %v1009 = vsel %vm1007, %v1004, %v1006
    %v1014 = vsel %vm66, %v1000, 0
    %1016 = vmatprep.subr.mxu0 0.0
    %1017 = vmatpush1.msra.mxu0 0.0
    %1018 = vmatprep.subr.mxu0 0.0
    %1019 = vmatpush1.msra.mxu0 0.0
    %1020 = vmatprep.subr.mxu0 0.0
    %1021 = vmatpush1.msra.mxu0 0.0
    %1022 = vmatprep.subr.mxu0 0.0
    %1023 = vmatpush1.msra.mxu0 0.0
    %1024 = vmatprep.subr.mxu0 0.0
    %1025 = vmatpush1.msra.mxu0 0.0
    %1026 = vmatprep.subr.mxu0 0.0
    %1027 = vmatpush1.msra.mxu0 0.0
    %1028 = vmatprep.subr.mxu0 0.0
    %1029 = vmatpush1.msra.mxu0 0.0
    %1030 = vmatprep.subr.mxu0 0.0
    %1031 = vmatpush1.msra.mxu0 0.0
    %1032 = vmatprep.subr.mxu0 0.0
    %1033 = vmatpush1.msra.mxu0 0.0
    %1034 = vmatprep.subr.mxu0 0.0
    %1035 = vmatpush1.msra.mxu0 0.0
    %1036 = vmatprep.subr.mxu0 0.0
    %1037 = vmatpush1.msra.mxu0 0.0
    %1038 = vmatprep.subr.mxu0 0.0
    %1039 = vmatpush1.msra.mxu0 0.0
    %1040 = vmatprep.subr.mxu0 0.0
    %1041 = vmatpush1.msra.mxu0 0.0
    %1042 = vmatprep.subr.mxu0 0.0
    %1043 = vmatpush1.msra.mxu0 0.0
    %1044 = vmatprep.subr.mxu0 0.0
    %1045 = vmatpush1.msra.mxu0 0.0
    %1046 = vmatprep.subr.mxu0 %v1009
    %1047 = vmatpush1.msra.mxu0 %v1008
    %1048 = vmatprep.subr.mxu0 0.0
    %1049 = vmatpush2.msra.mxu0 0.0
    %1050 = vmatprep.subr.mxu0 0.0
    %1051 = vmatpush2.msra.mxu0 0.0
    %1052 = vmatprep.subr.mxu0 0.0
    %1053 = vmatpush2.msra.mxu0 0.0
    %1054 = vmatprep.subr.mxu0 0.0
    %1055 = vmatpush2.msra.mxu0 0.0
    %1056 = vmatprep.subr.mxu0 0.0
    %1057 = vmatpush2.msra.mxu0 0.0
    %1058 = vmatprep.subr.mxu0 0.0
    %1059 = vmatpush2.msra.mxu0 0.0
    %1060 = vmatprep.subr.mxu0 0.0
    %1061 = vmatpush2.msra.mxu0 0.0
    %1062 = vmatprep.subr.mxu0 0.0
    %1063 = vmatpush2.msra.mxu0 0.0
    %1064 = vmatprep.subr.mxu0 0.0
    %1065 = vmatpush2.msra.mxu0 0.0
    %1066 = vmatprep.subr.mxu0 0.0
    %1067 = vmatpush2.msra.mxu0 0.0
    %1068 = vmatprep.subr.mxu0 0.0
    %1069 = vmatpush2.msra.mxu0 0.0
    %1070 = vmatprep.subr.mxu0 0.0
    %1071 = vmatpush2.msra.mxu0 0.0
    %1072 = vmatprep.subr.mxu0 0.0
    %1073 = vmatpush2.msra.mxu0 0.0
    %1074 = vmatprep.subr.mxu0 0.0
    %1075 = vmatpush2.msra.mxu0 0.0
    %1076 = vmatprep.subr.mxu0 0.0
    %1077 = vmatpush2.msra.mxu0 0.0
    %1078 = vmatprep.subr.mxu0 0.0
    %1079 = vmatpush2.msra.mxu0 0.0
    %1080 = vmatprep.mubr.f32.mxu0 0.0
    %1081 = vmatmul.mubr.f32.gmra.mxu0 %v1014
    %v1082 = vpop.f32.mrf.mxu0
    %v1083 = vadd.f32 0.0, %v1082
    %v1084 = vpop.f32.mrf.mxu0
    %v1085 = vadd.f32 0.0, %v1084
    %1086 = vdwg.mxu0
    %1087 = vmatprep.subr.mxu0 0.0
    %1088 = vmatpush1.msra.mxu0 0.0
    %1089 = vmatprep.subr.mxu0 0.0
    %1090 = vmatpush1.msra.mxu0 0.0
    %1091 = vmatprep.subr.mxu0 0.0
    %1092 = vmatpush1.msra.mxu0 0.0
    %1093 = vmatprep.subr.mxu0 0.0
    %1094 = vmatpush1.msra.mxu0 0.0
    %1095 = vmatprep.subr.mxu0 0.0
    %1096 = vmatpush1.msra.mxu0 0.0
    %1097 = vmatprep.subr.mxu0 0.0
    %1098 = vmatpush1.msra.mxu0 0.0
    %1099 = vmatprep.subr.mxu0 0.0
    %1100 = vmatpush1.msra.mxu0 0.0
    %1101 = vmatprep.subr.mxu0 0.0
    %1102 = vmatpush1.msra.mxu0 0.0
    %1103 = vmatprep.subr.mxu0 0.0
    %1104 = vmatpush1.msra.mxu0 0.0
    %1105 = vmatprep.subr.mxu0 0.0
    %1106 = vmatpush1.msra.mxu0 0.0
    %1107 = vmatprep.subr.mxu0 0.0
    %1108 = vmatpush1.msra.mxu0 0.0
    %1109 = vmatprep.subr.mxu0 0.0
    %1110 = vmatpush1.msra.mxu0 0.0
    %1111 = vmatprep.subr.mxu0 0.0
    %1112 = vmatpush1.msra.mxu0 0.0
    %1113 = vmatprep.subr.mxu0 0.0
    %1114 = vmatpush1.msra.mxu0 0.0
    %1115 = vmatprep.subr.mxu0 0.0
    %1116 = vmatpush1.msra.mxu0 0.0
    %1117 = vmatprep.subr.mxu0 0.0
    %1118 = vmatpush1.msra.mxu0 %v1006
    %1119 = vmatprep.subr.mxu0 0.0
    %1120 = vmatpush2.msra.mxu0 0.0
    %1121 = vmatprep.subr.mxu0 0.0
    %1122 = vmatpush2.msra.mxu0 0.0
    %1123 = vmatprep.subr.mxu0 0.0
    %1124 = vmatpush2.msra.mxu0 0.0
    %1125 = vmatprep.subr.mxu0 0.0
    %1126 = vmatpush2.msra.mxu0 0.0
    %1127 = vmatprep.subr.mxu0 0.0
    %1128 = vmatpush2.msra.mxu0 0.0
    %1129 = vmatprep.subr.mxu0 0.0
    %1130 = vmatpush2.msra.mxu0 0.0
    %1131 = vmatprep.subr.mxu0 0.0
    %1132 = vmatpush2.msra.mxu0 0.0
    %1133 = vmatprep.subr.mxu0 0.0
    %1134 = vmatpush2.msra.mxu0 0.0
    %1135 = vmatprep.subr.mxu0 0.0
    %1136 = vmatpush2.msra.mxu0 0.0
    %1137 = vmatprep.subr.mxu0 0.0
    %1138 = vmatpush2.msra.mxu0 0.0
    %1139 = vmatprep.subr.mxu0 0.0
    %1140 = vmatpush2.msra.mxu0 0.0
    %1141 = vmatprep.subr.mxu0 0.0
    %1142 = vmatpush2.msra.mxu0 0.0
    %1143 = vmatprep.subr.mxu0 0.0
    %1144 = vmatpush2.msra.mxu0 0.0
    %1145 = vmatprep.subr.mxu0 0.0
    %1146 = vmatpush2.msra.mxu0 0.0
    %1147 = vmatprep.subr.mxu0 0.0
    %1148 = vmatpush2.msra.mxu0 0.0
    %1149 = vmatprep.subr.mxu0 0.0
    %1150 = vmatpush2.msra.mxu0 0.0
    %1151 = vmatprep.mubr.f32.mxu0 0.0
    %1152 = vmatmul.mubr.f32.gmra.mxu0 %v1014
    %v1153 = vpop.f32.mrf.mxu0
    %v1154 = vadd.f32 0.0, %v1153
    %v1155 = vpop.f32.mrf.mxu0
    %1156 = vdwg.mxu0
    %v1157 = vadd.f32 %v996, %v1083
    %v1158 = vadd.f32 %v997, %v1085
    %v1159 = vadd.f32 %v998, %v1154
    %s1160 = scalar_lea.vmem %s1, 56
    %v1161 = vld [vmem:[%s1160] sm:$0xff]
    %1162 = vrot.lane.b32.xlu0 %v46, 91
    %v1163 = vpop.permute.xlu0 %1162
    %1164 = vrot.lane.b32.xlu0 %v47, 91
    %v1165 = vpop.permute.xlu0 %1164
    %1166 = vrot.lane.b32.xlu0 %v48, 91
    %v1167 = vpop.permute.xlu0 %1166
    %vm1168 = vcmask 744448
    %v1169 = vsel %vm1168, %v1163, %v1165
    %v1170 = vsel %vm1168, %v1165, %v1167
    %v1175 = vsel %vm66, %v1161, 0
    %1177 = vmatprep.subr.mxu0 0.0
    %1178 = vmatpush1.msra.mxu0 0.0
    %1179 = vmatprep.subr.mxu0 0.0
    %1180 = vmatpush1.msra.mxu0 0.0
    %1181 = vmatprep.subr.mxu0 0.0
    %1182 = vmatpush1.msra.mxu0 0.0
    %1183 = vmatprep.subr.mxu0 0.0
    %1184 = vmatpush1.msra.mxu0 0.0
    %1185 = vmatprep.subr.mxu0 0.0
    %1186 = vmatpush1.msra.mxu0 0.0
    %1187 = vmatprep.subr.mxu0 0.0
    %1188 = vmatpush1.msra.mxu0 0.0
    %1189 = vmatprep.subr.mxu0 0.0
    %1190 = vmatpush1.msra.mxu0 0.0
    %1191 = vmatprep.subr.mxu0 0.0
    %1192 = vmatpush1.msra.mxu0 0.0
    %1193 = vmatprep.subr.mxu0 0.0
    %1194 = vmatpush1.msra.mxu0 0.0
    %1195 = vmatprep.subr.mxu0 0.0
    %1196 = vmatpush1.msra.mxu0 0.0
    %1197 = vmatprep.subr.mxu0 0.0
    %1198 = vmatpush1.msra.mxu0 0.0
    %1199 = vmatprep.subr.mxu0 0.0
    %1200 = vmatpush1.msra.mxu0 0.0
    %1201 = vmatprep.subr.mxu0 0.0
    %1202 = vmatpush1.msra.mxu0 0.0
    %1203 = vmatprep.subr.mxu0 0.0
    %1204 = vmatpush1.msra.mxu0 0.0
    %1205 = vmatprep.subr.mxu0 0.0
    %1206 = vmatpush1.msra.mxu0 0.0
    %1207 = vmatprep.subr.mxu0 %v1170
    %1208 = vmatpush1.msra.mxu0 %v1169
    %1209 = vmatprep.subr.mxu0 0.0
    %1210 = vmatpush2.msra.mxu0 0.0
    %1211 = vmatprep.subr.mxu0 0.0
    %1212 = vmatpush2.msra.mxu0 0.0
    %1213 = vmatprep.subr.mxu0 0.0
    %1214 = vmatpush2.msra.mxu0 0.0
    %1215 = vmatprep.subr.mxu0 0.0
    %1216 = vmatpush2.msra.mxu0 0.0
    %1217 = vmatprep.subr.mxu0 0.0
    %1218 = vmatpush2.msra.mxu0 0.0
    %1219 = vmatprep.subr.mxu0 0.0
    %1220 = vmatpush2.msra.mxu0 0.0
    %1221 = vmatprep.subr.mxu0 0.0
    %1222 = vmatpush2.msra.mxu0 0.0
    %1223 = vmatprep.subr.mxu0 0.0
    %1224 = vmatpush2.msra.mxu0 0.0
    %1225 = vmatprep.subr.mxu0 0.0
    %1226 = vmatpush2.msra.mxu0 0.0
    %1227 = vmatprep.subr.mxu0 0.0
    %1228 = vmatpush2.msra.mxu0 0.0
    %1229 = vmatprep.subr.mxu0 0.0
    %1230 = vmatpush2.msra.mxu0 0.0
    %1231 = vmatprep.subr.mxu0 0.0
    %1232 = vmatpush2.msra.mxu0 0.0
    %1233 = vmatprep.subr.mxu0 0.0
    %1234 = vmatpush2.msra.mxu0 0.0
    %1235 = vmatprep.subr.mxu0 0.0
    %1236 = vmatpush2.msra.mxu0 0.0
    %1237 = vmatprep.subr.mxu0 0.0
    %1238 = vmatpush2.msra.mxu0 0.0
    %1239 = vmatprep.subr.mxu0 0.0
    %1240 = vmatpush2.msra.mxu0 0.0
    %1241 = vmatprep.mubr.f32.mxu0 0.0
    %1242 = vmatmul.mubr.f32.gmra.mxu0 %v1175
    %v1243 = vpop.f32.mrf.mxu0
    %v1244 = vadd.f32 0.0, %v1243
    %v1245 = vpop.f32.mrf.mxu0
    %v1246 = vadd.f32 0.0, %v1245
    %1247 = vdwg.mxu0
    %1248 = vmatprep.subr.mxu0 0.0
    %1249 = vmatpush1.msra.mxu0 0.0
    %1250 = vmatprep.subr.mxu0 0.0
    %1251 = vmatpush1.msra.mxu0 0.0
    %1252 = vmatprep.subr.mxu0 0.0
    %1253 = vmatpush1.msra.mxu0 0.0
    %1254 = vmatprep.subr.mxu0 0.0
    %1255 = vmatpush1.msra.mxu0 0.0
    %1256 = vmatprep.subr.mxu0 0.0
    %1257 = vmatpush1.msra.mxu0 0.0
    %1258 = vmatprep.subr.mxu0 0.0
    %1259 = vmatpush1.msra.mxu0 0.0
    %1260 = vmatprep.subr.mxu0 0.0
    %1261 = vmatpush1.msra.mxu0 0.0
    %1262 = vmatprep.subr.mxu0 0.0
    %1263 = vmatpush1.msra.mxu0 0.0
    %1264 = vmatprep.subr.mxu0 0.0
    %1265 = vmatpush1.msra.mxu0 0.0
    %1266 = vmatprep.subr.mxu0 0.0
    %1267 = vmatpush1.msra.mxu0 0.0
    %1268 = vmatprep.subr.mxu0 0.0
    %1269 = vmatpush1.msra.mxu0 0.0
    %1270 = vmatprep.subr.mxu0 0.0
    %1271 = vmatpush1.msra.mxu0 0.0
    %1272 = vmatprep.subr.mxu0 0.0
    %1273 = vmatpush1.msra.mxu0 0.0
    %1274 = vmatprep.subr.mxu0 0.0
    %1275 = vmatpush1.msra.mxu0 0.0
    %1276 = vmatprep.subr.mxu0 0.0
    %1277 = vmatpush1.msra.mxu0 0.0
    %1278 = vmatprep.subr.mxu0 0.0
    %1279 = vmatpush1.msra.mxu0 %v1167
    %1280 = vmatprep.subr.mxu0 0.0
    %1281 = vmatpush2.msra.mxu0 0.0
    %1282 = vmatprep.subr.mxu0 0.0
    %1283 = vmatpush2.msra.mxu0 0.0
    %1284 = vmatprep.subr.mxu0 0.0
    %1285 = vmatpush2.msra.mxu0 0.0
    %1286 = vmatprep.subr.mxu0 0.0
    %1287 = vmatpush2.msra.mxu0 0.0
    %1288 = vmatprep.subr.mxu0 0.0
    %1289 = vmatpush2.msra.mxu0 0.0
    %1290 = vmatprep.subr.mxu0 0.0
    %1291 = vmatpush2.msra.mxu0 0.0
    %1292 = vmatprep.subr.mxu0 0.0
    %1293 = vmatpush2.msra.mxu0 0.0
    %1294 = vmatprep.subr.mxu0 0.0
    %1295 = vmatpush2.msra.mxu0 0.0
    %1296 = vmatprep.subr.mxu0 0.0
    %1297 = vmatpush2.msra.mxu0 0.0
    %1298 = vmatprep.subr.mxu0 0.0
    %1299 = vmatpush2.msra.mxu0 0.0
    %1300 = vmatprep.subr.mxu0 0.0
    %1301 = vmatpush2.msra.mxu0 0.0
    %1302 = vmatprep.subr.mxu0 0.0
    %1303 = vmatpush2.msra.mxu0 0.0
    %1304 = vmatprep.subr.mxu0 0.0
    %1305 = vmatpush2.msra.mxu0 0.0
    %1306 = vmatprep.subr.mxu0 0.0
    %1307 = vmatpush2.msra.mxu0 0.0
    %1308 = vmatprep.subr.mxu0 0.0
    %1309 = vmatpush2.msra.mxu0 0.0
    %1310 = vmatprep.subr.mxu0 0.0
    %1311 = vmatpush2.msra.mxu0 0.0
    %1312 = vmatprep.mubr.f32.mxu0 0.0
    %1313 = vmatmul.mubr.f32.gmra.mxu0 %v1175
    %v1314 = vpop.f32.mrf.mxu0
    %v1315 = vadd.f32 0.0, %v1314
    %v1316 = vpop.f32.mrf.mxu0
    %1317 = vdwg.mxu0
    %v1318 = vadd.f32 %v1157, %v1244
    %v1319 = vadd.f32 %v1158, %v1246
    %v1320 = vadd.f32 %v1159, %v1315
    %s1321 = scalar_lea.vmem %s1, 64
    %v1322 = vld [vmem:[%s1321] sm:$0xff]
    %1323 = vrot.lane.b32.xlu0 %v46, 90
    %v1324 = vpop.permute.xlu0 %1323
    %1325 = vrot.lane.b32.xlu0 %v47, 90
    %v1326 = vpop.permute.xlu0 %1325
    %1327 = vrot.lane.b32.xlu0 %v48, 90
    %v1328 = vpop.permute.xlu0 %1327
    %vm1329 = vcmask 736256
    %v1330 = vsel %vm1329, %v1324, %v1326
    %v1331 = vsel %vm1329, %v1326, %v1328
    %v1336 = vsel %vm66, %v1322, 0
    %1338 = vmatprep.subr.mxu0 0.0
    %1339 = vmatpush1.msra.mxu0 0.0
    %1340 = vmatprep.subr.mxu0 0.0
    %1341 = vmatpush1.msra.mxu0 0.0
    %1342 = vmatprep.subr.mxu0 0.0
    %1343 = vmatpush1.msra.mxu0 0.0
    %1344 = vmatprep.subr.mxu0 0.0
    %1345 = vmatpush1.msra.mxu0 0.0
    %1346 = vmatprep.subr.mxu0 0.0
    %1347 = vmatpush1.msra.mxu0 0.0
    %1348 = vmatprep.subr.mxu0 0.0
    %1349 = vmatpush1.msra.mxu0 0.0
    %1350 = vmatprep.subr.mxu0 0.0
    %1351 = vmatpush1.msra.mxu0 0.0
    %1352 = vmatprep.subr.mxu0 0.0
    %1353 = vmatpush1.msra.mxu0 0.0
    %1354 = vmatprep.subr.mxu0 0.0
    %1355 = vmatpush1.msra.mxu0 0.0
    %1356 = vmatprep.subr.mxu0 0.0
    %1357 = vmatpush1.msra.mxu0 0.0
    %1358 = vmatprep.subr.mxu0 0.0
    %1359 = vmatpush1.msra.mxu0 0.0
    %1360 = vmatprep.subr.mxu0 0.0
    %1361 = vmatpush1.msra.mxu0 0.0
    %1362 = vmatprep.subr.mxu0 0.0
    %1363 = vmatpush1.msra.mxu0 0.0
    %1364 = vmatprep.subr.mxu0 0.0
    %1365 = vmatpush1.msra.mxu0 0.0
    %1366 = vmatprep.subr.mxu0 0.0
    %1367 = vmatpush1.msra.mxu0 0.0
    %1368 = vmatprep.subr.mxu0 %v1331
    %1369 = vmatpush1.msra.mxu0 %v1330
    %1370 = vmatprep.subr.mxu0 0.0
    %1371 = vmatpush2.msra.mxu0 0.0
    %1372 = vmatprep.subr.mxu0 0.0
    %1373 = vmatpush2.msra.mxu0 0.0
    %1374 = vmatprep.subr.mxu0 0.0
    %1375 = vmatpush2.msra.mxu0 0.0
    %1376 = vmatprep.subr.mxu0 0.0
    %1377 = vmatpush2.msra.mxu0 0.0
    %1378 = vmatprep.subr.mxu0 0.0
    %1379 = vmatpush2.msra.mxu0 0.0
    %1380 = vmatprep.subr.mxu0 0.0
    %1381 = vmatpush2.msra.mxu0 0.0
    %1382 = vmatprep.subr.mxu0 0.0
    %1383 = vmatpush2.msra.mxu0 0.0
    %1384 = vmatprep.subr.mxu0 0.0
    %1385 = vmatpush2.msra.mxu0 0.0
    %1386 = vmatprep.subr.mxu0 0.0
    %1387 = vmatpush2.msra.mxu0 0.0
    %1388 = vmatprep.subr.mxu0 0.0
    %1389 = vmatpush2.msra.mxu0 0.0
    %1390 = vmatprep.subr.mxu0 0.0
    %1391 = vmatpush2.msra.mxu0 0.0
    %1392 = vmatprep.subr.mxu0 0.0
    %1393 = vmatpush2.msra.mxu0 0.0
    %1394 = vmatprep.subr.mxu0 0.0
    %1395 = vmatpush2.msra.mxu0 0.0
    %1396 = vmatprep.subr.mxu0 0.0
    %1397 = vmatpush2.msra.mxu0 0.0
    %1398 = vmatprep.subr.mxu0 0.0
    %1399 = vmatpush2.msra.mxu0 0.0
    %1400 = vmatprep.subr.mxu0 0.0
    %1401 = vmatpush2.msra.mxu0 0.0
    %1402 = vmatprep.mubr.f32.mxu0 0.0
    %1403 = vmatmul.mubr.f32.gmra.mxu0 %v1336
    %v1404 = vpop.f32.mrf.mxu0
    %v1405 = vadd.f32 0.0, %v1404
    %v1406 = vpop.f32.mrf.mxu0
    %v1407 = vadd.f32 0.0, %v1406
    %1408 = vdwg.mxu0
    %1409 = vmatprep.subr.mxu0 0.0
    %1410 = vmatpush1.msra.mxu0 0.0
    %1411 = vmatprep.subr.mxu0 0.0
    %1412 = vmatpush1.msra.mxu0 0.0
    %1413 = vmatprep.subr.mxu0 0.0
    %1414 = vmatpush1.msra.mxu0 0.0
    %1415 = vmatprep.subr.mxu0 0.0
    %1416 = vmatpush1.msra.mxu0 0.0
    %1417 = vmatprep.subr.mxu0 0.0
    %1418 = vmatpush1.msra.mxu0 0.0
    %1419 = vmatprep.subr.mxu0 0.0
    %1420 = vmatpush1.msra.mxu0 0.0
    %1421 = vmatprep.subr.mxu0 0.0
    %1422 = vmatpush1.msra.mxu0 0.0
    %1423 = vmatprep.subr.mxu0 0.0
    %1424 = vmatpush1.msra.mxu0 0.0
    %1425 = vmatprep.subr.mxu0 0.0
    %1426 = vmatpush1.msra.mxu0 0.0
    %1427 = vmatprep.subr.mxu0 0.0
    %1428 = vmatpush1.msra.mxu0 0.0
    %1429 = vmatprep.subr.mxu0 0.0
    %1430 = vmatpush1.msra.mxu0 0.0
    %1431 = vmatprep.subr.mxu0 0.0
    %1432 = vmatpush1.msra.mxu0 0.0
    %1433 = vmatprep.subr.mxu0 0.0
    %1434 = vmatpush1.msra.mxu0 0.0
    %1435 = vmatprep.subr.mxu0 0.0
    %1436 = vmatpush1.msra.mxu0 0.0
    %1437 = vmatprep.subr.mxu0 0.0
    %1438 = vmatpush1.msra.mxu0 0.0
    %1439 = vmatprep.subr.mxu0 0.0
    %1440 = vmatpush1.msra.mxu0 %v1328
    %1441 = vmatprep.subr.mxu0 0.0
    %1442 = vmatpush2.msra.mxu0 0.0
    %1443 = vmatprep.subr.mxu0 0.0
    %1444 = vmatpush2.msra.mxu0 0.0
    %1445 = vmatprep.subr.mxu0 0.0
    %1446 = vmatpush2.msra.mxu0 0.0
    %1447 = vmatprep.subr.mxu0 0.0
    %1448 = vmatpush2.msra.mxu0 0.0
    %1449 = vmatprep.subr.mxu0 0.0
    %1450 = vmatpush2.msra.mxu0 0.0
    %1451 = vmatprep.subr.mxu0 0.0
    %1452 = vmatpush2.msra.mxu0 0.0
    %1453 = vmatprep.subr.mxu0 0.0
    %1454 = vmatpush2.msra.mxu0 0.0
    %1455 = vmatprep.subr.mxu0 0.0
    %1456 = vmatpush2.msra.mxu0 0.0
    %1457 = vmatprep.subr.mxu0 0.0
    %1458 = vmatpush2.msra.mxu0 0.0
    %1459 = vmatprep.subr.mxu0 0.0
    %1460 = vmatpush2.msra.mxu0 0.0
    %1461 = vmatprep.subr.mxu0 0.0
    %1462 = vmatpush2.msra.mxu0 0.0
    %1463 = vmatprep.subr.mxu0 0.0
    %1464 = vmatpush2.msra.mxu0 0.0
    %1465 = vmatprep.subr.mxu0 0.0
    %1466 = vmatpush2.msra.mxu0 0.0
    %1467 = vmatprep.subr.mxu0 0.0
    %1468 = vmatpush2.msra.mxu0 0.0
    %1469 = vmatprep.subr.mxu0 0.0
    %1470 = vmatpush2.msra.mxu0 0.0
    %1471 = vmatprep.subr.mxu0 0.0
    %1472 = vmatpush2.msra.mxu0 0.0
    %1473 = vmatprep.mubr.f32.mxu0 0.0
    %1474 = vmatmul.mubr.f32.gmra.mxu0 %v1336
    %v1475 = vpop.f32.mrf.mxu0
    %v1476 = vadd.f32 0.0, %v1475
    %v1477 = vpop.f32.mrf.mxu0
    %1478 = vdwg.mxu0
    %v1479 = vadd.f32 %v1318, %v1405
    %v1480 = vadd.f32 %v1319, %v1407
    %v1481 = vadd.f32 %v1320, %v1476
    %v1483 = vlaneseq
    %v1484 = vshrl.u32 %v1483, 7
    %v1485 = vsub.s32 0, %v1484
    %v1486 = vrot.slane %v22, %v1485
    %v1487 = vlaneseq
    %v1488 = vshrl.u32 %v1487, 7
    %v1489 = vsub.s32 1, %v1488
    %v1490 = vrot.slane %v22, %v1489
    %v1491 = vlaneseq
    %v1492 = vshrl.u32 %v1491, 7
    %v1493 = vsub.s32 2, %v1492
    %v1494 = vrot.slane %v22, %v1493
    %v1498 = vmul.f32 %v1479, %v1486
    %v1499 = vmul.f32 %v1480, %v1490
    %v1500 = vmul.f32 %v1481, %v1494
    %v1501 = vadd.f32 %v1498, %v1499
    %vm1502 = vcmask 244736
    %v1503 = vsel %vm1502, %v1500, 0.0
    %v1504 = vadd.f32 %v1501, %v1503
    %1505 = vadd.xlane.f32.xlu0 %v1504
    %v1506 = vpop.xlane.xlu0 %1505
    %v1507 = vmul.f32 %v1498, %v1479
    %v1508 = vmul.f32 %v1499, %v1480
    %v1509 = vmul.f32 %v1500, %v1481
    %v1510 = vadd.f32 %v1507, %v1508
    %v1511 = vsel %vm1502, %v1509, 0.0
    %v1512 = vadd.f32 %v1510, %v1511
    %1513 = vadd.xlane.f32.xlu0 %v1512
    %v1514 = vpop.xlane.xlu0 %1513
    %v1515 = vmul.f32 %v1506, 0.00390625
    %v1516 = vmul.f32 %v1514, 0.00390625
    %v1517 = vmul.f32 %v1515, %v1515
    %v1518 = vsub.f32 %v1516, %v1517
    %v1519 = vmax.f32 %v1518, 0.0
    %v1520 = vsub.f32 %v1479, %v1515
    %v1521 = vsub.f32 %v1480, %v1515
    %v1522 = vsub.f32 %v1481, %v1515
    %v1523 = vadd.f32 %v1519, 1e-05
    %v1524 = vrsqrt.pop %v1523
    %v1525 = vmul.f32 %v1520, %v1524
    %v1526 = vmul.f32 %v1521, %v1524
    %v1527 = vmul.f32 %v1522, %v1524
    %v1528 = vmax.f32 %v1525, 0.0
    %v1529 = vmax.f32 %v1526, 0.0
    %v1530 = vmax.f32 %v1527, 0.0
    %v1531 = vmul.f32 %v1528, %v1486
    %v1532 = vmul.f32 %v1529, %v1490
    %v1533 = vmul.f32 %v1530, %v1494
    %1537 = vrot.lane.b32.xlu0 %v1531, 19
    %v1538 = vpop.permute.xlu0 %1537
    %1539 = vrot.lane.b32.xlu0 %v1532, 19
    %v1540 = vpop.permute.xlu0 %1539
    %1541 = vrot.lane.b32.xlu0 %v1533, 19
    %v1542 = vpop.permute.xlu0 %1541
    %v1543 = vsel %vm18, %v1538, %v1540
    %v1544 = vsel %vm18, %v1540, %v1542
    %1548 = vst.msk [vmem:[#allocation2] sm:$0xff] %vm40, %v1538
    %1549 = vst [vmem:[#allocation2 + $0x8] sm:$0xff] %v1543
    %1550 = vst.msk [vmem:[#allocation2 + $0x10] sm:$0xff] %vm43, %v1544
    %v1551 = vld [vmem:[%s2] sm:$0xff]
    %v1552 = vld [vmem:[#allocation2] sm:$0xff]
    %v1553 = vld [vmem:[#allocation2 + $0x8] sm:$0xff]
    %v1554 = vld [vmem:[#allocation2 + $0x10] sm:$0xff]
    %s1555 = scalar_lea.vmem %s2, 8
    %v1556 = vld [vmem:[%s1555] sm:$0xff]
    %1560 = vrot.lane.b32.xlu0 %v1552, 127
    %v1561 = vpop.permute.xlu0 %1560
    %1562 = vrot.lane.b32.xlu0 %v1553, 127
    %v1563 = vpop.permute.xlu0 %1562
    %1564 = vrot.lane.b32.xlu0 %v1554, 127
    %v1565 = vpop.permute.xlu0 %1564
    %v1566 = vsel %vm60, %v1561, %v1563
    %v1567 = vsel %vm60, %v1563, %v1565
    %v1572 = vsel %vm66, %v1556, 0
    %1574 = vmatprep.subr.mxu0 0.0
    %1575 = vmatpush1.msra.mxu0 0.0
    %1576 = vmatprep.subr.mxu0 0.0
    %1577 = vmatpush1.msra.mxu0 0.0
    %1578 = vmatprep.subr.mxu0 0.0
    %1579 = vmatpush1.msra.mxu0 0.0
    %1580 = vmatprep.subr.mxu0 0.0
    %1581 = vmatpush1.msra.mxu0 0.0
    %1582 = vmatprep.subr.mxu0 0.0
    %1583 = vmatpush1.msra.mxu0 0.0
    %1584 = vmatprep.subr.mxu0 0.0
    %1585 = vmatpush1.msra.mxu0 0.0
    %1586 = vmatprep.subr.mxu0 0.0
    %1587 = vmatpush1.msra.mxu0 0.0
    %1588 = vmatprep.subr.mxu0 0.0
    %1589 = vmatpush1.msra.mxu0 0.0
    %1590 = vmatprep.subr.mxu0 0.0
    %1591 = vmatpush1.msra.mxu0 0.0
    %1592 = vmatprep.subr.mxu0 0.0
    %1593 = vmatpush1.msra.mxu0 0.0
    %1594 = vmatprep.subr.mxu0 0.0
    %1595 = vmatpush1.msra.mxu0 0.0
    %1596 = vmatprep.subr.mxu0 0.0
    %1597 = vmatpush1.msra.mxu0 0.0
    %1598 = vmatprep.subr.mxu0 0.0
    %1599 = vmatpush1.msra.mxu0 0.0
    %1600 = vmatprep.subr.mxu0 0.0
    %1601 = vmatpush1.msra.mxu0 0.0
    %1602 = vmatprep.subr.mxu0 0.0
    %1603 = vmatpush1.msra.mxu0 0.0
    %1604 = vmatprep.subr.mxu0 %v1567
    %1605 = vmatpush1.msra.mxu0 %v1566
    %1606 = vmatprep.subr.mxu0 0.0
    %1607 = vmatpush2.msra.mxu0 0.0
    %1608 = vmatprep.subr.mxu0 0.0
    %1609 = vmatpush2.msra.mxu0 0.0
    %1610 = vmatprep.subr.mxu0 0.0
    %1611 = vmatpush2.msra.mxu0 0.0
    %1612 = vmatprep.subr.mxu0 0.0
    %1613 = vmatpush2.msra.mxu0 0.0
    %1614 = vmatprep.subr.mxu0 0.0
    %1615 = vmatpush2.msra.mxu0 0.0
    %1616 = vmatprep.subr.mxu0 0.0
    %1617 = vmatpush2.msra.mxu0 0.0
    %1618 = vmatprep.subr.mxu0 0.0
    %1619 = vmatpush2.msra.mxu0 0.0
    %1620 = vmatprep.subr.mxu0 0.0
    %1621 = vmatpush2.msra.mxu0 0.0
    %1622 = vmatprep.subr.mxu0 0.0
    %1623 = vmatpush2.msra.mxu0 0.0
    %1624 = vmatprep.subr.mxu0 0.0
    %1625 = vmatpush2.msra.mxu0 0.0
    %1626 = vmatprep.subr.mxu0 0.0
    %1627 = vmatpush2.msra.mxu0 0.0
    %1628 = vmatprep.subr.mxu0 0.0
    %1629 = vmatpush2.msra.mxu0 0.0
    %1630 = vmatprep.subr.mxu0 0.0
    %1631 = vmatpush2.msra.mxu0 0.0
    %1632 = vmatprep.subr.mxu0 0.0
    %1633 = vmatpush2.msra.mxu0 0.0
    %1634 = vmatprep.subr.mxu0 0.0
    %1635 = vmatpush2.msra.mxu0 0.0
    %1636 = vmatprep.subr.mxu0 0.0
    %1637 = vmatpush2.msra.mxu0 0.0
    %1638 = vmatprep.mubr.f32.mxu0 0.0
    %1639 = vmatmul.mubr.f32.gmra.mxu0 %v1572
    %v1640 = vpop.f32.mrf.mxu0
    %v1641 = vadd.f32 0.0, %v1640
    %v1642 = vpop.f32.mrf.mxu0
    %v1643 = vadd.f32 0.0, %v1642
    %1644 = vdwg.mxu0
    %1645 = vmatprep.subr.mxu0 0.0
    %1646 = vmatpush1.msra.mxu0 0.0
    %1647 = vmatprep.subr.mxu0 0.0
    %1648 = vmatpush1.msra.mxu0 0.0
    %1649 = vmatprep.subr.mxu0 0.0
    %1650 = vmatpush1.msra.mxu0 0.0
    %1651 = vmatprep.subr.mxu0 0.0
    %1652 = vmatpush1.msra.mxu0 0.0
    %1653 = vmatprep.subr.mxu0 0.0
    %1654 = vmatpush1.msra.mxu0 0.0
    %1655 = vmatprep.subr.mxu0 0.0
    %1656 = vmatpush1.msra.mxu0 0.0
    %1657 = vmatprep.subr.mxu0 0.0
    %1658 = vmatpush1.msra.mxu0 0.0
    %1659 = vmatprep.subr.mxu0 0.0
    %1660 = vmatpush1.msra.mxu0 0.0
    %1661 = vmatprep.subr.mxu0 0.0
    %1662 = vmatpush1.msra.mxu0 0.0
    %1663 = vmatprep.subr.mxu0 0.0
    %1664 = vmatpush1.msra.mxu0 0.0
    %1665 = vmatprep.subr.mxu0 0.0
    %1666 = vmatpush1.msra.mxu0 0.0
    %1667 = vmatprep.subr.mxu0 0.0
    %1668 = vmatpush1.msra.mxu0 0.0
    %1669 = vmatprep.subr.mxu0 0.0
    %1670 = vmatpush1.msra.mxu0 0.0
    %1671 = vmatprep.subr.mxu0 0.0
    %1672 = vmatpush1.msra.mxu0 0.0
    %1673 = vmatprep.subr.mxu0 0.0
    %1674 = vmatpush1.msra.mxu0 0.0
    %1675 = vmatprep.subr.mxu0 0.0
    %1676 = vmatpush1.msra.mxu0 %v1565
    %1677 = vmatprep.subr.mxu0 0.0
    %1678 = vmatpush2.msra.mxu0 0.0
    %1679 = vmatprep.subr.mxu0 0.0
    %1680 = vmatpush2.msra.mxu0 0.0
    %1681 = vmatprep.subr.mxu0 0.0
    %1682 = vmatpush2.msra.mxu0 0.0
    %1683 = vmatprep.subr.mxu0 0.0
    %1684 = vmatpush2.msra.mxu0 0.0
    %1685 = vmatprep.subr.mxu0 0.0
    %1686 = vmatpush2.msra.mxu0 0.0
    %1687 = vmatprep.subr.mxu0 0.0
    %1688 = vmatpush2.msra.mxu0 0.0
    %1689 = vmatprep.subr.mxu0 0.0
    %1690 = vmatpush2.msra.mxu0 0.0
    %1691 = vmatprep.subr.mxu0 0.0
    %1692 = vmatpush2.msra.mxu0 0.0
    %1693 = vmatprep.subr.mxu0 0.0
    %1694 = vmatpush2.msra.mxu0 0.0
    %1695 = vmatprep.subr.mxu0 0.0
    %1696 = vmatpush2.msra.mxu0 0.0
    %1697 = vmatprep.subr.mxu0 0.0
    %1698 = vmatpush2.msra.mxu0 0.0
    %1699 = vmatprep.subr.mxu0 0.0
    %1700 = vmatpush2.msra.mxu0 0.0
    %1701 = vmatprep.subr.mxu0 0.0
    %1702 = vmatpush2.msra.mxu0 0.0
    %1703 = vmatprep.subr.mxu0 0.0
    %1704 = vmatpush2.msra.mxu0 0.0
    %1705 = vmatprep.subr.mxu0 0.0
    %1706 = vmatpush2.msra.mxu0 0.0
    %1707 = vmatprep.subr.mxu0 0.0
    %1708 = vmatpush2.msra.mxu0 0.0
    %1709 = vmatprep.mubr.f32.mxu0 0.0
    %1710 = vmatmul.mubr.f32.gmra.mxu0 %v1572
    %v1711 = vpop.f32.mrf.mxu0
    %v1712 = vadd.f32 0.0, %v1711
    %v1713 = vpop.f32.mrf.mxu0
    %1714 = vdwg.mxu0
    %v1716 = vsel %vm66, %v1551, 0
    %1718 = vmatprep.subr.mxu0 0.0
    %1719 = vmatpush1.msra.mxu0 0.0
    %1720 = vmatprep.subr.mxu0 0.0
    %1721 = vmatpush1.msra.mxu0 0.0
    %1722 = vmatprep.subr.mxu0 0.0
    %1723 = vmatpush1.msra.mxu0 0.0
    %1724 = vmatprep.subr.mxu0 0.0
    %1725 = vmatpush1.msra.mxu0 0.0
    %1726 = vmatprep.subr.mxu0 0.0
    %1727 = vmatpush1.msra.mxu0 0.0
    %1728 = vmatprep.subr.mxu0 0.0
    %1729 = vmatpush1.msra.mxu0 0.0
    %1730 = vmatprep.subr.mxu0 0.0
    %1731 = vmatpush1.msra.mxu0 0.0
    %1732 = vmatprep.subr.mxu0 0.0
    %1733 = vmatpush1.msra.mxu0 0.0
    %1734 = vmatprep.subr.mxu0 0.0
    %1735 = vmatpush1.msra.mxu0 0.0
    %1736 = vmatprep.subr.mxu0 0.0
    %1737 = vmatpush1.msra.mxu0 0.0
    %1738 = vmatprep.subr.mxu0 0.0
    %1739 = vmatpush1.msra.mxu0 0.0
    %1740 = vmatprep.subr.mxu0 0.0
    %1741 = vmatpush1.msra.mxu0 0.0
    %1742 = vmatprep.subr.mxu0 0.0
    %1743 = vmatpush1.msra.mxu0 0.0
    %1744 = vmatprep.subr.mxu0 0.0
    %1745 = vmatpush1.msra.mxu0 0.0
    %1746 = vmatprep.subr.mxu0 0.0
    %1747 = vmatpush1.msra.mxu0 0.0
    %1748 = vmatprep.subr.mxu0 %v1553
    %1749 = vmatpush1.msra.mxu0 %v1552
    %1750 = vmatprep.subr.mxu0 0.0
    %1751 = vmatpush2.msra.mxu0 0.0
    %1752 = vmatprep.subr.mxu0 0.0
    %1753 = vmatpush2.msra.mxu0 0.0
    %1754 = vmatprep.subr.mxu0 0.0
    %1755 = vmatpush2.msra.mxu0 0.0
    %1756 = vmatprep.subr.mxu0 0.0
    %1757 = vmatpush2.msra.mxu0 0.0
    %1758 = vmatprep.subr.mxu0 0.0
    %1759 = vmatpush2.msra.mxu0 0.0
    %1760 = vmatprep.subr.mxu0 0.0
    %1761 = vmatpush2.msra.mxu0 0.0
    %1762 = vmatprep.subr.mxu0 0.0
    %1763 = vmatpush2.msra.mxu0 0.0
    %1764 = vmatprep.subr.mxu0 0.0
    %1765 = vmatpush2.msra.mxu0 0.0
    %1766 = vmatprep.subr.mxu0 0.0
    %1767 = vmatpush2.msra.mxu0 0.0
    %1768 = vmatprep.subr.mxu0 0.0
    %1769 = vmatpush2.msra.mxu0 0.0
    %1770 = vmatprep.subr.mxu0 0.0
    %1771 = vmatpush2.msra.mxu0 0.0
    %1772 = vmatprep.subr.mxu0 0.0
    %1773 = vmatpush2.msra.mxu0 0.0
    %1774 = vmatprep.subr.mxu0 0.0
    %1775 = vmatpush2.msra.mxu0 0.0
    %1776 = vmatprep.subr.mxu0 0.0
    %1777 = vmatpush2.msra.mxu0 0.0
    %1778 = vmatprep.subr.mxu0 0.0
    %1779 = vmatpush2.msra.mxu0 0.0
    %1780 = vmatprep.subr.mxu0 0.0
    %1781 = vmatpush2.msra.mxu0 0.0
    %1782 = vmatprep.mubr.f32.mxu0 0.0
    %1783 = vmatmul.mubr.f32.gmra.mxu0 %v1716
    %v1784 = vpop.f32.mrf.mxu0
    %v1785 = vadd.f32 %v1641, %v1784
    %v1786 = vpop.f32.mrf.mxu0
    %v1787 = vadd.f32 %v1643, %v1786
    %1788 = vdwg.mxu0
    %1789 = vmatprep.subr.mxu0 0.0
    %1790 = vmatpush1.msra.mxu0 0.0
    %1791 = vmatprep.subr.mxu0 0.0
    %1792 = vmatpush1.msra.mxu0 0.0
    %1793 = vmatprep.subr.mxu0 0.0
    %1794 = vmatpush1.msra.mxu0 0.0
    %1795 = vmatprep.subr.mxu0 0.0
    %1796 = vmatpush1.msra.mxu0 0.0
    %1797 = vmatprep.subr.mxu0 0.0
    %1798 = vmatpush1.msra.mxu0 0.0
    %1799 = vmatprep.subr.mxu0 0.0
    %1800 = vmatpush1.msra.mxu0 0.0
    %1801 = vmatprep.subr.mxu0 0.0
    %1802 = vmatpush1.msra.mxu0 0.0
    %1803 = vmatprep.subr.mxu0 0.0
    %1804 = vmatpush1.msra.mxu0 0.0
    %1805 = vmatprep.subr.mxu0 0.0
    %1806 = vmatpush1.msra.mxu0 0.0
    %1807 = vmatprep.subr.mxu0 0.0
    %1808 = vmatpush1.msra.mxu0 0.0
    %1809 = vmatprep.subr.mxu0 0.0
    %1810 = vmatpush1.msra.mxu0 0.0
    %1811 = vmatprep.subr.mxu0 0.0
    %1812 = vmatpush1.msra.mxu0 0.0
    %1813 = vmatprep.subr.mxu0 0.0
    %1814 = vmatpush1.msra.mxu0 0.0
    %1815 = vmatprep.subr.mxu0 0.0
    %1816 = vmatpush1.msra.mxu0 0.0
    %1817 = vmatprep.subr.mxu0 0.0
    %1818 = vmatpush1.msra.mxu0 0.0
    %1819 = vmatprep.subr.mxu0 0.0
    %1820 = vmatpush1.msra.mxu0 %v1554
    %1821 = vmatprep.subr.mxu0 0.0
    %1822 = vmatpush2.msra.mxu0 0.0
    %1823 = vmatprep.subr.mxu0 0.0
    %1824 = vmatpush2.msra.mxu0 0.0
    %1825 = vmatprep.subr.mxu0 0.0
    %1826 = vmatpush2.msra.mxu0 0.0
    %1827 = vmatprep.subr.mxu0 0.0
    %1828 = vmatpush2.msra.mxu0 0.0
    %1829 = vmatprep.subr.mxu0 0.0
    %1830 = vmatpush2.msra.mxu0 0.0
    %1831 = vmatprep.subr.mxu0 0.0
    %1832 = vmatpush2.msra.mxu0 0.0
    %1833 = vmatprep.subr.mxu0 0.0
    %1834 = vmatpush2.msra.mxu0 0.0
    %1835 = vmatprep.subr.mxu0 0.0
    %1836 = vmatpush2.msra.mxu0 0.0
    %1837 = vmatprep.subr.mxu0 0.0
    %1838 = vmatpush2.msra.mxu0 0.0
    %1839 = vmatprep.subr.mxu0 0.0
    %1840 = vmatpush2.msra.mxu0 0.0
    %1841 = vmatprep.subr.mxu0 0.0
    %1842 = vmatpush2.msra.mxu0 0.0
    %1843 = vmatprep.subr.mxu0 0.0
    %1844 = vmatpush2.msra.mxu0 0.0
    %1845 = vmatprep.subr.mxu0 0.0
    %1846 = vmatpush2.msra.mxu0 0.0
    %1847 = vmatprep.subr.mxu0 0.0
    %1848 = vmatpush2.msra.mxu0 0.0
    %1849 = vmatprep.subr.mxu0 0.0
    %1850 = vmatpush2.msra.mxu0 0.0
    %1851 = vmatprep.subr.mxu0 0.0
    %1852 = vmatpush2.msra.mxu0 0.0
    %1853 = vmatprep.mubr.f32.mxu0 0.0
    %1854 = vmatmul.mubr.f32.gmra.mxu0 %v1716
    %v1855 = vpop.f32.mrf.mxu0
    %v1856 = vadd.f32 %v1712, %v1855
    %v1857 = vpop.f32.mrf.mxu0
    %1858 = vdwg.mxu0
    %s1859 = scalar_lea.vmem %s2, 16
    %v1860 = vld [vmem:[%s1859] sm:$0xff]
    %1861 = vrot.lane.b32.xlu0 %v1552, 126
    %v1862 = vpop.permute.xlu0 %1861
    %1863 = vrot.lane.b32.xlu0 %v1553, 126
    %v1864 = vpop.permute.xlu0 %1863
    %1865 = vrot.lane.b32.xlu0 %v1554, 126
    %v1866 = vpop.permute.xlu0 %1865
    %v1867 = vsel %vm363, %v1862, %v1864
    %v1868 = vsel %vm363, %v1864, %v1866
    %v1873 = vsel %vm66, %v1860, 0
    %1875 = vmatprep.subr.mxu0 0.0
    %1876 = vmatpush1.msra.mxu0 0.0
    %1877 = vmatprep.subr.mxu0 0.0
    %1878 = vmatpush1.msra.mxu0 0.0
    %1879 = vmatprep.subr.mxu0 0.0
    %1880 = vmatpush1.msra.mxu0 0.0
    %1881 = vmatprep.subr.mxu0 0.0
    %1882 = vmatpush1.msra.mxu0 0.0
    %1883 = vmatprep.subr.mxu0 0.0
    %1884 = vmatpush1.msra.mxu0 0.0
    %1885 = vmatprep.subr.mxu0 0.0
    %1886 = vmatpush1.msra.mxu0 0.0
    %1887 = vmatprep.subr.mxu0 0.0
    %1888 = vmatpush1.msra.mxu0 0.0
    %1889 = vmatprep.subr.mxu0 0.0
    %1890 = vmatpush1.msra.mxu0 0.0
    %1891 = vmatprep.subr.mxu0 0.0
    %1892 = vmatpush1.msra.mxu0 0.0
    %1893 = vmatprep.subr.mxu0 0.0
    %1894 = vmatpush1.msra.mxu0 0.0
    %1895 = vmatprep.subr.mxu0 0.0
    %1896 = vmatpush1.msra.mxu0 0.0
    %1897 = vmatprep.subr.mxu0 0.0
    %1898 = vmatpush1.msra.mxu0 0.0
    %1899 = vmatprep.subr.mxu0 0.0
    %1900 = vmatpush1.msra.mxu0 0.0
    %1901 = vmatprep.subr.mxu0 0.0
    %1902 = vmatpush1.msra.mxu0 0.0
    %1903 = vmatprep.subr.mxu0 0.0
    %1904 = vmatpush1.msra.mxu0 0.0
    %1905 = vmatprep.subr.mxu0 %v1868
    %1906 = vmatpush1.msra.mxu0 %v1867
    %1907 = vmatprep.subr.mxu0 0.0
    %1908 = vmatpush2.msra.mxu0 0.0
    %1909 = vmatprep.subr.mxu0 0.0
    %1910 = vmatpush2.msra.mxu0 0.0
    %1911 = vmatprep.subr.mxu0 0.0
    %1912 = vmatpush2.msra.mxu0 0.0
    %1913 = vmatprep.subr.mxu0 0.0
    %1914 = vmatpush2.msra.mxu0 0.0
    %1915 = vmatprep.subr.mxu0 0.0
    %1916 = vmatpush2.msra.mxu0 0.0
    %1917 = vmatprep.subr.mxu0 0.0
    %1918 = vmatpush2.msra.mxu0 0.0
    %1919 = vmatprep.subr.mxu0 0.0
    %1920 = vmatpush2.msra.mxu0 0.0
    %1921 = vmatprep.subr.mxu0 0.0
    %1922 = vmatpush2.msra.mxu0 0.0
    %1923 = vmatprep.subr.mxu0 0.0
    %1924 = vmatpush2.msra.mxu0 0.0
    %1925 = vmatprep.subr.mxu0 0.0
    %1926 = vmatpush2.msra.mxu0 0.0
    %1927 = vmatprep.subr.mxu0 0.0
    %1928 = vmatpush2.msra.mxu0 0.0
    %1929 = vmatprep.subr.mxu0 0.0
    %1930 = vmatpush2.msra.mxu0 0.0
    %1931 = vmatprep.subr.mxu0 0.0
    %1932 = vmatpush2.msra.mxu0 0.0
    %1933 = vmatprep.subr.mxu0 0.0
    %1934 = vmatpush2.msra.mxu0 0.0
    %1935 = vmatprep.subr.mxu0 0.0
    %1936 = vmatpush2.msra.mxu0 0.0
    %1937 = vmatprep.subr.mxu0 0.0
    %1938 = vmatpush2.msra.mxu0 0.0
    %1939 = vmatprep.mubr.f32.mxu0 0.0
    %1940 = vmatmul.mubr.f32.gmra.mxu0 %v1873
    %v1941 = vpop.f32.mrf.mxu0
    %v1942 = vadd.f32 0.0, %v1941
    %v1943 = vpop.f32.mrf.mxu0
    %v1944 = vadd.f32 0.0, %v1943
    %1945 = vdwg.mxu0
    %1946 = vmatprep.subr.mxu0 0.0
    %1947 = vmatpush1.msra.mxu0 0.0
    %1948 = vmatprep.subr.mxu0 0.0
    %1949 = vmatpush1.msra.mxu0 0.0
    %1950 = vmatprep.subr.mxu0 0.0
    %1951 = vmatpush1.msra.mxu0 0.0
    %1952 = vmatprep.subr.mxu0 0.0
    %1953 = vmatpush1.msra.mxu0 0.0
    %1954 = vmatprep.subr.mxu0 0.0
    %1955 = vmatpush1.msra.mxu0 0.0
    %1956 = vmatprep.subr.mxu0 0.0
    %1957 = vmatpush1.msra.mxu0 0.0
    %1958 = vmatprep.subr.mxu0 0.0
    %1959 = vmatpush1.msra.mxu0 0.0
    %1960 = vmatprep.subr.mxu0 0.0
    %1961 = vmatpush1.msra.mxu0 0.0
    %1962 = vmatprep.subr.mxu0 0.0
    %1963 = vmatpush1.msra.mxu0 0.0
    %1964 = vmatprep.subr.mxu0 0.0
    %1965 = vmatpush1.msra.mxu0 0.0
    %1966 = vmatprep.subr.mxu0 0.0
    %1967 = vmatpush1.msra.mxu0 0.0
    %1968 = vmatprep.subr.mxu0 0.0
    %1969 = vmatpush1.msra.mxu0 0.0
    %1970 = vmatprep.subr.mxu0 0.0
    %1971 = vmatpush1.msra.mxu0 0.0
    %1972 = vmatprep.subr.mxu0 0.0
    %1973 = vmatpush1.msra.mxu0 0.0
    %1974 = vmatprep.subr.mxu0 0.0
    %1975 = vmatpush1.msra.mxu0 0.0
    %1976 = vmatprep.subr.mxu0 0.0
    %1977 = vmatpush1.msra.mxu0 %v1866
    %1978 = vmatprep.subr.mxu0 0.0
    %1979 = vmatpush2.msra.mxu0 0.0
    %1980 = vmatprep.subr.mxu0 0.0
    %1981 = vmatpush2.msra.mxu0 0.0
    %1982 = vmatprep.subr.mxu0 0.0
    %1983 = vmatpush2.msra.mxu0 0.0
    %1984 = vmatprep.subr.mxu0 0.0
    %1985 = vmatpush2.msra.mxu0 0.0
    %1986 = vmatprep.subr.mxu0 0.0
    %1987 = vmatpush2.msra.mxu0 0.0
    %1988 = vmatprep.subr.mxu0 0.0
    %1989 = vmatpush2.msra.mxu0 0.0
    %1990 = vmatprep.subr.mxu0 0.0
    %1991 = vmatpush2.msra.mxu0 0.0
    %1992 = vmatprep.subr.mxu0 0.0
    %1993 = vmatpush2.msra.mxu0 0.0
    %1994 = vmatprep.subr.mxu0 0.0
    %1995 = vmatpush2.msra.mxu0 0.0
    %1996 = vmatprep.subr.mxu0 0.0
    %1997 = vmatpush2.msra.mxu0 0.0
    %1998 = vmatprep.subr.mxu0 0.0
    %1999 = vmatpush2.msra.mxu0 0.0
    %2000 = vmatprep.subr.mxu0 0.0
    %2001 = vmatpush2.msra.mxu0 0.0
    %2002 = vmatprep.subr.mxu0 0.0
    %2003 = vmatpush2.msra.mxu0 0.0
    %2004 = vmatprep.subr.mxu0 0.0
    %2005 = vmatpush2.msra.mxu0 0.0
    %2006 = vmatprep.subr.mxu0 0.0
    %2007 = vmatpush2.msra.mxu0 0.0
    %2008 = vmatprep.subr.mxu0 0.0
    %2009 = vmatpush2.msra.mxu0 0.0
    %2010 = vmatprep.mubr.f32.mxu0 0.0
    %2011 = vmatmul.mubr.f32.gmra.mxu0 %v1873
    %v2012 = vpop.f32.mrf.mxu0
    %v2013 = vadd.f32 0.0, %v2012
    %v2014 = vpop.f32.mrf.mxu0
    %2015 = vdwg.mxu0
    %v2016 = vadd.f32 %v1785, %v1942
    %v2017 = vadd.f32 %v1787, %v1944
    %v2018 = vadd.f32 %v1856, %v2013
    %s2019 = scalar_lea.vmem %s2, 24
    %v2020 = vld [vmem:[%s2019] sm:$0xff]
    %2021 = vrot.lane.b32.xlu0 %v1552, 110
    %v2022 = vpop.permute.xlu0 %2021
    %2023 = vrot.lane.b32.xlu0 %v1553, 110
    %v2024 = vpop.permute.xlu0 %2023
    %2025 = vrot.lane.b32.xlu0 %v1554, 110
    %v2026 = vpop.permute.xlu0 %2025
    %v2027 = vsel %vm524, %v2022, %v2024
    %v2028 = vsel %vm524, %v2024, %v2026
    %v2033 = vsel %vm66, %v2020, 0
    %2035 = vmatprep.subr.mxu0 0.0
    %2036 = vmatpush1.msra.mxu0 0.0
    %2037 = vmatprep.subr.mxu0 0.0
    %2038 = vmatpush1.msra.mxu0 0.0
    %2039 = vmatprep.subr.mxu0 0.0
    %2040 = vmatpush1.msra.mxu0 0.0
    %2041 = vmatprep.subr.mxu0 0.0
    %2042 = vmatpush1.msra.mxu0 0.0
    %2043 = vmatprep.subr.mxu0 0.0
    %2044 = vmatpush1.msra.mxu0 0.0
    %2045 = vmatprep.subr.mxu0 0.0
    %2046 = vmatpush1.msra.mxu0 0.0
    %2047 = vmatprep.subr.mxu0 0.0
    %2048 = vmatpush1.msra.mxu0 0.0
    %2049 = vmatprep.subr.mxu0 0.0
    %2050 = vmatpush1.msra.mxu0 0.0
    %2051 = vmatprep.subr.mxu0 0.0
    %2052 = vmatpush1.msra.mxu0 0.0
    %2053 = vmatprep.subr.mxu0 0.0
    %2054 = vmatpush1.msra.mxu0 0.0
    %2055 = vmatprep.subr.mxu0 0.0
    %2056 = vmatpush1.msra.mxu0 0.0
    %2057 = vmatprep.subr.mxu0 0.0
    %2058 = vmatpush1.msra.mxu0 0.0
    %2059 = vmatprep.subr.mxu0 0.0
    %2060 = vmatpush1.msra.mxu0 0.0
    %2061 = vmatprep.subr.mxu0 0.0
    %2062 = vmatpush1.msra.mxu0 0.0
    %2063 = vmatprep.subr.mxu0 0.0
    %2064 = vmatpush1.msra.mxu0 0.0
    %2065 = vmatprep.subr.mxu0 %v2028
    %2066 = vmatpush1.msra.mxu0 %v2027
    %2067 = vmatprep.subr.mxu0 0.0
    %2068 = vmatpush2.msra.mxu0 0.0
    %2069 = vmatprep.subr.mxu0 0.0
    %2070 = vmatpush2.msra.mxu0 0.0
    %2071 = vmatprep.subr.mxu0 0.0
    %2072 = vmatpush2.msra.mxu0 0.0
    %2073 = vmatprep.subr.mxu0 0.0
    %2074 = vmatpush2.msra.mxu0 0.0
    %2075 = vmatprep.subr.mxu0 0.0
    %2076 = vmatpush2.msra.mxu0 0.0
    %2077 = vmatprep.subr.mxu0 0.0
    %2078 = vmatpush2.msra.mxu0 0.0
    %2079 = vmatprep.subr.mxu0 0.0
    %2080 = vmatpush2.msra.mxu0 0.0
    %2081 = vmatprep.subr.mxu0 0.0
    %2082 = vmatpush2.msra.mxu0 0.0
    %2083 = vmatprep.subr.mxu0 0.0
    %2084 = vmatpush2.msra.mxu0 0.0
    %2085 = vmatprep.subr.mxu0 0.0
    %2086 = vmatpush2.msra.mxu0 0.0
    %2087 = vmatprep.subr.mxu0 0.0
    %2088 = vmatpush2.msra.mxu0 0.0
    %2089 = vmatprep.subr.mxu0 0.0
    %2090 = vmatpush2.msra.mxu0 0.0
    %2091 = vmatprep.subr.mxu0 0.0
    %2092 = vmatpush2.msra.mxu0 0.0
    %2093 = vmatprep.subr.mxu0 0.0
    %2094 = vmatpush2.msra.mxu0 0.0
    %2095 = vmatprep.subr.mxu0 0.0
    %2096 = vmatpush2.msra.mxu0 0.0
    %2097 = vmatprep.subr.mxu0 0.0
    %2098 = vmatpush2.msra.mxu0 0.0
    %2099 = vmatprep.mubr.f32.mxu0 0.0
    %2100 = vmatmul.mubr.f32.gmra.mxu0 %v2033
    %v2101 = vpop.f32.mrf.mxu0
    %v2102 = vadd.f32 0.0, %v2101
    %v2103 = vpop.f32.mrf.mxu0
    %v2104 = vadd.f32 0.0, %v2103
    %2105 = vdwg.mxu0
    %2106 = vmatprep.subr.mxu0 0.0
    %2107 = vmatpush1.msra.mxu0 0.0
    %2108 = vmatprep.subr.mxu0 0.0
    %2109 = vmatpush1.msra.mxu0 0.0
    %2110 = vmatprep.subr.mxu0 0.0
    %2111 = vmatpush1.msra.mxu0 0.0
    %2112 = vmatprep.subr.mxu0 0.0
    %2113 = vmatpush1.msra.mxu0 0.0
    %2114 = vmatprep.subr.mxu0 0.0
    %2115 = vmatpush1.msra.mxu0 0.0
    %2116 = vmatprep.subr.mxu0 0.0
    %2117 = vmatpush1.msra.mxu0 0.0
    %2118 = vmatprep.subr.mxu0 0.0
    %2119 = vmatpush1.msra.mxu0 0.0
    %2120 = vmatprep.subr.mxu0 0.0
    %2121 = vmatpush1.msra.mxu0 0.0
    %2122 = vmatprep.subr.mxu0 0.0
    %2123 = vmatpush1.msra.mxu0 0.0
    %2124 = vmatprep.subr.mxu0 0.0
    %2125 = vmatpush1.msra.mxu0 0.0
    %2126 = vmatprep.subr.mxu0 0.0
    %2127 = vmatpush1.msra.mxu0 0.0
    %2128 = vmatprep.subr.mxu0 0.0
    %2129 = vmatpush1.msra.mxu0 0.0
    %2130 = vmatprep.subr.mxu0 0.0
    %2131 = vmatpush1.msra.mxu0 0.0
    %2132 = vmatprep.subr.mxu0 0.0
    %2133 = vmatpush1.msra.mxu0 0.0
    %2134 = vmatprep.subr.mxu0 0.0
    %2135 = vmatpush1.msra.mxu0 0.0
    %2136 = vmatprep.subr.mxu0 0.0
    %2137 = vmatpush1.msra.mxu0 %v2026
    %2138 = vmatprep.subr.mxu0 0.0
    %2139 = vmatpush2.msra.mxu0 0.0
    %2140 = vmatprep.subr.mxu0 0.0
    %2141 = vmatpush2.msra.mxu0 0.0
    %2142 = vmatprep.subr.mxu0 0.0
    %2143 = vmatpush2.msra.mxu0 0.0
    %2144 = vmatprep.subr.mxu0 0.0
    %2145 = vmatpush2.msra.mxu0 0.0
    %2146 = vmatprep.subr.mxu0 0.0
    %2147 = vmatpush2.msra.mxu0 0.0
    %2148 = vmatprep.subr.mxu0 0.0
    %2149 = vmatpush2.msra.mxu0 0.0
    %2150 = vmatprep.subr.mxu0 0.0
    %2151 = vmatpush2.msra.mxu0 0.0
    %2152 = vmatprep.subr.mxu0 0.0
    %2153 = vmatpush2.msra.mxu0 0.0
    %2154 = vmatprep.subr.mxu0 0.0
    %2155 = vmatpush2.msra.mxu0 0.0
    %2156 = vmatprep.subr.mxu0 0.0
    %2157 = vmatpush2.msra.mxu0 0.0
    %2158 = vmatprep.subr.mxu0 0.0
    %2159 = vmatpush2.msra.mxu0 0.0
    %2160 = vmatprep.subr.mxu0 0.0
    %2161 = vmatpush2.msra.mxu0 0.0
    %2162 = vmatprep.subr.mxu0 0.0
    %2163 = vmatpush2.msra.mxu0 0.0
    %2164 = vmatprep.subr.mxu0 0.0
    %2165 = vmatpush2.msra.mxu0 0.0
    %2166 = vmatprep.subr.mxu0 0.0
    %2167 = vmatpush2.msra.mxu0 0.0
    %2168 = vmatprep.subr.mxu0 0.0
    %2169 = vmatpush2.msra.mxu0 0.0
    %2170 = vmatprep.mubr.f32.mxu0 0.0
    %2171 = vmatmul.mubr.f32.gmra.mxu0 %v2033
    %v2172 = vpop.f32.mrf.mxu0
    %v2173 = vadd.f32 0.0, %v2172
    %v2174 = vpop.f32.mrf.mxu0
    %2175 = vdwg.mxu0
    %v2176 = vadd.f32 %v2016, %v2102
    %v2177 = vadd.f32 %v2017, %v2104
    %v2178 = vadd.f32 %v2018, %v2173
    %s2179 = scalar_lea.vmem %s2, 32
    %v2180 = vld [vmem:[%s2179] sm:$0xff]
    %2181 = vrot.lane.b32.xlu0 %v1552, 109
    %v2182 = vpop.permute.xlu0 %2181
    %2183 = vrot.lane.b32.xlu0 %v1553, 109
    %v2184 = vpop.permute.xlu0 %2183
    %2185 = vrot.lane.b32.xlu0 %v1554, 109
    %v2186 = vpop.permute.xlu0 %2185
    %v2187 = vsel %vm685, %v2182, %v2184
    %v2188 = vsel %vm685, %v2184, %v2186
    %v2193 = vsel %vm66, %v2180, 0
    %2195 = vmatprep.subr.mxu0 0.0
    %2196 = vmatpush1.msra.mxu0 0.0
    %2197 = vmatprep.subr.mxu0 0.0
    %2198 = vmatpush1.msra.mxu0 0.0
    %2199 = vmatprep.subr.mxu0 0.0
    %2200 = vmatpush1.msra.mxu0 0.0
    %2201 = vmatprep.subr.mxu0 0.0
    %2202 = vmatpush1.msra.mxu0 0.0
    %2203 = vmatprep.subr.mxu0 0.0
    %2204 = vmatpush1.msra.mxu0 0.0
    %2205 = vmatprep.subr.mxu0 0.0
    %2206 = vmatpush1.msra.mxu0 0.0
    %2207 = vmatprep.subr.mxu0 0.0
    %2208 = vmatpush1.msra.mxu0 0.0
    %2209 = vmatprep.subr.mxu0 0.0
    %2210 = vmatpush1.msra.mxu0 0.0
    %2211 = vmatprep.subr.mxu0 0.0
    %2212 = vmatpush1.msra.mxu0 0.0
    %2213 = vmatprep.subr.mxu0 0.0
    %2214 = vmatpush1.msra.mxu0 0.0
    %2215 = vmatprep.subr.mxu0 0.0
    %2216 = vmatpush1.msra.mxu0 0.0
    %2217 = vmatprep.subr.mxu0 0.0
    %2218 = vmatpush1.msra.mxu0 0.0
    %2219 = vmatprep.subr.mxu0 0.0
    %2220 = vmatpush1.msra.mxu0 0.0
    %2221 = vmatprep.subr.mxu0 0.0
    %2222 = vmatpush1.msra.mxu0 0.0
    %2223 = vmatprep.subr.mxu0 0.0
    %2224 = vmatpush1.msra.mxu0 0.0
    %2225 = vmatprep.subr.mxu0 %v2188
    %2226 = vmatpush1.msra.mxu0 %v2187
    %2227 = vmatprep.subr.mxu0 0.0
    %2228 = vmatpush2.msra.mxu0 0.0
    %2229 = vmatprep.subr.mxu0 0.0
    %2230 = vmatpush2.msra.mxu0 0.0
    %2231 = vmatprep.subr.mxu0 0.0
    %2232 = vmatpush2.msra.mxu0 0.0
    %2233 = vmatprep.subr.mxu0 0.0
    %2234 = vmatpush2.msra.mxu0 0.0
    %2235 = vmatprep.subr.mxu0 0.0
    %2236 = vmatpush2.msra.mxu0 0.0
    %2237 = vmatprep.subr.mxu0 0.0
    %2238 = vmatpush2.msra.mxu0 0.0
    %2239 = vmatprep.subr.mxu0 0.0
    %2240 = vmatpush2.msra.mxu0 0.0
    %2241 = vmatprep.subr.mxu0 0.0
    %2242 = vmatpush2.msra.mxu0 0.0
    %2243 = vmatprep.subr.mxu0 0.0
    %2244 = vmatpush2.msra.mxu0 0.0
    %2245 = vmatprep.subr.mxu0 0.0
    %2246 = vmatpush2.msra.mxu0 0.0
    %2247 = vmatprep.subr.mxu0 0.0
    %2248 = vmatpush2.msra.mxu0 0.0
    %2249 = vmatprep.subr.mxu0 0.0
    %2250 = vmatpush2.msra.mxu0 0.0
    %2251 = vmatprep.subr.mxu0 0.0
    %2252 = vmatpush2.msra.mxu0 0.0
    %2253 = vmatprep.subr.mxu0 0.0
    %2254 = vmatpush2.msra.mxu0 0.0
    %2255 = vmatprep.subr.mxu0 0.0
    %2256 = vmatpush2.msra.mxu0 0.0
    %2257 = vmatprep.subr.mxu0 0.0
    %2258 = vmatpush2.msra.mxu0 0.0
    %2259 = vmatprep.mubr.f32.mxu0 0.0
    %2260 = vmatmul.mubr.f32.gmra.mxu0 %v2193
    %v2261 = vpop.f32.mrf.mxu0
    %v2262 = vadd.f32 0.0, %v2261
    %v2263 = vpop.f32.mrf.mxu0
    %v2264 = vadd.f32 0.0, %v2263
    %2265 = vdwg.mxu0
    %2266 = vmatprep.subr.mxu0 0.0
    %2267 = vmatpush1.msra.mxu0 0.0
    %2268 = vmatprep.subr.mxu0 0.0
    %2269 = vmatpush1.msra.mxu0 0.0
    %2270 = vmatprep.subr.mxu0 0.0
    %2271 = vmatpush1.msra.mxu0 0.0
    %2272 = vmatprep.subr.mxu0 0.0
    %2273 = vmatpush1.msra.mxu0 0.0
    %2274 = vmatprep.subr.mxu0 0.0
    %2275 = vmatpush1.msra.mxu0 0.0
    %2276 = vmatprep.subr.mxu0 0.0
    %2277 = vmatpush1.msra.mxu0 0.0
    %2278 = vmatprep.subr.mxu0 0.0
    %2279 = vmatpush1.msra.mxu0 0.0
    %2280 = vmatprep.subr.mxu0 0.0
    %2281 = vmatpush1.msra.mxu0 0.0
    %2282 = vmatprep.subr.mxu0 0.0
    %2283 = vmatpush1.msra.mxu0 0.0
    %2284 = vmatprep.subr.mxu0 0.0
    %2285 = vmatpush1.msra.mxu0 0.0
    %2286 = vmatprep.subr.mxu0 0.0
    %2287 = vmatpush1.msra.mxu0 0.0
    %2288 = vmatprep.subr.mxu0 0.0
    %2289 = vmatpush1.msra.mxu0 0.0
    %2290 = vmatprep.subr.mxu0 0.0
    %2291 = vmatpush1.msra.mxu0 0.0
    %2292 = vmatprep.subr.mxu0 0.0
    %2293 = vmatpush1.msra.mxu0 0.0
    %2294 = vmatprep.subr.mxu0 0.0
    %2295 = vmatpush1.msra.mxu0 0.0
    %2296 = vmatprep.subr.mxu0 0.0
    %2297 = vmatpush1.msra.mxu0 %v2186
    %2298 = vmatprep.subr.mxu0 0.0
    %2299 = vmatpush2.msra.mxu0 0.0
    %2300 = vmatprep.subr.mxu0 0.0
    %2301 = vmatpush2.msra.mxu0 0.0
    %2302 = vmatprep.subr.mxu0 0.0
    %2303 = vmatpush2.msra.mxu0 0.0
    %2304 = vmatprep.subr.mxu0 0.0
    %2305 = vmatpush2.msra.mxu0 0.0
    %2306 = vmatprep.subr.mxu0 0.0
    %2307 = vmatpush2.msra.mxu0 0.0
    %2308 = vmatprep.subr.mxu0 0.0
    %2309 = vmatpush2.msra.mxu0 0.0
    %2310 = vmatprep.subr.mxu0 0.0
    %2311 = vmatpush2.msra.mxu0 0.0
    %2312 = vmatprep.subr.mxu0 0.0
    %2313 = vmatpush2.msra.mxu0 0.0
    %2314 = vmatprep.subr.mxu0 0.0
    %2315 = vmatpush2.msra.mxu0 0.0
    %2316 = vmatprep.subr.mxu0 0.0
    %2317 = vmatpush2.msra.mxu0 0.0
    %2318 = vmatprep.subr.mxu0 0.0
    %2319 = vmatpush2.msra.mxu0 0.0
    %2320 = vmatprep.subr.mxu0 0.0
    %2321 = vmatpush2.msra.mxu0 0.0
    %2322 = vmatprep.subr.mxu0 0.0
    %2323 = vmatpush2.msra.mxu0 0.0
    %2324 = vmatprep.subr.mxu0 0.0
    %2325 = vmatpush2.msra.mxu0 0.0
    %2326 = vmatprep.subr.mxu0 0.0
    %2327 = vmatpush2.msra.mxu0 0.0
    %2328 = vmatprep.subr.mxu0 0.0
    %2329 = vmatpush2.msra.mxu0 0.0
    %2330 = vmatprep.mubr.f32.mxu0 0.0
    %2331 = vmatmul.mubr.f32.gmra.mxu0 %v2193
    %v2332 = vpop.f32.mrf.mxu0
    %v2333 = vadd.f32 0.0, %v2332
    %v2334 = vpop.f32.mrf.mxu0
    %2335 = vdwg.mxu0
    %v2336 = vadd.f32 %v2176, %v2262
    %v2337 = vadd.f32 %v2177, %v2264
    %v2338 = vadd.f32 %v2178, %v2333
    %s2339 = scalar_lea.vmem %s2, 40
    %v2340 = vld [vmem:[%s2339] sm:$0xff]
    %2341 = vrot.lane.b32.xlu0 %v1552, 108
    %v2342 = vpop.permute.xlu0 %2341
    %2343 = vrot.lane.b32.xlu0 %v1553, 108
    %v2344 = vpop.permute.xlu0 %2343
    %2345 = vrot.lane.b32.xlu0 %v1554, 108
    %v2346 = vpop.permute.xlu0 %2345
    %v2347 = vsel %vm846, %v2342, %v2344
    %v2348 = vsel %vm846, %v2344, %v2346
    %v2353 = vsel %vm66, %v2340, 0
    %2355 = vmatprep.subr.mxu0 0.0
    %2356 = vmatpush1.msra.mxu0 0.0
    %2357 = vmatprep.subr.mxu0 0.0
    %2358 = vmatpush1.msra.mxu0 0.0
    %2359 = vmatprep.subr.mxu0 0.0
    %2360 = vmatpush1.msra.mxu0 0.0
    %2361 = vmatprep.subr.mxu0 0.0
    %2362 = vmatpush1.msra.mxu0 0.0
    %2363 = vmatprep.subr.mxu0 0.0
    %2364 = vmatpush1.msra.mxu0 0.0
    %2365 = vmatprep.subr.mxu0 0.0
    %2366 = vmatpush1.msra.mxu0 0.0
    %2367 = vmatprep.subr.mxu0 0.0
    %2368 = vmatpush1.msra.mxu0 0.0
    %2369 = vmatprep.subr.mxu0 0.0
    %2370 = vmatpush1.msra.mxu0 0.0
    %2371 = vmatprep.subr.mxu0 0.0
    %2372 = vmatpush1.msra.mxu0 0.0
    %2373 = vmatprep.subr.mxu0 0.0
    %2374 = vmatpush1.msra.mxu0 0.0
    %2375 = vmatprep.subr.mxu0 0.0
    %2376 = vmatpush1.msra.mxu0 0.0
    %2377 = vmatprep.subr.mxu0 0.0
    %2378 = vmatpush1.msra.mxu0 0.0
    %2379 = vmatprep.subr.mxu0 0.0
    %2380 = vmatpush1.msra.mxu0 0.0
    %2381 = vmatprep.subr.mxu0 0.0
    %2382 = vmatpush1.msra.mxu0 0.0
    %2383 = vmatprep.subr.mxu0 0.0
    %2384 = vmatpush1.msra.mxu0 0.0
    %2385 = vmatprep.subr.mxu0 %v2348
    %2386 = vmatpush1.msra.mxu0 %v2347
    %2387 = vmatprep.subr.mxu0 0.0
    %2388 = vmatpush2.msra.mxu0 0.0
    %2389 = vmatprep.subr.mxu0 0.0
    %2390 = vmatpush2.msra.mxu0 0.0
    %2391 = vmatprep.subr.mxu0 0.0
    %2392 = vmatpush2.msra.mxu0 0.0
    %2393 = vmatprep.subr.mxu0 0.0
    %2394 = vmatpush2.msra.mxu0 0.0
    %2395 = vmatprep.subr.mxu0 0.0
    %2396 = vmatpush2.msra.mxu0 0.0
    %2397 = vmatprep.subr.mxu0 0.0
    %2398 = vmatpush2.msra.mxu0 0.0
    %2399 = vmatprep.subr.mxu0 0.0
    %2400 = vmatpush2.msra.mxu0 0.0
    %2401 = vmatprep.subr.mxu0 0.0
    %2402 = vmatpush2.msra.mxu0 0.0
    %2403 = vmatprep.subr.mxu0 0.0
    %2404 = vmatpush2.msra.mxu0 0.0
    %2405 = vmatprep.subr.mxu0 0.0
    %2406 = vmatpush2.msra.mxu0 0.0
    %2407 = vmatprep.subr.mxu0 0.0
    %2408 = vmatpush2.msra.mxu0 0.0
    %2409 = vmatprep.subr.mxu0 0.0
    %2410 = vmatpush2.msra.mxu0 0.0
    %2411 = vmatprep.subr.mxu0 0.0
    %2412 = vmatpush2.msra.mxu0 0.0
    %2413 = vmatprep.subr.mxu0 0.0
    %2414 = vmatpush2.msra.mxu0 0.0
    %2415 = vmatprep.subr.mxu0 0.0
    %2416 = vmatpush2.msra.mxu0 0.0
    %2417 = vmatprep.subr.mxu0 0.0
    %2418 = vmatpush2.msra.mxu0 0.0
    %2419 = vmatprep.mubr.f32.mxu0 0.0
    %2420 = vmatmul.mubr.f32.gmra.mxu0 %v2353
    %v2421 = vpop.f32.mrf.mxu0
    %v2422 = vadd.f32 0.0, %v2421
    %v2423 = vpop.f32.mrf.mxu0
    %v2424 = vadd.f32 0.0, %v2423
    %2425 = vdwg.mxu0
    %2426 = vmatprep.subr.mxu0 0.0
    %2427 = vmatpush1.msra.mxu0 0.0
    %2428 = vmatprep.subr.mxu0 0.0
    %2429 = vmatpush1.msra.mxu0 0.0
    %2430 = vmatprep.subr.mxu0 0.0
    %2431 = vmatpush1.msra.mxu0 0.0
    %2432 = vmatprep.subr.mxu0 0.0
    %2433 = vmatpush1.msra.mxu0 0.0
    %2434 = vmatprep.subr.mxu0 0.0
    %2435 = vmatpush1.msra.mxu0 0.0
    %2436 = vmatprep.subr.mxu0 0.0
    %2437 = vmatpush1.msra.mxu0 0.0
    %2438 = vmatprep.subr.mxu0 0.0
    %2439 = vmatpush1.msra.mxu0 0.0
    %2440 = vmatprep.subr.mxu0 0.0
    %2441 = vmatpush1.msra.mxu0 0.0
    %2442 = vmatprep.subr.mxu0 0.0
    %2443 = vmatpush1.msra.mxu0 0.0
    %2444 = vmatprep.subr.mxu0 0.0
    %2445 = vmatpush1.msra.mxu0 0.0
    %2446 = vmatprep.subr.mxu0 0.0
    %2447 = vmatpush1.msra.mxu0 0.0
    %2448 = vmatprep.subr.mxu0 0.0
    %2449 = vmatpush1.msra.mxu0 0.0
    %2450 = vmatprep.subr.mxu0 0.0
    %2451 = vmatpush1.msra.mxu0 0.0
    %2452 = vmatprep.subr.mxu0 0.0
    %2453 = vmatpush1.msra.mxu0 0.0
    %2454 = vmatprep.subr.mxu0 0.0
    %2455 = vmatpush1.msra.mxu0 0.0
    %2456 = vmatprep.subr.mxu0 0.0
    %2457 = vmatpush1.msra.mxu0 %v2346
    %2458 = vmatprep.subr.mxu0 0.0
    %2459 = vmatpush2.msra.mxu0 0.0
    %2460 = vmatprep.subr.mxu0 0.0
    %2461 = vmatpush2.msra.mxu0 0.0
    %2462 = vmatprep.subr.mxu0 0.0
    %2463 = vmatpush2.msra.mxu0 0.0
    %2464 = vmatprep.subr.mxu0 0.0
    %2465 = vmatpush2.msra.mxu0 0.0
    %2466 = vmatprep.subr.mxu0 0.0
    %2467 = vmatpush2.msra.mxu0 0.0
    %2468 = vmatprep.subr.mxu0 0.0
    %2469 = vmatpush2.msra.mxu0 0.0
    %2470 = vmatprep.subr.mxu0 0.0
    %2471 = vmatpush2.msra.mxu0 0.0
    %2472 = vmatprep.subr.mxu0 0.0
    %2473 = vmatpush2.msra.mxu0 0.0
    %2474 = vmatprep.subr.mxu0 0.0
    %2475 = vmatpush2.msra.mxu0 0.0
    %2476 = vmatprep.subr.mxu0 0.0
    %2477 = vmatpush2.msra.mxu0 0.0
    %2478 = vmatprep.subr.mxu0 0.0
    %2479 = vmatpush2.msra.mxu0 0.0
    %2480 = vmatprep.subr.mxu0 0.0
    %2481 = vmatpush2.msra.mxu0 0.0
    %2482 = vmatprep.subr.mxu0 0.0
    %2483 = vmatpush2.msra.mxu0 0.0
    %2484 = vmatprep.subr.mxu0 0.0
    %2485 = vmatpush2.msra.mxu0 0.0
    %2486 = vmatprep.subr.mxu0 0.0
    %2487 = vmatpush2.msra.mxu0 0.0
    %2488 = vmatprep.subr.mxu0 0.0
    %2489 = vmatpush2.msra.mxu0 0.0
    %2490 = vmatprep.mubr.f32.mxu0 0.0
    %2491 = vmatmul.mubr.f32.gmra.mxu0 %v2353
    %v2492 = vpop.f32.mrf.mxu0
    %v2493 = vadd.f32 0.0, %v2492
    %v2494 = vpop.f32.mrf.mxu0
    %2495 = vdwg.mxu0
    %v2496 = vadd.f32 %v2336, %v2422
    %v2497 = vadd.f32 %v2337, %v2424
    %v2498 = vadd.f32 %v2338, %v2493
    %s2499 = scalar_lea.vmem %s2, 48
    %v2500 = vld [vmem:[%s2499] sm:$0xff]
    %2501 = vrot.lane.b32.xlu0 %v1552, 92
    %v2502 = vpop.permute.xlu0 %2501
    %2503 = vrot.lane.b32.xlu0 %v1553, 92
    %v2504 = vpop.permute.xlu0 %2503
    %2505 = vrot.lane.b32.xlu0 %v1554, 92
    %v2506 = vpop.permute.xlu0 %2505
    %v2507 = vsel %vm1007, %v2502, %v2504
    %v2508 = vsel %vm1007, %v2504, %v2506
    %v2513 = vsel %vm66, %v2500, 0
    %2515 = vmatprep.subr.mxu0 0.0
    %2516 = vmatpush1.msra.mxu0 0.0
    %2517 = vmatprep.subr.mxu0 0.0
    %2518 = vmatpush1.msra.mxu0 0.0
    %2519 = vmatprep.subr.mxu0 0.0
    %2520 = vmatpush1.msra.mxu0 0.0
    %2521 = vmatprep.subr.mxu0 0.0
    %2522 = vmatpush1.msra.mxu0 0.0
    %2523 = vmatprep.subr.mxu0 0.0
    %2524 = vmatpush1.msra.mxu0 0.0
    %2525 = vmatprep.subr.mxu0 0.0
    %2526 = vmatpush1.msra.mxu0 0.0
    %2527 = vmatprep.subr.mxu0 0.0
    %2528 = vmatpush1.msra.mxu0 0.0
    %2529 = vmatprep.subr.mxu0 0.0
    %2530 = vmatpush1.msra.mxu0 0.0
    %2531 = vmatprep.subr.mxu0 0.0
    %2532 = vmatpush1.msra.mxu0 0.0
    %2533 = vmatprep.subr.mxu0 0.0
    %2534 = vmatpush1.msra.mxu0 0.0
    %2535 = vmatprep.subr.mxu0 0.0
    %2536 = vmatpush1.msra.mxu0 0.0
    %2537 = vmatprep.subr.mxu0 0.0
    %2538 = vmatpush1.msra.mxu0 0.0
    %2539 = vmatprep.subr.mxu0 0.0
    %2540 = vmatpush1.msra.mxu0 0.0
    %2541 = vmatprep.subr.mxu0 0.0
    %2542 = vmatpush1.msra.mxu0 0.0
    %2543 = vmatprep.subr.mxu0 0.0
    %2544 = vmatpush1.msra.mxu0 0.0
    %2545 = vmatprep.subr.mxu0 %v2508
    %2546 = vmatpush1.msra.mxu0 %v2507
    %2547 = vmatprep.subr.mxu0 0.0
    %2548 = vmatpush2.msra.mxu0 0.0
    %2549 = vmatprep.subr.mxu0 0.0
    %2550 = vmatpush2.msra.mxu0 0.0
    %2551 = vmatprep.subr.mxu0 0.0
    %2552 = vmatpush2.msra.mxu0 0.0
    %2553 = vmatprep.subr.mxu0 0.0
    %2554 = vmatpush2.msra.mxu0 0.0
    %2555 = vmatprep.subr.mxu0 0.0
    %2556 = vmatpush2.msra.mxu0 0.0
    %2557 = vmatprep.subr.mxu0 0.0
    %2558 = vmatpush2.msra.mxu0 0.0
    %2559 = vmatprep.subr.mxu0 0.0
    %2560 = vmatpush2.msra.mxu0 0.0
    %2561 = vmatprep.subr.mxu0 0.0
    %2562 = vmatpush2.msra.mxu0 0.0
    %2563 = vmatprep.subr.mxu0 0.0
    %2564 = vmatpush2.msra.mxu0 0.0
    %2565 = vmatprep.subr.mxu0 0.0
    %2566 = vmatpush2.msra.mxu0 0.0
    %2567 = vmatprep.subr.mxu0 0.0
    %2568 = vmatpush2.msra.mxu0 0.0
    %2569 = vmatprep.subr.mxu0 0.0
    %2570 = vmatpush2.msra.mxu0 0.0
    %2571 = vmatprep.subr.mxu0 0.0
    %2572 = vmatpush2.msra.mxu0 0.0
    %2573 = vmatprep.subr.mxu0 0.0
    %2574 = vmatpush2.msra.mxu0 0.0
    %2575 = vmatprep.subr.mxu0 0.0
    %2576 = vmatpush2.msra.mxu0 0.0
    %2577 = vmatprep.subr.mxu0 0.0
    %2578 = vmatpush2.msra.mxu0 0.0
    %2579 = vmatprep.mubr.f32.mxu0 0.0
    %2580 = vmatmul.mubr.f32.gmra.mxu0 %v2513
    %v2581 = vpop.f32.mrf.mxu0
    %v2582 = vadd.f32 0.0, %v2581
    %v2583 = vpop.f32.mrf.mxu0
    %v2584 = vadd.f32 0.0, %v2583
    %2585 = vdwg.mxu0
    %2586 = vmatprep.subr.mxu0 0.0
    %2587 = vmatpush1.msra.mxu0 0.0
    %2588 = vmatprep.subr.mxu0 0.0
    %2589 = vmatpush1.msra.mxu0 0.0
    %2590 = vmatprep.subr.mxu0 0.0
    %2591 = vmatpush1.msra.mxu0 0.0
    %2592 = vmatprep.subr.mxu0 0.0
    %2593 = vmatpush1.msra.mxu0 0.0
    %2594 = vmatprep.subr.mxu0 0.0
    %2595 = vmatpush1.msra.mxu0 0.0
    %2596 = vmatprep.subr.mxu0 0.0
    %2597 = vmatpush1.msra.mxu0 0.0
    %2598 = vmatprep.subr.mxu0 0.0
    %2599 = vmatpush1.msra.mxu0 0.0
    %2600 = vmatprep.subr.mxu0 0.0
    %2601 = vmatpush1.msra.mxu0 0.0
    %2602 = vmatprep.subr.mxu0 0.0
    %2603 = vmatpush1.msra.mxu0 0.0
    %2604 = vmatprep.subr.mxu0 0.0
    %2605 = vmatpush1.msra.mxu0 0.0
    %2606 = vmatprep.subr.mxu0 0.0
    %2607 = vmatpush1.msra.mxu0 0.0
    %2608 = vmatprep.subr.mxu0 0.0
    %2609 = vmatpush1.msra.mxu0 0.0
    %2610 = vmatprep.subr.mxu0 0.0
    %2611 = vmatpush1.msra.mxu0 0.0
    %2612 = vmatprep.subr.mxu0 0.0
    %2613 = vmatpush1.msra.mxu0 0.0
    %2614 = vmatprep.subr.mxu0 0.0
    %2615 = vmatpush1.msra.mxu0 0.0
    %2616 = vmatprep.subr.mxu0 0.0
    %2617 = vmatpush1.msra.mxu0 %v2506
    %2618 = vmatprep.subr.mxu0 0.0
    %2619 = vmatpush2.msra.mxu0 0.0
    %2620 = vmatprep.subr.mxu0 0.0
    %2621 = vmatpush2.msra.mxu0 0.0
    %2622 = vmatprep.subr.mxu0 0.0
    %2623 = vmatpush2.msra.mxu0 0.0
    %2624 = vmatprep.subr.mxu0 0.0
    %2625 = vmatpush2.msra.mxu0 0.0
    %2626 = vmatprep.subr.mxu0 0.0
    %2627 = vmatpush2.msra.mxu0 0.0
    %2628 = vmatprep.subr.mxu0 0.0
    %2629 = vmatpush2.msra.mxu0 0.0
    %2630 = vmatprep.subr.mxu0 0.0
    %2631 = vmatpush2.msra.mxu0 0.0
    %2632 = vmatprep.subr.mxu0 0.0
    %2633 = vmatpush2.msra.mxu0 0.0
    %2634 = vmatprep.subr.mxu0 0.0
    %2635 = vmatpush2.msra.mxu0 0.0
    %2636 = vmatprep.subr.mxu0 0.0
    %2637 = vmatpush2.msra.mxu0 0.0
    %2638 = vmatprep.subr.mxu0 0.0
    %2639 = vmatpush2.msra.mxu0 0.0
    %2640 = vmatprep.subr.mxu0 0.0
    %2641 = vmatpush2.msra.mxu0 0.0
    %2642 = vmatprep.subr.mxu0 0.0
    %2643 = vmatpush2.msra.mxu0 0.0
    %2644 = vmatprep.subr.mxu0 0.0
    %2645 = vmatpush2.msra.mxu0 0.0
    %2646 = vmatprep.subr.mxu0 0.0
    %2647 = vmatpush2.msra.mxu0 0.0
    %2648 = vmatprep.subr.mxu0 0.0
    %2649 = vmatpush2.msra.mxu0 0.0
    %2650 = vmatprep.mubr.f32.mxu0 0.0
    %2651 = vmatmul.mubr.f32.gmra.mxu0 %v2513
    %v2652 = vpop.f32.mrf.mxu0
    %v2653 = vadd.f32 0.0, %v2652
    %v2654 = vpop.f32.mrf.mxu0
    %2655 = vdwg.mxu0
    %v2656 = vadd.f32 %v2496, %v2582
    %v2657 = vadd.f32 %v2497, %v2584
    %v2658 = vadd.f32 %v2498, %v2653
    %s2659 = scalar_lea.vmem %s2, 56
    %v2660 = vld [vmem:[%s2659] sm:$0xff]
    %2661 = vrot.lane.b32.xlu0 %v1552, 91
    %v2662 = vpop.permute.xlu0 %2661
    %2663 = vrot.lane.b32.xlu0 %v1553, 91
    %v2664 = vpop.permute.xlu0 %2663
    %2665 = vrot.lane.b32.xlu0 %v1554, 91
    %v2666 = vpop.permute.xlu0 %2665
    %v2667 = vsel %vm1168, %v2662, %v2664
    %v2668 = vsel %vm1168, %v2664, %v2666
    %v2673 = vsel %vm66, %v2660, 0
    %2675 = vmatprep.subr.mxu0 0.0
    %2676 = vmatpush1.msra.mxu0 0.0
    %2677 = vmatprep.subr.mxu0 0.0
    %2678 = vmatpush1.msra.mxu0 0.0
    %2679 = vmatprep.subr.mxu0 0.0
    %2680 = vmatpush1.msra.mxu0 0.0
    %2681 = vmatprep.subr.mxu0 0.0
    %2682 = vmatpush1.msra.mxu0 0.0
    %2683 = vmatprep.subr.mxu0 0.0
    %2684 = vmatpush1.msra.mxu0 0.0
    %2685 = vmatprep.subr.mxu0 0.0
    %2686 = vmatpush1.msra.mxu0 0.0
    %2687 = vmatprep.subr.mxu0 0.0
    %2688 = vmatpush1.msra.mxu0 0.0
    %2689 = vmatprep.subr.mxu0 0.0
    %2690 = vmatpush1.msra.mxu0 0.0
    %2691 = vmatprep.subr.mxu0 0.0
    %2692 = vmatpush1.msra.mxu0 0.0
    %2693 = vmatprep.subr.mxu0 0.0
    %2694 = vmatpush1.msra.mxu0 0.0
    %2695 = vmatprep.subr.mxu0 0.0
    %2696 = vmatpush1.msra.mxu0 0.0
    %2697 = vmatprep.subr.mxu0 0.0
    %2698 = vmatpush1.msra.mxu0 0.0
    %2699 = vmatprep.subr.mxu0 0.0
    %2700 = vmatpush1.msra.mxu0 0.0
    %2701 = vmatprep.subr.mxu0 0.0
    %2702 = vmatpush1.msra.mxu0 0.0
    %2703 = vmatprep.subr.mxu0 0.0
    %2704 = vmatpush1.msra.mxu0 0.0
    %2705 = vmatprep.subr.mxu0 %v2668
    %2706 = vmatpush1.msra.mxu0 %v2667
    %2707 = vmatprep.subr.mxu0 0.0
    %2708 = vmatpush2.msra.mxu0 0.0
    %2709 = vmatprep.subr.mxu0 0.0
    %2710 = vmatpush2.msra.mxu0 0.0
    %2711 = vmatprep.subr.mxu0 0.0
    %2712 = vmatpush2.msra.mxu0 0.0
    %2713 = vmatprep.subr.mxu0 0.0
    %2714 = vmatpush2.msra.mxu0 0.0
    %2715 = vmatprep.subr.mxu0 0.0
    %2716 = vmatpush2.msra.mxu0 0.0
    %2717 = vmatprep.subr.mxu0 0.0
    %2718 = vmatpush2.msra.mxu0 0.0
    %2719 = vmatprep.subr.mxu0 0.0
    %2720 = vmatpush2.msra.mxu0 0.0
    %2721 = vmatprep.subr.mxu0 0.0
    %2722 = vmatpush2.msra.mxu0 0.0
    %2723 = vmatprep.subr.mxu0 0.0
    %2724 = vmatpush2.msra.mxu0 0.0
    %2725 = vmatprep.subr.mxu0 0.0
    %2726 = vmatpush2.msra.mxu0 0.0
    %2727 = vmatprep.subr.mxu0 0.0
    %2728 = vmatpush2.msra.mxu0 0.0
    %2729 = vmatprep.subr.mxu0 0.0
    %2730 = vmatpush2.msra.mxu0 0.0
    %2731 = vmatprep.subr.mxu0 0.0
    %2732 = vmatpush2.msra.mxu0 0.0
    %2733 = vmatprep.subr.mxu0 0.0
    %2734 = vmatpush2.msra.mxu0 0.0
    %2735 = vmatprep.subr.mxu0 0.0
    %2736 = vmatpush2.msra.mxu0 0.0
    %2737 = vmatprep.subr.mxu0 0.0
    %2738 = vmatpush2.msra.mxu0 0.0
    %2739 = vmatprep.mubr.f32.mxu0 0.0
    %2740 = vmatmul.mubr.f32.gmra.mxu0 %v2673
    %v2741 = vpop.f32.mrf.mxu0
    %v2742 = vadd.f32 0.0, %v2741
    %v2743 = vpop.f32.mrf.mxu0
    %v2744 = vadd.f32 0.0, %v2743
    %2745 = vdwg.mxu0
    %2746 = vmatprep.subr.mxu0 0.0
    %2747 = vmatpush1.msra.mxu0 0.0
    %2748 = vmatprep.subr.mxu0 0.0
    %2749 = vmatpush1.msra.mxu0 0.0
    %2750 = vmatprep.subr.mxu0 0.0
    %2751 = vmatpush1.msra.mxu0 0.0
    %2752 = vmatprep.subr.mxu0 0.0
    %2753 = vmatpush1.msra.mxu0 0.0
    %2754 = vmatprep.subr.mxu0 0.0
    %2755 = vmatpush1.msra.mxu0 0.0
    %2756 = vmatprep.subr.mxu0 0.0
    %2757 = vmatpush1.msra.mxu0 0.0
    %2758 = vmatprep.subr.mxu0 0.0
    %2759 = vmatpush1.msra.mxu0 0.0
    %2760 = vmatprep.subr.mxu0 0.0
    %2761 = vmatpush1.msra.mxu0 0.0
    %2762 = vmatprep.subr.mxu0 0.0
    %2763 = vmatpush1.msra.mxu0 0.0
    %2764 = vmatprep.subr.mxu0 0.0
    %2765 = vmatpush1.msra.mxu0 0.0
    %2766 = vmatprep.subr.mxu0 0.0
    %2767 = vmatpush1.msra.mxu0 0.0
    %2768 = vmatprep.subr.mxu0 0.0
    %2769 = vmatpush1.msra.mxu0 0.0
    %2770 = vmatprep.subr.mxu0 0.0
    %2771 = vmatpush1.msra.mxu0 0.0
    %2772 = vmatprep.subr.mxu0 0.0
    %2773 = vmatpush1.msra.mxu0 0.0
    %2774 = vmatprep.subr.mxu0 0.0
    %2775 = vmatpush1.msra.mxu0 0.0
    %2776 = vmatprep.subr.mxu0 0.0
    %2777 = vmatpush1.msra.mxu0 %v2666
    %2778 = vmatprep.subr.mxu0 0.0
    %2779 = vmatpush2.msra.mxu0 0.0
    %2780 = vmatprep.subr.mxu0 0.0
    %2781 = vmatpush2.msra.mxu0 0.0
    %2782 = vmatprep.subr.mxu0 0.0
    %2783 = vmatpush2.msra.mxu0 0.0
    %2784 = vmatprep.subr.mxu0 0.0
    %2785 = vmatpush2.msra.mxu0 0.0
    %2786 = vmatprep.subr.mxu0 0.0
    %2787 = vmatpush2.msra.mxu0 0.0
    %2788 = vmatprep.subr.mxu0 0.0
    %2789 = vmatpush2.msra.mxu0 0.0
    %2790 = vmatprep.subr.mxu0 0.0
    %2791 = vmatpush2.msra.mxu0 0.0
    %2792 = vmatprep.subr.mxu0 0.0
    %2793 = vmatpush2.msra.mxu0 0.0
    %2794 = vmatprep.subr.mxu0 0.0
    %2795 = vmatpush2.msra.mxu0 0.0
    %2796 = vmatprep.subr.mxu0 0.0
    %2797 = vmatpush2.msra.mxu0 0.0
    %2798 = vmatprep.subr.mxu0 0.0
    %2799 = vmatpush2.msra.mxu0 0.0
    %2800 = vmatprep.subr.mxu0 0.0
    %2801 = vmatpush2.msra.mxu0 0.0
    %2802 = vmatprep.subr.mxu0 0.0
    %2803 = vmatpush2.msra.mxu0 0.0
    %2804 = vmatprep.subr.mxu0 0.0
    %2805 = vmatpush2.msra.mxu0 0.0
    %2806 = vmatprep.subr.mxu0 0.0
    %2807 = vmatpush2.msra.mxu0 0.0
    %2808 = vmatprep.subr.mxu0 0.0
    %2809 = vmatpush2.msra.mxu0 0.0
    %2810 = vmatprep.mubr.f32.mxu0 0.0
    %2811 = vmatmul.mubr.f32.gmra.mxu0 %v2673
    %v2812 = vpop.f32.mrf.mxu0
    %v2813 = vadd.f32 0.0, %v2812
    %v2814 = vpop.f32.mrf.mxu0
    %2815 = vdwg.mxu0
    %v2816 = vadd.f32 %v2656, %v2742
    %v2817 = vadd.f32 %v2657, %v2744
    %v2818 = vadd.f32 %v2658, %v2813
    %s2819 = scalar_lea.vmem %s2, 64
    %v2820 = vld [vmem:[%s2819] sm:$0xff]
    %2821 = vrot.lane.b32.xlu0 %v1552, 90
    %v2822 = vpop.permute.xlu0 %2821
    %2823 = vrot.lane.b32.xlu0 %v1553, 90
    %v2824 = vpop.permute.xlu0 %2823
    %2825 = vrot.lane.b32.xlu0 %v1554, 90
    %v2826 = vpop.permute.xlu0 %2825
    %v2827 = vsel %vm1329, %v2822, %v2824
    %v2828 = vsel %vm1329, %v2824, %v2826
    %v2833 = vsel %vm66, %v2820, 0
    %2835 = vmatprep.subr.mxu0 0.0
    %2836 = vmatpush1.msra.mxu0 0.0
    %2837 = vmatprep.subr.mxu0 0.0
    %2838 = vmatpush1.msra.mxu0 0.0
    %2839 = vmatprep.subr.mxu0 0.0
    %2840 = vmatpush1.msra.mxu0 0.0
    %2841 = vmatprep.subr.mxu0 0.0
    %2842 = vmatpush1.msra.mxu0 0.0
    %2843 = vmatprep.subr.mxu0 0.0
    %2844 = vmatpush1.msra.mxu0 0.0
    %2845 = vmatprep.subr.mxu0 0.0
    %2846 = vmatpush1.msra.mxu0 0.0
    %2847 = vmatprep.subr.mxu0 0.0
    %2848 = vmatpush1.msra.mxu0 0.0
    %2849 = vmatprep.subr.mxu0 0.0
    %2850 = vmatpush1.msra.mxu0 0.0
    %2851 = vmatprep.subr.mxu0 0.0
    %2852 = vmatpush1.msra.mxu0 0.0
    %2853 = vmatprep.subr.mxu0 0.0
    %2854 = vmatpush1.msra.mxu0 0.0
    %2855 = vmatprep.subr.mxu0 0.0
    %2856 = vmatpush1.msra.mxu0 0.0
    %2857 = vmatprep.subr.mxu0 0.0
    %2858 = vmatpush1.msra.mxu0 0.0
    %2859 = vmatprep.subr.mxu0 0.0
    %2860 = vmatpush1.msra.mxu0 0.0
    %2861 = vmatprep.subr.mxu0 0.0
    %2862 = vmatpush1.msra.mxu0 0.0
    %2863 = vmatprep.subr.mxu0 0.0
    %2864 = vmatpush1.msra.mxu0 0.0
    %2865 = vmatprep.subr.mxu0 %v2828
    %2866 = vmatpush1.msra.mxu0 %v2827
    %2867 = vmatprep.subr.mxu0 0.0
    %2868 = vmatpush2.msra.mxu0 0.0
    %2869 = vmatprep.subr.mxu0 0.0
    %2870 = vmatpush2.msra.mxu0 0.0
    %2871 = vmatprep.subr.mxu0 0.0
    %2872 = vmatpush2.msra.mxu0 0.0
    %2873 = vmatprep.subr.mxu0 0.0
    %2874 = vmatpush2.msra.mxu0 0.0
    %2875 = vmatprep.subr.mxu0 0.0
    %2876 = vmatpush2.msra.mxu0 0.0
    %2877 = vmatprep.subr.mxu0 0.0
    %2878 = vmatpush2.msra.mxu0 0.0
    %2879 = vmatprep.subr.mxu0 0.0
    %2880 = vmatpush2.msra.mxu0 0.0
    %2881 = vmatprep.subr.mxu0 0.0
    %2882 = vmatpush2.msra.mxu0 0.0
    %2883 = vmatprep.subr.mxu0 0.0
    %2884 = vmatpush2.msra.mxu0 0.0
    %2885 = vmatprep.subr.mxu0 0.0
    %2886 = vmatpush2.msra.mxu0 0.0
    %2887 = vmatprep.subr.mxu0 0.0
    %2888 = vmatpush2.msra.mxu0 0.0
    %2889 = vmatprep.subr.mxu0 0.0
    %2890 = vmatpush2.msra.mxu0 0.0
    %2891 = vmatprep.subr.mxu0 0.0
    %2892 = vmatpush2.msra.mxu0 0.0
    %2893 = vmatprep.subr.mxu0 0.0
    %2894 = vmatpush2.msra.mxu0 0.0
    %2895 = vmatprep.subr.mxu0 0.0
    %2896 = vmatpush2.msra.mxu0 0.0
    %2897 = vmatprep.subr.mxu0 0.0
    %2898 = vmatpush2.msra.mxu0 0.0
    %2899 = vmatprep.mubr.f32.mxu0 0.0
    %2900 = vmatmul.mubr.f32.gmra.mxu0 %v2833
    %v2901 = vpop.f32.mrf.mxu0
    %v2902 = vadd.f32 0.0, %v2901
    %v2903 = vpop.f32.mrf.mxu0
    %v2904 = vadd.f32 0.0, %v2903
    %2905 = vdwg.mxu0
    %2906 = vmatprep.subr.mxu0 0.0
    %2907 = vmatpush1.msra.mxu0 0.0
    %2908 = vmatprep.subr.mxu0 0.0
    %2909 = vmatpush1.msra.mxu0 0.0
    %2910 = vmatprep.subr.mxu0 0.0
    %2911 = vmatpush1.msra.mxu0 0.0
    %2912 = vmatprep.subr.mxu0 0.0
    %2913 = vmatpush1.msra.mxu0 0.0
    %2914 = vmatprep.subr.mxu0 0.0
    %2915 = vmatpush1.msra.mxu0 0.0
    %2916 = vmatprep.subr.mxu0 0.0
    %2917 = vmatpush1.msra.mxu0 0.0
    %2918 = vmatprep.subr.mxu0 0.0
    %2919 = vmatpush1.msra.mxu0 0.0
    %2920 = vmatprep.subr.mxu0 0.0
    %2921 = vmatpush1.msra.mxu0 0.0
    %2922 = vmatprep.subr.mxu0 0.0
    %2923 = vmatpush1.msra.mxu0 0.0
    %2924 = vmatprep.subr.mxu0 0.0
    %2925 = vmatpush1.msra.mxu0 0.0
    %2926 = vmatprep.subr.mxu0 0.0
    %2927 = vmatpush1.msra.mxu0 0.0
    %2928 = vmatprep.subr.mxu0 0.0
    %2929 = vmatpush1.msra.mxu0 0.0
    %2930 = vmatprep.subr.mxu0 0.0
    %2931 = vmatpush1.msra.mxu0 0.0
    %2932 = vmatprep.subr.mxu0 0.0
    %2933 = vmatpush1.msra.mxu0 0.0
    %2934 = vmatprep.subr.mxu0 0.0
    %2935 = vmatpush1.msra.mxu0 0.0
    %2936 = vmatprep.subr.mxu0 0.0
    %2937 = vmatpush1.msra.mxu0 %v2826
    %2938 = vmatprep.subr.mxu0 0.0
    %2939 = vmatpush2.msra.mxu0 0.0
    %2940 = vmatprep.subr.mxu0 0.0
    %2941 = vmatpush2.msra.mxu0 0.0
    %2942 = vmatprep.subr.mxu0 0.0
    %2943 = vmatpush2.msra.mxu0 0.0
    %2944 = vmatprep.subr.mxu0 0.0
    %2945 = vmatpush2.msra.mxu0 0.0
    %2946 = vmatprep.subr.mxu0 0.0
    %2947 = vmatpush2.msra.mxu0 0.0
    %2948 = vmatprep.subr.mxu0 0.0
    %2949 = vmatpush2.msra.mxu0 0.0
    %2950 = vmatprep.subr.mxu0 0.0
    %2951 = vmatpush2.msra.mxu0 0.0
    %2952 = vmatprep.subr.mxu0 0.0
    %2953 = vmatpush2.msra.mxu0 0.0
    %2954 = vmatprep.subr.mxu0 0.0
    %2955 = vmatpush2.msra.mxu0 0.0
    %2956 = vmatprep.subr.mxu0 0.0
    %2957 = vmatpush2.msra.mxu0 0.0
    %2958 = vmatprep.subr.mxu0 0.0
    %2959 = vmatpush2.msra.mxu0 0.0
    %2960 = vmatprep.subr.mxu0 0.0
    %2961 = vmatpush2.msra.mxu0 0.0
    %2962 = vmatprep.subr.mxu0 0.0
    %2963 = vmatpush2.msra.mxu0 0.0
    %2964 = vmatprep.subr.mxu0 0.0
    %2965 = vmatpush2.msra.mxu0 0.0
    %2966 = vmatprep.subr.mxu0 0.0
    %2967 = vmatpush2.msra.mxu0 0.0
    %2968 = vmatprep.subr.mxu0 0.0
    %2969 = vmatpush2.msra.mxu0 0.0
    %2970 = vmatprep.mubr.f32.mxu0 0.0
    %2971 = vmatmul.mubr.f32.gmra.mxu0 %v2833
    %v2972 = vpop.f32.mrf.mxu0
    %v2973 = vadd.f32 0.0, %v2972
    %v2974 = vpop.f32.mrf.mxu0
    %2975 = vdwg.mxu0
    %v2976 = vadd.f32 %v2816, %v2902
    %v2977 = vadd.f32 %v2817, %v2904
    %v2978 = vadd.f32 %v2818, %v2973
    %v2979 = vmul.f32 %v2976, %v1486
    %v2980 = vmul.f32 %v2977, %v1490
    %v2981 = vmul.f32 %v2978, %v1494
    %v2982 = vadd.f32 %v2979, %v2980
    %v2983 = vsel %vm1502, %v2981, 0.0
    %v2984 = vadd.f32 %v2982, %v2983
    %2985 = vadd.xlane.f32.xlu0 %v2984
    %v2986 = vpop.xlane.xlu0 %2985
    %v2987 = vmul.f32 %v2979, %v2976
    %v2988 = vmul.f32 %v2980, %v2977
    %v2989 = vmul.f32 %v2981, %v2978
    %v2990 = vadd.f32 %v2987, %v2988
    %v2991 = vsel %vm1502, %v2989, 0.0
    %v2992 = vadd.f32 %v2990, %v2991
    %2993 = vadd.xlane.f32.xlu0 %v2992
    %v2994 = vpop.xlane.xlu0 %2993
    %v2995 = vmul.f32 %v2986, 0.00390625
    %v2996 = vmul.f32 %v2994, 0.00390625
    %v2997 = vmul.f32 %v2995, %v2995
    %v2998 = vsub.f32 %v2996, %v2997
    %v2999 = vmax.f32 %v2998, 0.0
    %v3000 = vsub.f32 %v2976, %v2995
    %v3001 = vsub.f32 %v2977, %v2995
    %v3002 = vsub.f32 %v2978, %v2995
    %v3003 = vadd.f32 %v2999, 1e-05
    %v3004 = vrsqrt.pop %v3003
    %v3005 = vmul.f32 %v3000, %v3004
    %v3006 = vmul.f32 %v3001, %v3004
    %v3007 = vmul.f32 %v3002, %v3004
    %v3008 = vadd.f32 %v3005, %v23
    %v3009 = vadd.f32 %v3006, %v24
    %v3010 = vadd.f32 %v3007, %v25
    %v3011 = vmax.f32 %v3008, 0.0
    %v3012 = vmax.f32 %v3009, 0.0
    %v3013 = vmax.f32 %v3010, 0.0
    %3014 = vst [vmem:[#allocation3] sm:$0xff] %v3011
    %3015 = vst [vmem:[#allocation3 + $0x8] sm:$0xff] %v3012
    %3016 = vst.msk [vmem:[#allocation3 + $0x10] sm:$0xff] %vm1502, %v3013
    // Predicated region
    $region18: #{tpu_custom_call.1} parent=1 // pred_check
      _
    $region19: #{tpu_custom_call.1} parent=1 // pred_check_branch
      %3018 = sbr.rel (0) target = $region21
    $region20: #{tpu_custom_call.1} parent=1 // pred_region
      %s3020 = ssub.s32 384, 384
      %3021 = vsyncadd [#allocation4], %s3020
      %s3023 = sshll.u32 [#allocation3], 4
      %s3024 = int_to_ptr.vmem [resolvable:$true] %s3023
      %3026 = dma.vmem_to_hbm [thread:$0]  %s3024, 384, %s4, [#allocation4]
    $region21: #{tpu_custom_call.1} parent=1 // pred_fallthru
      _
    // Predicated region
    $region22: #{tpu_custom_call.1} parent=1 // pred_check
      _
    $region23: #{tpu_custom_call.1} parent=1 // pred_check_branch
      %3028 = sbr.rel (0) target = $region25
    $region24: #{tpu_custom_call.1} parent=1 // pred_region
      %3029 = dma.done [#allocation4], 384
    $region25: #{tpu_custom_call.1} parent=1 // pred_fallthru
      _
    %3030 = vsyncpa [#allocation4], 1

</llo_original>
